<compile_context>
chip_gen: v6e
topology: v6e:2x2x1
jax: 0.10.0
libtpu: 0.0.40
codegen_flags: <defaults>
</compile_context>

<pallas_src>
import math

import numpy as np

import jax
import jax.numpy as jnp
from jax.experimental import pallas as pl
from jax.experimental.pallas import tpu as pltpu

LANE = 128


def _round_up(x, m):
    return (x + m - 1) // m * m


def _erf(x):
    # Abramowitz & Stegun 7.1.26 rational approximation of erf.
    # exp and the reciprocal go to the EUP slot; polynomial stays on the VPU.
    a1, a2, a3, a4, a5 = (0.254829592, -0.284496736, 1.421413741,
                          -1.453152027, 1.061405429)
    p = 0.3275911
    sgn = jnp.where(x >= 0, 1.0, -1.0)
    ax = jnp.abs(x)
    t = pl.reciprocal(1.0 + p * ax, approx=True)
    poly = ((((a5 * t + a4) * t + a3) * t + a2) * t + a1) * t
    return sgn * (1.0 - poly * jnp.exp(-ax * ax))


def _gelu_exact(x):
    # matches nn.GELU(approximate='none'): 0.5 * x * (1 + erf(x / sqrt(2)))
    return 0.5 * x * (1.0 + _erf(x * (1.0 / math.sqrt(2.0))))


def conv_glu_kernel(x_ref, xt_ref, xb_ref, mwm_ref, mwp_ref,
                    w1_ref, b1_ref, wdw_ref, bdw_ref, w2_ref, b2_ref, o_ref):
    # x_ref  : (1, TH, Ws, Cp) bf16  current row tile (NHWC, channels on lanes)
    # xt_ref : (1, 1,  Ws, Cp) bf16  image row just above the tile (clamped)
    # xb_ref : (1, 1,  Ws, Cp) bf16  image row just below the tile (clamped)
    # mwm/mwp: (E, 1)  f32   zero the wrapped W column after the +/-1 rolls
    # w1_ref : (Cp, 2*Hp) bf16 [gate|value]      b1_ref : (1, 2*Hp) f32
    # wdw_ref: (9, Hp)    f32  (row = kh*3+kw)   bdw_ref: (1, Hp)   f32
    # w2_ref : (Hp, Op)   bf16                   b2_ref : (1, Op)   f32
    # o_ref  : (1, TH, Ws, Op) bf16
    _, TH, Ws, Cin = x_ref.shape
    Hh = wdw_ref.shape[1]
    Op = w2_ref.shape[1]
    M = TH * Ws
    E = (TH + 2) * Ws

    t = pl.program_id(1)
    nt = pl.num_programs(1)

    # ---- fc1 on the main tile (bf16 MXU, f32 accumulation) --------------------
    w1 = w1_ref[...]
    h = jnp.dot(x_ref[...].reshape(M, Cin), w1,
                preferred_element_type=jnp.float32) + b1_ref[...]
    xg_main = h[:, :Hh]                       # gate half   (lane-aligned slice)
    v = h[:, Hh:]                             # value half

    # ---- fc1 (gate half only) on the two 1-row halos; scalar multiply zeroes
    #      the halo row when it falls outside the image (dwconv zero-pad in H).
    w1g = w1[:, :Hh]
    b1g = b1_ref[:, :Hh]
    m_top = jnp.where(t == 0, 0.0, 1.0)
    m_bot = jnp.where(t == nt - 1, 0.0, 1.0)
    xg_top = (jnp.dot(xt_ref[...].reshape(Ws, Cin), w1g,
                      preferred_element_type=jnp.float32) + b1g) * m_top
    xg_bot = (jnp.dot(xb_ref[...].reshape(Ws, Cin), w1g,
                      preferred_element_type=jnp.float32) + b1g) * m_bot

    # Extended gate map, flattened: (E, Hh) = (TH+2) image rows * Ws columns.
    xg = jnp.concatenate([xg_top, xg_main, xg_bot], axis=0)

    # ---- depthwise 3x3, stride 1, pad 1 ---------------------------------------
    # W-shifts via XLU rolls on the flattened layout; the roll wraps across row
    # boundaries exactly at the W positions the zero padding masks anyway.
    xg_wm = pltpu.roll(xg, 1, axis=0) * mwm_ref[...]        # out[., w] = xg[., w-1]
    xg_wp = pltpu.roll(xg, E - 1, axis=0) * mwp_ref[...]    # out[., w] = xg[., w+1]
    shifted = (xg_wm, xg, xg_wp)

    wdw = wdw_ref[...]                                      # (9, Hh) f32
    acc = jnp.zeros((M, Hh), jnp.float32)
    for kh in range(3):                                     # static, fully unrolled
        base = kh * Ws                                      # sublane-aligned offset
        for kw in range(3):
            tap = wdw[kh * 3 + kw:kh * 3 + kw + 1, :]       # (1, Hh)
            acc = acc + shifted[kw][base:base + M, :] * tap
    acc = acc + bdw_ref[...]

    # ---- GELU(dwconv(xg)) * v, then fc2 (bf16 MXU, f32 accumulate) ------------
    gated = _gelu_exact(acc) * v                            # (M, Hh) f32
    out = jnp.dot(gated.astype(jnp.bfloat16), w2_ref[...],
                  preferred_element_type=jnp.float32) + b2_ref[...]
    o_ref[...] = out.reshape(1, TH, Ws, Op).astype(o_ref.dtype)


def _vmem_capacity_bytes():
    """Physical per-core VMEM, generation-aware (v5e/v6e 128 MiB, v7x 64 MiB)."""
    cap = None
    try:
        info = pltpu.get_tpu_info()
        cap = getattr(info, "vmem_capacity_bytes", None)
    except Exception:
        cap = None
    if not cap:
        cap = 64 * 1024 * 1024          # conservative default (v7x per-core)
    return max(32 << 20, min(int(cap), 128 << 20))


def _tile_vmem_bytes(TH, Ws, Cp, Hp, Op):
    """Rough per-grid-step VMEM footprint: double-buffered blocks + live values."""
    E = (TH + 2) * Ws
    M = TH * Ws
    blocks = 2 * (M * Cp * 2 + 2 * Ws * Cp * 2 + M * Op * 2       # x, halos, out (bf16)
                  + Cp * 2 * Hp * 2 + Hp * Op * 2                 # w1, w2 (bf16)
                  + (2 * Hp + 9 * Hp + Hp + Op) * 4 + 2 * E * 4)  # biases, dw, masks
    live = (M * 2 * Hp * 4        # fc1 output (gate + value)
            + 3 * E * Hp * 4      # extended gate + two W-shifted copies
            + 2 * M * Hp * 4      # dwconv accumulator + gated product
            + M * Hp * 2          # bf16 fc2 lhs
            + M * Op * 4)         # fc2 f32 result before bf16 store
    return blocks + live


def _pick_row_tile(N, Hs, Ws, Cp, Hp, Op, budget_bytes, min_steps=4):
    """Largest divisor of Hs (preferring multiples of 8) whose footprint fits the
    VMEM budget while still leaving >= min_steps grid steps for pipelining /
    megacore balance."""
    divs = [d for d in range(1, Hs + 1) if Hs % d == 0]
    cands = sorted([d for d in divs if d % 8 == 0] or divs, reverse=True)
    fitting = [d for d in cands
               if _tile_vmem_bytes(d, Ws, Cp, Hp, Op) <= budget_bytes]
    if not fitting:
        # TODO(synk): handle remainder tiles (cdiv grid + masking) instead of
        # falling back to the smallest divisor when nothing fits the budget.
        return cands[-1]
    for d in fitting:                       # largest first
        if N * (Hs // d) >= min_steps:
            return d
    return fitting[-1]                      # tiny image: maximize step count


def convolutional_glu(x_nchw, params, *, row_tile=None):
    """x_nchw: (N, C, H, W) float32, PyTorch layout. Returns (N, Cout, H, W) f32."""
    w1, b1, wdw, bdw, w2, b2 = params
    N, C, Hs, Ws = x_nchw.shape
    Hh = wdw.shape[1]
    Cout = w2.shape[1]

    # ---- lane-dense channel padding (zero-pad => exact) ------------------------
    Cp, Hp, Op = _round_up(C, LANE), _round_up(Hh, LANE), _round_up(Cout, LANE)

    w1p = jnp.zeros((Cp, 2 * Hp), jnp.float32)
    w1p = w1p.at[:C, :Hh].set(w1[:, :Hh])                  # gate half
    w1p = w1p.at[:C, Hp:Hp + Hh].set(w1[:, Hh:])           # value half
    b1p = jnp.zeros((1, 2 * Hp), jnp.float32)
    b1p = b1p.at[:, :Hh].set(b1[:, :Hh]).at[:, Hp:Hp + Hh].set(b1[:, Hh:])
    wdwp = jnp.zeros((9, Hp), jnp.float32).at[:, :Hh].set(wdw)
    bdwp = jnp.zeros((1, Hp), jnp.float32).at[:, :Hh].set(bdw)
    w2p = jnp.zeros((Hp, Op), jnp.float32).at[:Hh, :Cout].set(w2)
    b2p = jnp.zeros((1, Op), jnp.float32).at[:, :Cout].set(b2)

    # bf16 matmul operands (f32 accumulation in-kernel); biases stay f32.
    w1p = w1p.astype(jnp.bfloat16)
    w2p = w2p.astype(jnp.bfloat16)

    x = jnp.transpose(x_nchw, (0, 2, 3, 1))                # NCHW -> NHWC
    x = jnp.pad(x, ((0, 0), (0, 0), (0, 0), (0, Cp - C))).astype(jnp.bfloat16)

    # ---- generation-aware row tiling & VMEM budget ------------------------------
    cap = _vmem_capacity_bytes()
    TH = row_tile or _pick_row_tile(N, Hs, Ws, Cp, Hp, Op,
                                    budget_bytes=int(cap * 0.45))
    assert Hs % TH == 0, (Hs, TH)
    nt = Hs // TH
    E = (TH + 2) * Ws
    vmem_limit = min(int(cap * 0.85), 112 * 1024 * 1024)

    # W-wrap masks for the +/-1 rolls (period Ws over the flattened row axis).
    w_idx = np.arange(E, dtype=np.int32) % Ws
    mask_wm = jnp.asarray((w_idx != 0).astype(np.float32).reshape(E, 1))
    mask_wp = jnp.asarray((w_idx != Ws - 1).astype(np.float32).reshape(E, 1))

    x_map = lambda n, t: (n, t, 0, 0)
    top_map = lambda n, t: (n, jnp.maximum(t * TH - 1, 0), 0, 0)        # row above
    bot_map = lambda n, t: (n, jnp.minimum(t * TH + TH, Hs - 1), 0, 0)  # row below
    const = lambda n, t: (0, 0)

    out_nhwc = pl.pallas_call(
        conv_glu_kernel,
        out_shape=jax.ShapeDtypeStruct((N, Hs, Ws, Op), jnp.bfloat16),
        grid=(N, nt),
        in_specs=[
            pl.BlockSpec((1, TH, Ws, Cp), x_map),
            pl.BlockSpec((1, 1, Ws, Cp), top_map),
            pl.BlockSpec((1, 1, Ws, Cp), bot_map),
            pl.BlockSpec((E, 1), const),
            pl.BlockSpec((E, 1), const),
            pl.BlockSpec((Cp, 2 * Hp), const),
            pl.BlockSpec((1, 2 * Hp), const),
            pl.BlockSpec((9, Hp), const),
            pl.BlockSpec((1, Hp), const),
            pl.BlockSpec((Hp, Op), const),
            pl.BlockSpec((1, Op), const),
        ],
        out_specs=pl.BlockSpec((1, TH, Ws, Op), x_map),
        compiler_params=pltpu.CompilerParams(
            dimension_semantics=("parallel", "parallel"),
            vmem_limit_bytes=vmem_limit),
    )(x, x, x, mask_wm, mask_wp, w1p, b1p, wdwp, bdwp, w2p, b2p)

    out_nhwc = out_nhwc[..., :Cout]                        # drop lane padding
    # NHWC bf16 -> NCHW f32 (module interface); a bf16/NHWC consumer could skip this.
    return jnp.transpose(out_nhwc, (0, 3, 1, 2)).astype(jnp.float32)


def init_params(key, in_features, hidden_features=None, out_features=None):
    """Synthetic parameters matching the PyTorch module's logical shapes.

    fc1.weight (2*Hh, C, 1, 1) -> (C, 2*Hh); fc1.bias -> (1, 2*Hh)
    dwconv.weight (Hh, 1, 3, 3) -> (9, Hh) (row = kh*3+kw); dwconv.bias -> (1, Hh)
    fc2.weight (Cout, Hh, 1, 1) -> (Hh, Cout); fc2.bias -> (1, Cout)
    """
    out_features = out_features or in_features
    hidden_features = hidden_features or in_features
    hh = int(2 * hidden_features / 3)
    k1, k2, k3, k4, k5, k6 = jax.random.split(key, 6)
    s = 0.1
    w1 = jax.random.normal(k1, (in_features, 2 * hh), jnp.float32) * s
    b1 = jax.random.normal(k2, (1, 2 * hh), jnp.float32) * s
    wdw = jax.random.normal(k3, (9, hh), jnp.float32) * s
    bdw = jax.random.normal(k4, (1, hh), jnp.float32) * s
    w2 = jax.random.normal(k5, (hh, out_features), jnp.float32) * s
    b2 = jax.random.normal(k6, (1, out_features), jnp.float32) * s
    return (w1, b1, wdw, bdw, w2, b2)


def reference_conv_glu(x_nchw, params):
    """Pure-JAX f32 reference of the module's forward pass (for a loose check)."""
    w1, b1, wdw, bdw, w2, b2 = params
    N, C, H, W = x_nchw.shape
    Hh = wdw.shape[1]
    x = jnp.transpose(x_nchw, (0, 2, 3, 1))
    h = jnp.einsum('nhwc,cd->nhwd', x, w1) + b1[0]
    xg, v = h[..., :Hh], h[..., Hh:]
    xp = jnp.pad(xg, ((0, 0), (1, 1), (1, 1), (0, 0)))
    acc = jnp.zeros_like(xg)
    for kh in range(3):
        for kw in range(3):
            acc = acc + xp[:, kh:kh + H, kw:kw + W, :] * wdw[kh * 3 + kw]
    acc = acc + bdw[0]
    g = 0.5 * acc * (1.0 + jax.lax.erf(acc / jnp.sqrt(2.0)))
    y = jnp.einsum('nhwc,cd->nhwd', g * v, w2) + b2[0]
    return jnp.transpose(y, (0, 3, 1, 2))


if __name__ == "__main__":
    key = jax.random.PRNGKey(0)
    kx, kp = jax.random.split(key)

    # small shapes consistent with the module: N=2, C=16, 32x32 spatial,
    # hidden_features=24 -> Hh = int(2*24/3) = 16, out_features = C = 16.
    N, C, H, W = 2, 16, 32, 32
    x = jax.random.normal(kx, (N, C, H, W), jnp.float32)     # NCHW (PyTorch layout)
    params = init_params(kp, in_features=C, hidden_features=24)

    # jit the wrapper so the NCHW<->NHWC layout / pad / cast ops fuse around the
    # pallas_call instead of running as separate HBM passes.
    fwd = jax.jit(convolutional_glu)
    out = jax.block_until_ready(fwd(x, params))
    assert out.shape == (N, C, H, W), out.shape
    assert bool(jnp.all(jnp.isfinite(out)))

    # loose correctness check vs. f32 reference (kernel uses bf16 MXU operands,
    # bf16 output and an approx-reciprocal erf, so tolerance is generous).
    ref = reference_conv_glu(x, params)
    err = float(jnp.max(jnp.abs(out - ref)))
    assert err < 5e-2, f"max abs err {err}"
    print("KERNEL_OK")
</pallas_src>

<mosaic_0001>
module attributes {stable_mosaic.version = 11 : i64} {
  func.func @conv_glu_kernel(%arg0: i32, %arg1: i32, %arg2: memref<1x16x32x128xbf16, #tpu.memory_space<vmem>>, %arg3: memref<1x1x32x128xbf16, #tpu.memory_space<vmem>>, %arg4: memref<1x1x32x128xbf16, #tpu.memory_space<vmem>>, %arg5: memref<576x1xf32, #tpu.memory_space<vmem>>, %arg6: memref<576x1xf32, #tpu.memory_space<vmem>>, %arg7: memref<128x256xbf16, #tpu.memory_space<vmem>>, %arg8: memref<1x256xf32, #tpu.memory_space<vmem>>, %arg9: memref<9x128xf32, #tpu.memory_space<vmem>>, %arg10: memref<1x128xf32, #tpu.memory_space<vmem>>, %arg11: memref<128x128xbf16, #tpu.memory_space<vmem>>, %arg12: memref<1x128xf32, #tpu.memory_space<vmem>>, %arg13: memref<1x16x32x128xbf16, #tpu.memory_space<vmem>>) attributes {dimension_semantics = [#tpu.dimension_semantics<parallel>, #tpu.dimension_semantics<parallel>], iteration_bounds = array<i64: 2, 2>, scalar_prefetch = 0 : i64, scratch_operands = 0 : i64, tpu.core_type = #tpu.core_type<tc>, window_params = [{transform_indices = @transform_0, window_bounds = array<i64: 1, 16, 32, 128>}, {transform_indices = @transform_1, window_bounds = array<i64: 1, 1, 32, 128>}, {transform_indices = @transform_2, window_bounds = array<i64: 1, 1, 32, 128>}, {pipeline_mode = #tpu.pipeline_mode<synchronous>, transform_indices = @transform_3, window_bounds = array<i64: 576, 1>}, {pipeline_mode = #tpu.pipeline_mode<synchronous>, transform_indices = @transform_4, window_bounds = array<i64: 576, 1>}, {pipeline_mode = #tpu.pipeline_mode<synchronous>, transform_indices = @transform_5, window_bounds = array<i64: 128, 256>}, {pipeline_mode = #tpu.pipeline_mode<synchronous>, transform_indices = @transform_6, window_bounds = array<i64: 1, 256>}, {pipeline_mode = #tpu.pipeline_mode<synchronous>, transform_indices = @transform_7, window_bounds = array<i64: 9, 128>}, {pipeline_mode = #tpu.pipeline_mode<synchronous>, transform_indices = @transform_8, window_bounds = array<i64: 1, 128>}, {pipeline_mode = #tpu.pipeline_mode<synchronous>, transform_indices = @transform_9, window_bounds = array<i64: 128, 128>}, {pipeline_mode = #tpu.pipeline_mode<synchronous>, transform_indices = @transform_10, window_bounds = array<i64: 1, 128>}, {transform_indices = @transform_11, window_bounds = array<i64: 1, 16, 32, 128>}]} {
    %c0 = arith.constant 0 : index
    %c0_0 = arith.constant 0 : index
    %0 = vector.load %arg7[%c0, %c0_0] : memref<128x256xbf16, #tpu.memory_space<vmem>>, vector<128x256xbf16>
    %c0_1 = arith.constant 0 : index
    %c0_2 = arith.constant 0 : index
    %c0_3 = arith.constant 0 : index
    %c0_4 = arith.constant 0 : index
    %1 = vector.load %arg2[%c0_1, %c0_2, %c0_3, %c0_4] : memref<1x16x32x128xbf16, #tpu.memory_space<vmem>>, vector<1x16x32x128xbf16>
    %2 = vector.shape_cast %1 : vector<1x16x32x128xbf16> to vector<512x128xbf16>
    %cst = arith.constant dense<0.000000e+00> : vector<512x256xf32>
    %3 = tpu.matmul %2, %0, %cst {dimension_numbers = #tpu.dot_dimension_numbers<[1], [0], [0], [1], [0, 0, 1, 1], [], []>} : vector<512x128xbf16>, vector<128x256xbf16>, vector<512x256xf32> -> vector<512x256xf32>
    %c0_5 = arith.constant 0 : index
    %c0_6 = arith.constant 0 : index
    %4 = vector.load %arg8[%c0_5, %c0_6] : memref<1x256xf32, #tpu.memory_space<vmem>>, vector<1x256xf32>
    %5 = vector.broadcast %4 : vector<1x256xf32> to vector<512x256xf32>
    %6 = arith.addf %3, %5 : vector<512x256xf32>
    %7 = vector.extract_strided_slice %6 {offsets = [0, 0], sizes = [512, 128], strides = [1, 1]} : vector<512x256xf32> to vector<512x128xf32>
    %8 = vector.extract_strided_slice %6 {offsets = [0, 128], sizes = [512, 128], strides = [1, 1]} : vector<512x256xf32> to vector<512x128xf32>
    %9 = vector.extract_strided_slice %0 {offsets = [0, 0], sizes = [128, 128], strides = [1, 1]} : vector<128x256xbf16> to vector<128x128xbf16>
    %c0_7 = arith.constant 0 : index
    %c0_8 = arith.constant 0 : index
    %10 = vector.load %arg8[%c0_7, %c0_8] : memref<1x256xf32, #tpu.memory_space<vmem>>, vector<1x128xf32>
    %c0_i32 = arith.constant 0 : i32
    %11 = arith.cmpi eq, %arg1, %c0_i32 : i32
    %cst_9 = arith.constant 0.000000e+00 : f32
    %cst_10 = arith.constant 1.000000e+00 : f32
    %12 = arith.select %11, %cst_9, %cst_10 : f32
    %c1_i32 = arith.constant 1 : i32
    %13 = arith.cmpi eq, %arg1, %c1_i32 : i32
    %cst_11 = arith.constant 0.000000e+00 : f32
    %cst_12 = arith.constant 1.000000e+00 : f32
    %14 = arith.select %13, %cst_11, %cst_12 : f32
    %c0_13 = arith.constant 0 : index
    %c0_14 = arith.constant 0 : index
    %c0_15 = arith.constant 0 : index
    %c0_16 = arith.constant 0 : index
    %15 = vector.load %arg3[%c0_13, %c0_14, %c0_15, %c0_16] : memref<1x1x32x128xbf16, #tpu.memory_space<vmem>>, vector<1x1x32x128xbf16>
    %16 = vector.shape_cast %15 : vector<1x1x32x128xbf16> to vector<32x128xbf16>
    %cst_17 = arith.constant dense<0.000000e+00> : vector<32x128xf32>
    %17 = tpu.matmul %16, %9, %cst_17 {dimension_numbers = #tpu.dot_dimension_numbers<[1], [0], [0], [1], [0, 0, 1, 1], [], []>} : vector<32x128xbf16>, vector<128x128xbf16>, vector<32x128xf32> -> vector<32x128xf32>
    %18 = vector.broadcast %10 : vector<1x128xf32> to vector<32x128xf32>
    %19 = arith.addf %17, %18 : vector<32x128xf32>
    %20 = vector.broadcast %12 : f32 to vector<32x128xf32>
    %21 = arith.mulf %19, %20 : vector<32x128xf32>
    %c0_18 = arith.constant 0 : index
    %c0_19 = arith.constant 0 : index
    %c0_20 = arith.constant 0 : index
    %c0_21 = arith.constant 0 : index
    %22 = vector.load %arg4[%c0_18, %c0_19, %c0_20, %c0_21] : memref<1x1x32x128xbf16, #tpu.memory_space<vmem>>, vector<1x1x32x128xbf16>
    %23 = vector.shape_cast %22 : vector<1x1x32x128xbf16> to vector<32x128xbf16>
    %cst_22 = arith.constant dense<0.000000e+00> : vector<32x128xf32>
    %24 = tpu.matmul %23, %9, %cst_22 {dimension_numbers = #tpu.dot_dimension_numbers<[1], [0], [0], [1], [0, 0, 1, 1], [], []>} : vector<32x128xbf16>, vector<128x128xbf16>, vector<32x128xf32> -> vector<32x128xf32>
    %25 = vector.broadcast %10 : vector<1x128xf32> to vector<32x128xf32>
    %26 = arith.addf %24, %25 : vector<32x128xf32>
    %27 = vector.broadcast %14 : f32 to vector<32x128xf32>
    %28 = arith.mulf %26, %27 : vector<32x128xf32>
    %29 = tpu.concatenate %21, %7, %28 in 0 : vector<32x128xf32>, vector<512x128xf32>, vector<32x128xf32> -> vector<576x128xf32>
    %c1_i32_23 = arith.constant 1 : i32
    %30 = tpu.dynamic_rotate %29 by %c1_i32_23 dim 0 : vector<576x128xf32>, i32 -> vector<576x128xf32>
    %c0_24 = arith.constant 0 : index
    %c0_25 = arith.constant 0 : index
    %31 = vector.load %arg5[%c0_24, %c0_25] : memref<576x1xf32, #tpu.memory_space<vmem>>, vector<576x1xf32>
    %32 = vector.broadcast %31 : vector<576x1xf32> to vector<576x128xf32>
    %33 = arith.mulf %30, %32 : vector<576x128xf32>
    %c575_i32 = arith.constant 575 : i32
    %34 = tpu.dynamic_rotate %29 by %c575_i32 dim 0 : vector<576x128xf32>, i32 -> vector<576x128xf32>
    %c0_26 = arith.constant 0 : index
    %c0_27 = arith.constant 0 : index
    %35 = vector.load %arg6[%c0_26, %c0_27] : memref<576x1xf32, #tpu.memory_space<vmem>>, vector<576x1xf32>
    %36 = vector.broadcast %35 : vector<576x1xf32> to vector<576x128xf32>
    %37 = arith.mulf %34, %36 : vector<576x128xf32>
    %c0_28 = arith.constant 0 : index
    %c0_29 = arith.constant 0 : index
    %38 = vector.load %arg9[%c0_28, %c0_29] : memref<9x128xf32, #tpu.memory_space<vmem>>, vector<9x128xf32>
    %cst_30 = arith.constant 0.000000e+00 : f32
    %39 = vector.broadcast %cst_30 : f32 to vector<512x128xf32>
    %40 = vector.extract_strided_slice %38 {offsets = [0, 0], sizes = [1, 128], strides = [1, 1]} : vector<9x128xf32> to vector<1x128xf32>
    %41 = vector.extract_strided_slice %33 {offsets = [0, 0], sizes = [512, 128], strides = [1, 1]} : vector<576x128xf32> to vector<512x128xf32>
    %42 = vector.broadcast %40 : vector<1x128xf32> to vector<512x128xf32>
    %43 = arith.mulf %41, %42 : vector<512x128xf32>
    %44 = arith.addf %39, %43 : vector<512x128xf32>
    %45 = vector.extract_strided_slice %38 {offsets = [1, 0], sizes = [1, 128], strides = [1, 1]} : vector<9x128xf32> to vector<1x128xf32>
    %46 = vector.extract_strided_slice %29 {offsets = [0, 0], sizes = [512, 128], strides = [1, 1]} : vector<576x128xf32> to vector<512x128xf32>
    %47 = vector.broadcast %45 : vector<1x128xf32> to vector<512x128xf32>
    %48 = arith.mulf %46, %47 : vector<512x128xf32>
    %49 = arith.addf %44, %48 : vector<512x128xf32>
    %50 = vector.extract_strided_slice %38 {offsets = [2, 0], sizes = [1, 128], strides = [1, 1]} : vector<9x128xf32> to vector<1x128xf32>
    %51 = vector.extract_strided_slice %37 {offsets = [0, 0], sizes = [512, 128], strides = [1, 1]} : vector<576x128xf32> to vector<512x128xf32>
    %52 = vector.broadcast %50 : vector<1x128xf32> to vector<512x128xf32>
    %53 = arith.mulf %51, %52 : vector<512x128xf32>
    %54 = arith.addf %49, %53 : vector<512x128xf32>
    %55 = vector.extract_strided_slice %38 {offsets = [3, 0], sizes = [1, 128], strides = [1, 1]} : vector<9x128xf32> to vector<1x128xf32>
    %56 = vector.extract_strided_slice %33 {offsets = [32, 0], sizes = [512, 128], strides = [1, 1]} : vector<576x128xf32> to vector<512x128xf32>
    %57 = vector.broadcast %55 : vector<1x128xf32> to vector<512x128xf32>
    %58 = arith.mulf %56, %57 : vector<512x128xf32>
    %59 = arith.addf %54, %58 : vector<512x128xf32>
    %60 = vector.extract_strided_slice %38 {offsets = [4, 0], sizes = [1, 128], strides = [1, 1]} : vector<9x128xf32> to vector<1x128xf32>
    %61 = vector.extract_strided_slice %29 {offsets = [32, 0], sizes = [512, 128], strides = [1, 1]} : vector<576x128xf32> to vector<512x128xf32>
    %62 = vector.broadcast %60 : vector<1x128xf32> to vector<512x128xf32>
    %63 = arith.mulf %61, %62 : vector<512x128xf32>
    %64 = arith.addf %59, %63 : vector<512x128xf32>
    %65 = vector.extract_strided_slice %38 {offsets = [5, 0], sizes = [1, 128], strides = [1, 1]} : vector<9x128xf32> to vector<1x128xf32>
    %66 = vector.extract_strided_slice %37 {offsets = [32, 0], sizes = [512, 128], strides = [1, 1]} : vector<576x128xf32> to vector<512x128xf32>
    %67 = vector.broadcast %65 : vector<1x128xf32> to vector<512x128xf32>
    %68 = arith.mulf %66, %67 : vector<512x128xf32>
    %69 = arith.addf %64, %68 : vector<512x128xf32>
    %70 = vector.extract_strided_slice %38 {offsets = [6, 0], sizes = [1, 128], strides = [1, 1]} : vector<9x128xf32> to vector<1x128xf32>
    %71 = vector.extract_strided_slice %33 {offsets = [64, 0], sizes = [512, 128], strides = [1, 1]} : vector<576x128xf32> to vector<512x128xf32>
    %72 = vector.broadcast %70 : vector<1x128xf32> to vector<512x128xf32>
    %73 = arith.mulf %71, %72 : vector<512x128xf32>
    %74 = arith.addf %69, %73 : vector<512x128xf32>
    %75 = vector.extract_strided_slice %38 {offsets = [7, 0], sizes = [1, 128], strides = [1, 1]} : vector<9x128xf32> to vector<1x128xf32>
    %76 = vector.extract_strided_slice %29 {offsets = [64, 0], sizes = [512, 128], strides = [1, 1]} : vector<576x128xf32> to vector<512x128xf32>
    %77 = vector.broadcast %75 : vector<1x128xf32> to vector<512x128xf32>
    %78 = arith.mulf %76, %77 : vector<512x128xf32>
    %79 = arith.addf %74, %78 : vector<512x128xf32>
    %80 = vector.extract_strided_slice %38 {offsets = [8, 0], sizes = [1, 128], strides = [1, 1]} : vector<9x128xf32> to vector<1x128xf32>
    %81 = vector.extract_strided_slice %37 {offsets = [64, 0], sizes = [512, 128], strides = [1, 1]} : vector<576x128xf32> to vector<512x128xf32>
    %82 = vector.broadcast %80 : vector<1x128xf32> to vector<512x128xf32>
    %83 = arith.mulf %81, %82 : vector<512x128xf32>
    %84 = arith.addf %79, %83 : vector<512x128xf32>
    %c0_31 = arith.constant 0 : index
    %c0_32 = arith.constant 0 : index
    %85 = vector.load %arg10[%c0_31, %c0_32] : memref<1x128xf32, #tpu.memory_space<vmem>>, vector<1x128xf32>
    %86 = vector.broadcast %85 : vector<1x128xf32> to vector<512x128xf32>
    %87 = arith.addf %84, %86 : vector<512x128xf32>
    %cst_33 = arith.constant 5.000000e-01 : f32
    %88 = vector.broadcast %cst_33 : f32 to vector<512x128xf32>
    %89 = arith.mulf %88, %87 : vector<512x128xf32>
    %cst_34 = arith.constant 0.707106769 : f32
    %90 = vector.broadcast %cst_34 : f32 to vector<512x128xf32>
    %91 = arith.mulf %87, %90 : vector<512x128xf32>
    %cst_35 = arith.constant 0.000000e+00 : f32
    %92 = vector.broadcast %cst_35 : f32 to vector<512x128xf32>
    %93 = arith.cmpf oge, %91, %92 : vector<512x128xf32>
    %cst_36 = arith.constant 1.000000e+00 : f32
    %cst_37 = arith.constant -1.000000e+00 : f32
    %94 = vector.broadcast %cst_36 : f32 to vector<512x128xf32>
    %95 = vector.broadcast %cst_37 : f32 to vector<512x128xf32>
    %96 = arith.select %93, %94, %95 : vector<512x128xi1>, vector<512x128xf32>
    %97 = math.absf %91 : vector<512x128xf32>
    %cst_38 = arith.constant 0.327591091 : f32
    %98 = vector.broadcast %cst_38 : f32 to vector<512x128xf32>
    %99 = arith.mulf %98, %97 : vector<512x128xf32>
    %cst_39 = arith.constant 1.000000e+00 : f32
    %100 = vector.broadcast %cst_39 : f32 to vector<512x128xf32>
    %101 = arith.addf %100, %99 : vector<512x128xf32>
    %102 = tpu.reciprocal %101 {approx = true} : vector<512x128xf32> -> vector<512x128xf32>
    %cst_40 = arith.constant 1.06140542 : f32
    %103 = vector.broadcast %cst_40 : f32 to vector<512x128xf32>
    %104 = arith.mulf %103, %102 : vector<512x128xf32>
    %cst_41 = arith.constant -1.45315206 : f32
    %105 = vector.broadcast %cst_41 : f32 to vector<512x128xf32>
    %106 = arith.addf %104, %105 : vector<512x128xf32>
    %107 = arith.mulf %106, %102 : vector<512x128xf32>
    %cst_42 = arith.constant 1.42141378 : f32
    %108 = vector.broadcast %cst_42 : f32 to vector<512x128xf32>
    %109 = arith.addf %107, %108 : vector<512x128xf32>
    %110 = arith.mulf %109, %102 : vector<512x128xf32>
    %cst_43 = arith.constant -0.284496725 : f32
    %111 = vector.broadcast %cst_43 : f32 to vector<512x128xf32>
    %112 = arith.addf %110, %111 : vector<512x128xf32>
    %113 = arith.mulf %112, %102 : vector<512x128xf32>
    %cst_44 = arith.constant 0.254829586 : f32
    %114 = vector.broadcast %cst_44 : f32 to vector<512x128xf32>
    %115 = arith.addf %113, %114 : vector<512x128xf32>
    %116 = arith.mulf %115, %102 : vector<512x128xf32>
    %cst_45 = arith.constant 0.000000e+00 : f32
    %117 = vector.broadcast %cst_45 : f32 to vector<512x128xf32>
    %118 = arith.subf %117, %97 : vector<512x128xf32>
    %119 = arith.mulf %118, %97 : vector<512x128xf32>
    %120 = math.exp %119 : vector<512x128xf32>
    %121 = arith.mulf %116, %120 : vector<512x128xf32>
    %cst_46 = arith.constant 1.000000e+00 : f32
    %122 = vector.broadcast %cst_46 : f32 to vector<512x128xf32>
    %123 = arith.subf %122, %121 : vector<512x128xf32>
    %124 = arith.mulf %96, %123 : vector<512x128xf32>
    %cst_47 = arith.constant 1.000000e+00 : f32
    %125 = vector.broadcast %cst_47 : f32 to vector<512x128xf32>
    %126 = arith.addf %125, %124 : vector<512x128xf32>
    %127 = arith.mulf %89, %126 : vector<512x128xf32>
    %128 = arith.mulf %127, %8 : vector<512x128xf32>
    %129 = arith.truncf %128 : vector<512x128xf32> to vector<512x128xbf16>
    %c0_48 = arith.constant 0 : index
    %c0_49 = arith.constant 0 : index
    %130 = vector.load %arg11[%c0_48, %c0_49] : memref<128x128xbf16, #tpu.memory_space<vmem>>, vector<128x128xbf16>
    %cst_50 = arith.constant dense<0.000000e+00> : vector<512x128xf32>
    %131 = tpu.matmul %129, %130, %cst_50 {dimension_numbers = #tpu.dot_dimension_numbers<[1], [0], [0], [1], [0, 0, 1, 1], [], []>} : vector<512x128xbf16>, vector<128x128xbf16>, vector<512x128xf32> -> vector<512x128xf32>
    %c0_51 = arith.constant 0 : index
    %c0_52 = arith.constant 0 : index
    %132 = vector.load %arg12[%c0_51, %c0_52] : memref<1x128xf32, #tpu.memory_space<vmem>>, vector<1x128xf32>
    %133 = vector.broadcast %132 : vector<1x128xf32> to vector<512x128xf32>
    %134 = arith.addf %131, %133 : vector<512x128xf32>
    %135 = vector.shape_cast %134 : vector<512x128xf32> to vector<1x16x32x128xf32>
    %136 = arith.truncf %135 : vector<1x16x32x128xf32> to vector<1x16x32x128xbf16>
    %c0_53 = arith.constant 0 : index
    %c0_54 = arith.constant 0 : index
    %c0_55 = arith.constant 0 : index
    %c0_56 = arith.constant 0 : index
    %137 = vector.load %arg13[%c0_53, %c0_54, %c0_55, %c0_56] : memref<1x16x32x128xbf16, #tpu.memory_space<vmem>>, vector<1x16x32x128xbf16>
    tpu.vector_store %arg13[%c0_53, %c0_54, %c0_55, %c0_56], %136 {strides = array<i32>} : memref<1x16x32x128xbf16, #tpu.memory_space<vmem>>, vector<1x16x32x128xbf16>,
    return
  }
  func.func @transform_0(%arg0: i32, %arg1: i32) -> (i32, i32, i32, i32) {
    %c0_i32 = arith.constant 0 : i32
    %c0_i32_0 = arith.constant 0 : i32
    %c0_i32_1 = arith.constant 0 : i32
    return %arg0, %arg1, %c0_i32, %c0_i32_0 : i32, i32, i32, i32
  }
  func.func @transform_1(%arg0: i32, %arg1: i32) -> (i32, i32, i32, i32) {
    %c16_i32 = arith.constant 16 : i32
    %0 = arith.muli %arg1, %c16_i32 : i32
    %c1_i32 = arith.constant 1 : i32
    %1 = arith.subi %0, %c1_i32 : i32
    %c0_i32 = arith.constant 0 : i32
    %2 = arith.maxsi %1, %c0_i32 : i32
    %c0_i32_0 = arith.constant 0 : i32
    %c0_i32_1 = arith.constant 0 : i32
    %c0_i32_2 = arith.constant 0 : i32
    return %arg0, %2, %c0_i32_0, %c0_i32_1 : i32, i32, i32, i32
  }
  func.func @transform_2(%arg0: i32, %arg1: i32) -> (i32, i32, i32, i32) {
    %c16_i32 = arith.constant 16 : i32
    %0 = arith.muli %arg1, %c16_i32 : i32
    %c16_i32_0 = arith.constant 16 : i32
    %1 = arith.addi %0, %c16_i32_0 : i32
    %c31_i32 = arith.constant 31 : i32
    %2 = arith.minsi %1, %c31_i32 : i32
    %c0_i32 = arith.constant 0 : i32
    %c0_i32_1 = arith.constant 0 : i32
    %c0_i32_2 = arith.constant 0 : i32
    return %arg0, %2, %c0_i32, %c0_i32_1 : i32, i32, i32, i32
  }
  func.func @transform_3(%arg0: i32, %arg1: i32) -> (i32, i32) {
    %c0_i32 = arith.constant 0 : i32
    %c0_i32_0 = arith.constant 0 : i32
    %c0_i32_1 = arith.constant 0 : i32
    return %c0_i32, %c0_i32_0 : i32, i32
  }
  func.func @transform_4(%arg0: i32, %arg1: i32) -> (i32, i32) {
    %c0_i32 = arith.constant 0 : i32
    %c0_i32_0 = arith.constant 0 : i32
    %c0_i32_1 = arith.constant 0 : i32
    return %c0_i32, %c0_i32_0 : i32, i32
  }
  func.func @transform_5(%arg0: i32, %arg1: i32) -> (i32, i32) {
    %c0_i32 = arith.constant 0 : i32
    %c0_i32_0 = arith.constant 0 : i32
    %c0_i32_1 = arith.constant 0 : i32
    return %c0_i32, %c0_i32_0 : i32, i32
  }
  func.func @transform_6(%arg0: i32, %arg1: i32) -> (i32, i32) {
    %c0_i32 = arith.constant 0 : i32
    %c0_i32_0 = arith.constant 0 : i32
    %c0_i32_1 = arith.constant 0 : i32
    return %c0_i32, %c0_i32_0 : i32, i32
  }
  func.func @transform_7(%arg0: i32, %arg1: i32) -> (i32, i32) {
    %c0_i32 = arith.constant 0 : i32
    %c0_i32_0 = arith.constant 0 : i32
    %c0_i32_1 = arith.constant 0 : i32
    return %c0_i32, %c0_i32_0 : i32, i32
  }
  func.func @transform_8(%arg0: i32, %arg1: i32) -> (i32, i32) {
    %c0_i32 = arith.constant 0 : i32
    %c0_i32_0 = arith.constant 0 : i32
    %c0_i32_1 = arith.constant 0 : i32
    return %c0_i32, %c0_i32_0 : i32, i32
  }
  func.func @transform_9(%arg0: i32, %arg1: i32) -> (i32, i32) {
    %c0_i32 = arith.constant 0 : i32
    %c0_i32_0 = arith.constant 0 : i32
    %c0_i32_1 = arith.constant 0 : i32
    return %c0_i32, %c0_i32_0 : i32, i32
  }
  func.func @transform_10(%arg0: i32, %arg1: i32) -> (i32, i32) {
    %c0_i32 = arith.constant 0 : i32
    %c0_i32_0 = arith.constant 0 : i32
    %c0_i32_1 = arith.constant 0 : i32
    return %c0_i32, %c0_i32_0 : i32, i32
  }
  func.func @transform_11(%arg0: i32, %arg1: i32) -> (i32, i32, i32, i32) {
    %c0_i32 = arith.constant 0 : i32
    %c0_i32_0 = arith.constant 0 : i32
    %c0_i32_1 = arith.constant 0 : i32
    return %arg0, %arg1, %c0_i32, %c0_i32_0 : i32, i32, i32, i32
  }
}

</mosaic_0001>

<llo_original>
// kernel: convolutional_glu.1
$region0: #{convolutional_glu.1}
  #allocation0 [shape = 'u32[]', space=smem, size = 0x4, offset = 0x4, fixed_abs, tag = 'smem constant byte address 0x4 - core index']
  #allocation1 [shape = 'u32[144,128]{1,0:T(1,128)}', space=vmem, size = 0x12000, scoped, tag = 'internal scratch']
  %s0 = inlined_call_operand.vmem [shape: bf16[2,32,32,128], index: 0, kind: input, shape index: {}, may-alias: {0,1,2}]
  %s1 = inlined_call_operand.vmem [shape: bf16[2,32,32,128], index: 1, kind: input, shape index: {}, may-alias: {0,1,2}]
  %s2 = inlined_call_operand.vmem [shape: bf16[2,32,32,128], index: 2, kind: input, shape index: {}, may-alias: {0,1,2}]
  %s3 = inlined_call_operand.vmem [shape: f32[576,1], index: 3, kind: input, shape index: {}]
  %s4 = inlined_call_operand.vmem [shape: f32[576,1], index: 4, kind: input, shape index: {}]
  %s5 = inlined_call_operand.vmem [shape: bf16[128,256], index: 5, kind: input, shape index: {}]
  %s6 = inlined_call_operand.vmem [shape: f32[1,256], index: 6, kind: input, shape index: {}]
  %s7 = inlined_call_operand.vmem [shape: f32[9,128], index: 7, kind: input, shape index: {}]
  %s8 = inlined_call_operand.vmem [shape: f32[1,128], index: 8, kind: input, shape index: {}]
  %s9 = inlined_call_operand.vmem [shape: bf16[128,128], index: 9, kind: input, shape index: {}]
  %s10 = inlined_call_operand.vmem [shape: f32[1,128], index: 10, kind: input, shape index: {}]
  %s11 = inlined_call_operand.vmem [shape: bf16[2,32,32,128], index: 11, kind: output, shape index: {}]
  %s12 = sld [smem:[#allocation0]]
  $region77: #{convolutional_glu.1} parent=0
    _
  %s14 = ssub.s32 1, %s12
  %s15 = scalar_select 0, %s14, %s12
  loop: start=0, step=1, limit=6
  $region2: #{convolutional_glu.1} parent=0 // loop_pre_header
    _
  $region3: #{convolutional_glu.1} parent=0 // loop_header
    %s17 = sphi 0, %s21
    %p18 = scmp.ge.s32.totalorder %s17, 6
    %s24 = sphi 0, %s36
    %s25 = sphi 0, %s32
    %s26 = sphi 0, %s24
    %s27 = sphi 0, %s25
    %s28 = sphi 0, %s26
    %s29 = sphi 0, %s27
    %s41 = sphi 0, %s43
    %s44 = sphi 0, %s41
    %s45 = sphi 0, %s44
    %s61 = sphi 0, %s45
    %s77 = sphi 0, %s79
    %s80 = sphi 0, %s77
    %s81 = sphi 0, %s80
    %s97 = sphi 0, %s81
    %s113 = sphi 0, %s115
    %s116 = sphi 0, %s113
    %s117 = sphi 0, %s116
    %s133 = sphi 0, %s117
    %s137 = sphi 0, %s137
    %s139 = sphi 0, %s137
    %s140 = sphi 0, %s139
    %s154 = sphi 0, %s140
    %s158 = sphi 0, %s158
    %s160 = sphi 0, %s158
    %s161 = sphi 0, %s160
    %s175 = sphi 0, %s161
    %s179 = sphi 0, %s179
    %s181 = sphi 0, %s179
    %s182 = sphi 0, %s181
    %s196 = sphi 0, %s182
    %s200 = sphi 0, %s200
    %s202 = sphi 0, %s200
    %s203 = sphi 0, %s202
    %s217 = sphi 0, %s203
    %s221 = sphi 0, %s221
    %s223 = sphi 0, %s221
    %s224 = sphi 0, %s223
    %s238 = sphi 0, %s224
    %s242 = sphi 0, %s242
    %s244 = sphi 0, %s242
    %s245 = sphi 0, %s244
    %s259 = sphi 0, %s245
    %s263 = sphi 0, %s263
    %s265 = sphi 0, %s263
    %s266 = sphi 0, %s265
    %s280 = sphi 0, %s266
    %s284 = sphi 0, %s284
    %s286 = sphi 0, %s284
    %s287 = sphi 0, %s286
    %s301 = sphi 0, %s287
    %s309 = sphi 0, %s311
    %s312 = sphi 0, %s309
    %s313 = sphi 0, %s312
    %s329 = sphi 0, %s313
  $region4: #{convolutional_glu.1} parent=0 // loop_header_branch
    %20 = sbr.rel (%p18) target = $region8
  $region5: #{convolutional_glu.1} parent=0 // loop_body
    %s22 = ssub.s32 %s17, 1
    %s23 = ssub.s32 %s17, 2
    %s30 = sadd.s32 1, %s25
    %p31 = scmp.ge.s32.totalorder %s30, 2
    %s32 = scalar_select %p31, 0, %s30
    %s33 = sadd.s32 1, %s24
    %s34 = scalar_select %p31, %s33, %s24
    %p35 = scmp.ge.s32.totalorder %s34, 2
    %s36 = scalar_select %p35, 0, %s34
    %s37 = ssub.s32 %s24, %s36
    %s38 = ssub.s32 %s25, %s32
    %s39 = sor.u32 %s37, %s38
    %p40 = scmp.eq.s32.totalorder %s39, 0
    %s42 = sadd.s32 %s41, 1
    %s43 = scalar_select %p40, %s41, %s42
    %p46 = pneg %p40
    %p47 = scmp.eq.s32.totalorder %s17, 3
    %p48 = por %p46, %p47
    %p49 = scmp.ne.s32.totalorder %s41, %s44
    %p50 = scmp.eq.s32.totalorder %s17, 0
    %p51 = por %p49, %p50
    %p52 = scmp.ne.s32.totalorder %s41, %s44
    %p53 = scmp.eq.s32.totalorder %s22, 3
    %p54 = por %p52, %p53
    %p55 = scmp.ne.s32.totalorder %s44, %s45
    %p56 = scmp.eq.s32.totalorder %s22, 0
    %p57 = por %p55, %p56
    %p58 = scmp.ne.s32.totalorder %s44, %s45
    %p59 = scmp.eq.s32.totalorder %s23, 3
    %p60 = por %p58, %p59
    %p62 = scmp.ne.s32.totalorder %s45, %s61
    %p63 = scmp.eq.s32.totalorder %s23, 0
    %p64 = por %p62, %p63
    %s65 = smul.u32 %s25, 16
    %s66 = ssub.s32 %s65, 1
    %p67 = scmp.gt.s32.totalorder %s66, 0
    %s68 = scalar_select %p67, %s66, 0
    %s69 = smul.u32 %s32, 16
    %s70 = ssub.s32 %s69, 1
    %p71 = scmp.gt.s32.totalorder %s70, 0
    %s72 = scalar_select %p71, %s70, 0
    %s73 = ssub.s32 %s24, %s36
    %s74 = ssub.s32 %s68, %s72
    %s75 = sor.u32 %s73, %s74
    %p76 = scmp.eq.s32.totalorder %s75, 0
    %s78 = sadd.s32 %s77, 1
    %s79 = scalar_select %p76, %s77, %s78
    %p82 = pneg %p76
    %p83 = scmp.eq.s32.totalorder %s17, 3
    %p84 = por %p82, %p83
    %p85 = scmp.ne.s32.totalorder %s77, %s80
    %p86 = scmp.eq.s32.totalorder %s17, 0
    %p87 = por %p85, %p86
    %p88 = scmp.ne.s32.totalorder %s77, %s80
    %p89 = scmp.eq.s32.totalorder %s22, 3
    %p90 = por %p88, %p89
    %p91 = scmp.ne.s32.totalorder %s80, %s81
    %p92 = scmp.eq.s32.totalorder %s22, 0
    %p93 = por %p91, %p92
    %p94 = scmp.ne.s32.totalorder %s80, %s81
    %p95 = scmp.eq.s32.totalorder %s23, 3
    %p96 = por %p94, %p95
    %p98 = scmp.ne.s32.totalorder %s81, %s97
    %p99 = scmp.eq.s32.totalorder %s23, 0
    %p100 = por %p98, %p99
    %s101 = smul.u32 %s25, 16
    %s102 = sadd.s32 %s101, 16
    %p103 = scmp.lt.s32.totalorder %s102, 31
    %s104 = scalar_select %p103, %s102, 31
    %s105 = smul.u32 %s32, 16
    %s106 = sadd.s32 %s105, 16
    %p107 = scmp.lt.s32.totalorder %s106, 31
    %s108 = scalar_select %p107, %s106, 31
    %s109 = ssub.s32 %s24, %s36
    %s110 = ssub.s32 %s104, %s108
    %s111 = sor.u32 %s109, %s110
    %p112 = scmp.eq.s32.totalorder %s111, 0
    %s114 = sadd.s32 %s113, 1
    %s115 = scalar_select %p112, %s113, %s114
    %p118 = pneg %p112
    %p119 = scmp.eq.s32.totalorder %s17, 3
    %p120 = por %p118, %p119
    %p121 = scmp.ne.s32.totalorder %s113, %s116
    %p122 = scmp.eq.s32.totalorder %s17, 0
    %p123 = por %p121, %p122
    %p124 = scmp.ne.s32.totalorder %s113, %s116
    %p125 = scmp.eq.s32.totalorder %s22, 3
    %p126 = por %p124, %p125
    %p127 = scmp.ne.s32.totalorder %s116, %s117
    %p128 = scmp.eq.s32.totalorder %s22, 0
    %p129 = por %p127, %p128
    %p130 = scmp.ne.s32.totalorder %s116, %s117
    %p131 = scmp.eq.s32.totalorder %s23, 3
    %p132 = por %p130, %p131
    %p134 = scmp.ne.s32.totalorder %s117, %s133
    %p135 = scmp.eq.s32.totalorder %s23, 0
    %p136 = por %p134, %p135
    %s138 = sadd.s32 %s137, 1
    %p141 = scmp.eq.s32.totalorder %s17, 3
    %p142 = scmp.ne.s32.totalorder %s137, %s139
    %p143 = scmp.eq.s32.totalorder %s17, 0
    %p144 = por %p142, %p143
    %p145 = scmp.ne.s32.totalorder %s137, %s139
    %p146 = scmp.eq.s32.totalorder %s22, 3
    %p147 = por %p145, %p146
    %p148 = scmp.ne.s32.totalorder %s139, %s140
    %p149 = scmp.eq.s32.totalorder %s22, 0
    %p150 = por %p148, %p149
    %p151 = scmp.ne.s32.totalorder %s139, %s140
    %p152 = scmp.eq.s32.totalorder %s23, 3
    %p153 = por %p151, %p152
    %p155 = scmp.ne.s32.totalorder %s140, %s154
    %p156 = scmp.eq.s32.totalorder %s23, 0
    %p157 = por %p155, %p156
    %s159 = sadd.s32 %s158, 1
    %p162 = scmp.eq.s32.totalorder %s17, 3
    %p163 = scmp.ne.s32.totalorder %s158, %s160
    %p164 = scmp.eq.s32.totalorder %s17, 0
    %p165 = por %p163, %p164
    %p166 = scmp.ne.s32.totalorder %s158, %s160
    %p167 = scmp.eq.s32.totalorder %s22, 3
    %p168 = por %p166, %p167
    %p169 = scmp.ne.s32.totalorder %s160, %s161
    %p170 = scmp.eq.s32.totalorder %s22, 0
    %p171 = por %p169, %p170
    %p172 = scmp.ne.s32.totalorder %s160, %s161
    %p173 = scmp.eq.s32.totalorder %s23, 3
    %p174 = por %p172, %p173
    %p176 = scmp.ne.s32.totalorder %s161, %s175
    %p177 = scmp.eq.s32.totalorder %s23, 0
    %p178 = por %p176, %p177
    %s180 = sadd.s32 %s179, 1
    %p183 = scmp.eq.s32.totalorder %s17, 3
    %p184 = scmp.ne.s32.totalorder %s179, %s181
    %p185 = scmp.eq.s32.totalorder %s17, 0
    %p186 = por %p184, %p185
    %p187 = scmp.ne.s32.totalorder %s179, %s181
    %p188 = scmp.eq.s32.totalorder %s22, 3
    %p189 = por %p187, %p188
    %p190 = scmp.ne.s32.totalorder %s181, %s182
    %p191 = scmp.eq.s32.totalorder %s22, 0
    %p192 = por %p190, %p191
    %p193 = scmp.ne.s32.totalorder %s181, %s182
    %p194 = scmp.eq.s32.totalorder %s23, 3
    %p195 = por %p193, %p194
    %p197 = scmp.ne.s32.totalorder %s182, %s196
    %p198 = scmp.eq.s32.totalorder %s23, 0
    %p199 = por %p197, %p198
    %s201 = sadd.s32 %s200, 1
    %p204 = scmp.eq.s32.totalorder %s17, 3
    %p205 = scmp.ne.s32.totalorder %s200, %s202
    %p206 = scmp.eq.s32.totalorder %s17, 0
    %p207 = por %p205, %p206
    %p208 = scmp.ne.s32.totalorder %s200, %s202
    %p209 = scmp.eq.s32.totalorder %s22, 3
    %p210 = por %p208, %p209
    %p211 = scmp.ne.s32.totalorder %s202, %s203
    %p212 = scmp.eq.s32.totalorder %s22, 0
    %p213 = por %p211, %p212
    %p214 = scmp.ne.s32.totalorder %s202, %s203
    %p215 = scmp.eq.s32.totalorder %s23, 3
    %p216 = por %p214, %p215
    %p218 = scmp.ne.s32.totalorder %s203, %s217
    %p219 = scmp.eq.s32.totalorder %s23, 0
    %p220 = por %p218, %p219
    %s222 = sadd.s32 %s221, 1
    %p225 = scmp.eq.s32.totalorder %s17, 3
    %p226 = scmp.ne.s32.totalorder %s221, %s223
    %p227 = scmp.eq.s32.totalorder %s17, 0
    %p228 = por %p226, %p227
    %p229 = scmp.ne.s32.totalorder %s221, %s223
    %p230 = scmp.eq.s32.totalorder %s22, 3
    %p231 = por %p229, %p230
    %p232 = scmp.ne.s32.totalorder %s223, %s224
    %p233 = scmp.eq.s32.totalorder %s22, 0
    %p234 = por %p232, %p233
    %p235 = scmp.ne.s32.totalorder %s223, %s224
    %p236 = scmp.eq.s32.totalorder %s23, 3
    %p237 = por %p235, %p236
    %p239 = scmp.ne.s32.totalorder %s224, %s238
    %p240 = scmp.eq.s32.totalorder %s23, 0
    %p241 = por %p239, %p240
    %s243 = sadd.s32 %s242, 1
    %p246 = scmp.eq.s32.totalorder %s17, 3
    %p247 = scmp.ne.s32.totalorder %s242, %s244
    %p248 = scmp.eq.s32.totalorder %s17, 0
    %p249 = por %p247, %p248
    %p250 = scmp.ne.s32.totalorder %s242, %s244
    %p251 = scmp.eq.s32.totalorder %s22, 3
    %p252 = por %p250, %p251
    %p253 = scmp.ne.s32.totalorder %s244, %s245
    %p254 = scmp.eq.s32.totalorder %s22, 0
    %p255 = por %p253, %p254
    %p256 = scmp.ne.s32.totalorder %s244, %s245
    %p257 = scmp.eq.s32.totalorder %s23, 3
    %p258 = por %p256, %p257
    %p260 = scmp.ne.s32.totalorder %s245, %s259
    %p261 = scmp.eq.s32.totalorder %s23, 0
    %p262 = por %p260, %p261
    %s264 = sadd.s32 %s263, 1
    %p267 = scmp.eq.s32.totalorder %s17, 3
    %p268 = scmp.ne.s32.totalorder %s263, %s265
    %p269 = scmp.eq.s32.totalorder %s17, 0
    %p270 = por %p268, %p269
    %p271 = scmp.ne.s32.totalorder %s263, %s265
    %p272 = scmp.eq.s32.totalorder %s22, 3
    %p273 = por %p271, %p272
    %p274 = scmp.ne.s32.totalorder %s265, %s266
    %p275 = scmp.eq.s32.totalorder %s22, 0
    %p276 = por %p274, %p275
    %p277 = scmp.ne.s32.totalorder %s265, %s266
    %p278 = scmp.eq.s32.totalorder %s23, 3
    %p279 = por %p277, %p278
    %p281 = scmp.ne.s32.totalorder %s266, %s280
    %p282 = scmp.eq.s32.totalorder %s23, 0
    %p283 = por %p281, %p282
    %s285 = sadd.s32 %s284, 1
    %p288 = scmp.eq.s32.totalorder %s17, 3
    %p289 = scmp.ne.s32.totalorder %s284, %s286
    %p290 = scmp.eq.s32.totalorder %s17, 0
    %p291 = por %p289, %p290
    %p292 = scmp.ne.s32.totalorder %s284, %s286
    %p293 = scmp.eq.s32.totalorder %s22, 3
    %p294 = por %p292, %p293
    %p295 = scmp.ne.s32.totalorder %s286, %s287
    %p296 = scmp.eq.s32.totalorder %s22, 0
    %p297 = por %p295, %p296
    %p298 = scmp.ne.s32.totalorder %s286, %s287
    %p299 = scmp.eq.s32.totalorder %s23, 3
    %p300 = por %p298, %p299
    %p302 = scmp.ne.s32.totalorder %s287, %s301
    %p303 = scmp.eq.s32.totalorder %s23, 0
    %p304 = por %p302, %p303
    %s305 = ssub.s32 %s24, %s36
    %s306 = ssub.s32 %s25, %s32
    %s307 = sor.u32 %s305, %s306
    %p308 = scmp.eq.s32.totalorder %s307, 0
    %s310 = sadd.s32 %s309, 1
    %s311 = scalar_select %p308, %s309, %s310
    %p314 = pneg %p308
    %p315 = scmp.eq.s32.totalorder %s17, 3
    %p316 = por %p314, %p315
    %p317 = scmp.ne.s32.totalorder %s309, %s312
    %p318 = scmp.eq.s32.totalorder %s17, 0
    %p319 = por %p317, %p318
    %p320 = scmp.ne.s32.totalorder %s309, %s312
    %p321 = scmp.eq.s32.totalorder %s22, 3
    %p322 = por %p320, %p321
    %p323 = scmp.ne.s32.totalorder %s312, %s313
    %p324 = scmp.eq.s32.totalorder %s22, 0
    %p325 = por %p323, %p324
    %p326 = scmp.ne.s32.totalorder %s312, %s313
    %p327 = scmp.eq.s32.totalorder %s23, 3
    %p328 = por %p326, %p327
    %p330 = scmp.ne.s32.totalorder %s313, %s329
    %p331 = scmp.eq.s32.totalorder %s23, 0
    %p332 = por %p330, %p331
    %p333 = scmp.le.s32.totalorder 1, %s17
    %p334 = scmp.lt.s32.totalorder %s17, 5
    %p335 = pnand %p333, %p334
    %p336 = pneg %p335
    // Predicated region
    $region9: #{convolutional_glu.1} parent=5 // pred_check
      _
    $region10: #{convolutional_glu.1} parent=5 // pred_check_branch
      %338 = sbr.rel (%p335) target = $region12
    $region11: #{convolutional_glu.1} parent=5 // pred_region
      %s339 = ssub.s32 %s17, 1
      // Predicated region
      $region13: #{convolutional_glu.1} parent=11 // pred_check
        %p340 = pneg %p150
      $region14: #{convolutional_glu.1} parent=11 // pred_check_branch
        %342 = sbr.rel (%p340) target = $region16
      $region15: #{convolutional_glu.1} parent=11 // pred_region
        _
      $region16: #{convolutional_glu.1} parent=11 // pred_fallthru
        _
      // Predicated region
      $region17: #{convolutional_glu.1} parent=11 // pred_check
        %p343 = pneg %p171
      $region18: #{convolutional_glu.1} parent=11 // pred_check_branch
        %345 = sbr.rel (%p343) target = $region20
      $region19: #{convolutional_glu.1} parent=11 // pred_region
        _
      $region20: #{convolutional_glu.1} parent=11 // pred_fallthru
        _
      // Predicated region
      $region21: #{convolutional_glu.1} parent=11 // pred_check
        %p346 = pneg %p192
      $region22: #{convolutional_glu.1} parent=11 // pred_check_branch
        %348 = sbr.rel (%p346) target = $region24
      $region23: #{convolutional_glu.1} parent=11 // pred_region
        _
      $region24: #{convolutional_glu.1} parent=11 // pred_fallthru
        _
      // Predicated region
      $region25: #{convolutional_glu.1} parent=11 // pred_check
        %p349 = pneg %p213
      $region26: #{convolutional_glu.1} parent=11 // pred_check_branch
        %351 = sbr.rel (%p349) target = $region28
      $region27: #{convolutional_glu.1} parent=11 // pred_region
        _
      $region28: #{convolutional_glu.1} parent=11 // pred_fallthru
        _
      // Predicated region
      $region29: #{convolutional_glu.1} parent=11 // pred_check
        %p352 = pneg %p234
      $region30: #{convolutional_glu.1} parent=11 // pred_check_branch
        %354 = sbr.rel (%p352) target = $region32
      $region31: #{convolutional_glu.1} parent=11 // pred_region
        _
      $region32: #{convolutional_glu.1} parent=11 // pred_fallthru
        _
      // Predicated region
      $region33: #{convolutional_glu.1} parent=11 // pred_check
        %p355 = pneg %p255
      $region34: #{convolutional_glu.1} parent=11 // pred_check_branch
        %357 = sbr.rel (%p355) target = $region36
      $region35: #{convolutional_glu.1} parent=11 // pred_region
        _
      $region36: #{convolutional_glu.1} parent=11 // pred_fallthru
        _
      // Predicated region
      $region37: #{convolutional_glu.1} parent=11 // pred_check
        %p358 = pneg %p276
      $region38: #{convolutional_glu.1} parent=11 // pred_check_branch
        %360 = sbr.rel (%p358) target = $region40
      $region39: #{convolutional_glu.1} parent=11 // pred_region
        _
      $region40: #{convolutional_glu.1} parent=11 // pred_fallthru
        _
      // Predicated region
      $region41: #{convolutional_glu.1} parent=11 // pred_check
        %p361 = pneg %p297
      $region42: #{convolutional_glu.1} parent=11 // pred_check_branch
        %363 = sbr.rel (%p361) target = $region44
      $region43: #{convolutional_glu.1} parent=11 // pred_region
        _
      $region44: #{convolutional_glu.1} parent=11 // pred_fallthru
        _
    $region12: #{convolutional_glu.1} parent=5 // pred_fallthru
      _
    %p364 = scmp.lt.s32.totalorder %s17, 4
    // Predicated region
    $region45: #{convolutional_glu.1} parent=5 // pred_check
      %p365 = pneg %p364
    $region46: #{convolutional_glu.1} parent=5 // pred_check_branch
      %367 = sbr.rel (%p365) target = $region48
    $region47: #{convolutional_glu.1} parent=5 // pred_region
      // Predicated region
      $region49: #{convolutional_glu.1} parent=47 // pred_check
        %p368 = pneg %p51
      $region50: #{convolutional_glu.1} parent=47 // pred_check_branch
        %370 = sbr.rel (%p368) target = $region52
      $region51: #{convolutional_glu.1} parent=47 // pred_region
        %s371 = smul.u32 16, %s25
        %p372 = scmp.lt.s32.totalorder %s24, 1
        %s373 = scalar_select %p372, %s24, 1
        %p374 = scmp.lt.s32.totalorder %s371, 31
        %s375 = scalar_select %p374, %s371, 31
        %s376 = smul.addr %s375, 4
        %s377 = smul.addr %s373, 128
        %s378 = sadd.s32 %s376, %s377
        %s379 = smul.addr %s378, 4
        %s380 = scalar_lea.vmem %s0, %s379
        %s381 = smul.u32 16, %s25
      $region52: #{convolutional_glu.1} parent=47 // pred_fallthru
        _
      // Predicated region
      $region53: #{convolutional_glu.1} parent=47 // pred_check
        %p382 = pneg %p87
      $region54: #{convolutional_glu.1} parent=47 // pred_check_branch
        %384 = sbr.rel (%p382) target = $region56
      $region55: #{convolutional_glu.1} parent=47 // pred_region
        %s385 = smul.u32 %s25, 16
        %s386 = ssub.s32 %s385, 1
        %p387 = scmp.gt.s32.totalorder %s386, 0
        %s388 = scalar_select %p387, %s386, 0
        %p389 = scmp.lt.s32.totalorder %s24, 1
        %s390 = scalar_select %p389, %s24, 1
        %p391 = scmp.lt.s32.totalorder %s388, 31
        %s392 = scalar_select %p391, %s388, 31
        %s393 = smul.addr %s392, 4
        %s394 = smul.addr %s390, 128
        %s395 = sadd.s32 %s393, %s394
        %s396 = smul.addr %s395, 4
        %s397 = scalar_lea.vmem %s1, %s396
        %s398 = smul.u32 %s25, 16
        %s399 = ssub.s32 %s398, 1
        %p400 = scmp.gt.s32.totalorder %s399, 0
        %s401 = scalar_select %p400, %s399, 0
      $region56: #{convolutional_glu.1} parent=47 // pred_fallthru
        _
      // Predicated region
      $region57: #{convolutional_glu.1} parent=47 // pred_check
        %p402 = pneg %p123
      $region58: #{convolutional_glu.1} parent=47 // pred_check_branch
        %404 = sbr.rel (%p402) target = $region60
      $region59: #{convolutional_glu.1} parent=47 // pred_region
        %s405 = smul.u32 %s25, 16
        %s406 = sadd.s32 %s405, 16
        %p407 = scmp.lt.s32.totalorder %s406, 31
        %s408 = scalar_select %p407, %s406, 31
        %p409 = scmp.lt.s32.totalorder %s24, 1
        %s410 = scalar_select %p409, %s24, 1
        %p411 = scmp.lt.s32.totalorder %s408, 31
        %s412 = scalar_select %p411, %s408, 31
        %s413 = smul.addr %s412, 4
        %s414 = smul.addr %s410, 128
        %s415 = sadd.s32 %s413, %s414
        %s416 = smul.addr %s415, 4
        %s417 = scalar_lea.vmem %s2, %s416
        %s418 = smul.u32 %s25, 16
        %s419 = sadd.s32 %s418, 16
        %p420 = scmp.lt.s32.totalorder %s419, 31
        %s421 = scalar_select %p420, %s419, 31
      $region60: #{convolutional_glu.1} parent=47 // pred_fallthru
        _
    $region48: #{convolutional_glu.1} parent=5 // pred_fallthru
      _
    %p422 = scmp.le.s32.totalorder 1, %s17
    %p423 = scmp.lt.s32.totalorder %s17, 5
    %p424 = pnand %p422, %p423
    %p425 = pneg %p424
    // Predicated region
    $region61: #{convolutional_glu.1} parent=5 // pred_check
      _
    $region62: #{convolutional_glu.1} parent=5 // pred_check_branch
      %427 = sbr.rel (%p424) target = $region64
    $region63: #{convolutional_glu.1} parent=5 // pred_region
      %s428 = ssub.s32 %s17, 1
      %s429 = smul.u32 16, %s27
      %p430 = scmp.lt.s32.totalorder %s26, 1
      %s431 = scalar_select %p430, %s26, 1
      %p432 = scmp.lt.s32.totalorder %s429, 31
      %s433 = scalar_select %p432, %s429, 31
      %s434 = smul.addr %s433, 4
      %s435 = smul.addr %s431, 128
      %s436 = sadd.s32 %s434, %s435
      %s437 = smul.addr %s436, 4
      %s438 = scalar_lea.vmem %s0, %s437
      %p439 = pneg %p57
      %p440 = pneg %p54
      %s441 = smul.u32 %s27, 16
      %s442 = ssub.s32 %s441, 1
      %p443 = scmp.gt.s32.totalorder %s442, 0
      %s444 = scalar_select %p443, %s442, 0
      %p445 = scmp.lt.s32.totalorder %s26, 1
      %s446 = scalar_select %p445, %s26, 1
      %p447 = scmp.lt.s32.totalorder %s444, 31
      %s448 = scalar_select %p447, %s444, 31
      %s449 = smul.addr %s448, 4
      %s450 = smul.addr %s446, 128
      %s451 = sadd.s32 %s449, %s450
      %s452 = smul.addr %s451, 4
      %s453 = scalar_lea.vmem %s1, %s452
      %p454 = pneg %p93
      %p455 = pneg %p90
      %s456 = smul.u32 %s27, 16
      %s457 = sadd.s32 %s456, 16
      %p458 = scmp.lt.s32.totalorder %s457, 31
      %s459 = scalar_select %p458, %s457, 31
      %p460 = scmp.lt.s32.totalorder %s26, 1
      %s461 = scalar_select %p460, %s26, 1
      %p462 = scmp.lt.s32.totalorder %s459, 31
      %s463 = scalar_select %p462, %s459, 31
      %s464 = smul.addr %s463, 4
      %s465 = smul.addr %s461, 128
      %s466 = sadd.s32 %s464, %s465
      %s467 = smul.addr %s466, 4
      %s468 = scalar_lea.vmem %s2, %s467
      %p469 = pneg %p129
      %p470 = pneg %p126
      %p471 = pneg %p150
      %p472 = pneg %p147
      %p473 = pneg %p171
      %p474 = pneg %p168
      %p475 = pneg %p192
      %p476 = pneg %p189
      %p477 = pneg %p213
      %p478 = pneg %p210
      %p479 = pneg %p234
      %p480 = pneg %p231
      %p481 = pneg %p255
      %p482 = pneg %p252
      %p483 = pneg %p276
      %p484 = pneg %p273
      %p485 = pneg %p297
      %p486 = pneg %p294
      %p487 = pneg %p325
      %p488 = pneg %p322
      %s489 = smul.u32 16, %s27
      %p490 = scmp.lt.s32.totalorder %s26, 1
      %s491 = scalar_select %p490, %s26, 1
      %p492 = scmp.lt.s32.totalorder %s489, 31
      %s493 = scalar_select %p492, %s489, 31
      %s494 = smul.addr %s493, 4
      %s495 = smul.addr %s491, 128
      %s496 = sadd.s32 %s494, %s495
      %s497 = smul.addr %s496, 4
      %s498 = scalar_lea.vmem %s11, %s497
      %s499 = smul.u32 16, %s27
      %p500 = scmp.lt.s32.totalorder %s26, 1
      %s501 = scalar_select %p500, %s26, 1
      %p502 = scmp.lt.s32.totalorder %s499, 31
      %s503 = scalar_select %p502, %s499, 31
      %s504 = smul.addr %s503, 4
      %s505 = smul.addr %s501, 128
      %s506 = sadd.s32 %s504, %s505
      %s507 = smul.addr %s506, 4
      %s508 = scalar_lea.vmem %s0, %s507
      %s509 = smul.u32 16, %s27
      %s510 = smul.u32 %s27, 16
      %s511 = ssub.s32 %s510, 1
      %p512 = scmp.gt.s32.totalorder %s511, 0
      %s513 = scalar_select %p512, %s511, 0
      %p514 = scmp.lt.s32.totalorder %s26, 1
      %s515 = scalar_select %p514, %s26, 1
      %p516 = scmp.lt.s32.totalorder %s513, 31
      %s517 = scalar_select %p516, %s513, 31
      %s518 = smul.addr %s517, 4
      %s519 = smul.addr %s515, 128
      %s520 = sadd.s32 %s518, %s519
      %s521 = smul.addr %s520, 4
      %s522 = scalar_lea.vmem %s1, %s521
      %s523 = smul.u32 %s27, 16
      %s524 = ssub.s32 %s523, 1
      %p525 = scmp.gt.s32.totalorder %s524, 0
      %s526 = scalar_select %p525, %s524, 0
      %s527 = smul.u32 %s27, 16
      %s528 = sadd.s32 %s527, 16
      %p529 = scmp.lt.s32.totalorder %s528, 31
      %s530 = scalar_select %p529, %s528, 31
      %p531 = scmp.lt.s32.totalorder %s26, 1
      %s532 = scalar_select %p531, %s26, 1
      %p533 = scmp.lt.s32.totalorder %s530, 31
      %s534 = scalar_select %p533, %s530, 31
      %s535 = smul.addr %s534, 4
      %s536 = smul.addr %s532, 128
      %s537 = sadd.s32 %s535, %s536
      %s538 = smul.addr %s537, 4
      %s539 = scalar_lea.vmem %s2, %s538
      %s540 = smul.u32 %s27, 16
      %s541 = sadd.s32 %s540, 16
      %p542 = scmp.lt.s32.totalorder %s541, 31
      %s543 = scalar_select %p542, %s541, 31
      %s544 = smul.u32 16, %s27
      %p545 = scmp.lt.s32.totalorder %s26, 1
      %s546 = scalar_select %p545, %s26, 1
      %p547 = scmp.lt.s32.totalorder %s544, 31
      %s548 = scalar_select %p547, %s544, 31
      %s549 = smul.addr %s548, 4
      %s550 = smul.addr %s546, 128
      %s551 = sadd.s32 %s549, %s550
      %s552 = smul.addr %s551, 4
      %s553 = scalar_lea.vmem %s11, %s552
      %s554 = smul.u32 16, %s27
      %v556 = vld [vmem:[%s5] sm:$0xff]
      %v557 = vld [vmem:[%s5 + $0x8] sm:$0xff]
      %v558 = vld [vmem:[%s5 + $0x10] sm:$0xff]
      %v559 = vld [vmem:[%s5 + $0x18] sm:$0xff]
      %v560 = vld [vmem:[%s5 + $0x20] sm:$0xff]
      %v561 = vld [vmem:[%s5 + $0x28] sm:$0xff]
      %v562 = vld [vmem:[%s5 + $0x30] sm:$0xff]
      %v563 = vld [vmem:[%s5 + $0x38] sm:$0xff]
      %v564 = vld [vmem:[%s5 + $0x40] sm:$0xff]
      %v565 = vld [vmem:[%s5 + $0x48] sm:$0xff]
      %v566 = vld [vmem:[%s5 + $0x50] sm:$0xff]
      %v567 = vld [vmem:[%s5 + $0x58] sm:$0xff]
      %v568 = vld [vmem:[%s5 + $0x60] sm:$0xff]
      %v569 = vld [vmem:[%s5 + $0x68] sm:$0xff]
      %v570 = vld [vmem:[%s5 + $0x70] sm:$0xff]
      %v571 = vld [vmem:[%s5 + $0x78] sm:$0xff]
      %v572 = vld [vmem:[%s508] sm:$0xf]
      %v573 = vld [vmem:[%s508 + $0x4] sm:$0xf]
      %v574 = vld [vmem:[%s508 + $0x8] sm:$0xf]
      %v575 = vld [vmem:[%s508 + $0xc] sm:$0xf]
      %v576 = vld [vmem:[%s508 + $0x10] sm:$0xf]
      %v577 = vld [vmem:[%s508 + $0x14] sm:$0xf]
      %v578 = vld [vmem:[%s508 + $0x18] sm:$0xf]
      %v579 = vld [vmem:[%s508 + $0x1c] sm:$0xf]
      %v580 = vld [vmem:[%s508 + $0x20] sm:$0xf]
      %v581 = vld [vmem:[%s508 + $0x24] sm:$0xf]
      %v582 = vld [vmem:[%s508 + $0x28] sm:$0xf]
      %v583 = vld [vmem:[%s508 + $0x2c] sm:$0xf]
      %v584 = vld [vmem:[%s508 + $0x30] sm:$0xf]
      %v585 = vld [vmem:[%s508 + $0x34] sm:$0xf]
      %v586 = vld [vmem:[%s508 + $0x38] sm:$0xf]
      %v587 = vld [vmem:[%s508 + $0x3c] sm:$0xf]
      %v588 = vld [vmem:[%s508 + $0x40] sm:$0xf]
      %v589 = vld [vmem:[%s508 + $0x44] sm:$0xf]
      %v590 = vld [vmem:[%s508 + $0x48] sm:$0xf]
      %v591 = vld [vmem:[%s508 + $0x4c] sm:$0xf]
      %v592 = vld [vmem:[%s508 + $0x50] sm:$0xf]
      %v593 = vld [vmem:[%s508 + $0x54] sm:$0xf]
      %v594 = vld [vmem:[%s508 + $0x58] sm:$0xf]
      %v595 = vld [vmem:[%s508 + $0x5c] sm:$0xf]
      %v596 = vld [vmem:[%s508 + $0x60] sm:$0xf]
      %v597 = vld [vmem:[%s508 + $0x64] sm:$0xf]
      %v598 = vld [vmem:[%s508 + $0x68] sm:$0xf]
      %v599 = vld [vmem:[%s508 + $0x6c] sm:$0xf]
      %v600 = vld [vmem:[%s508 + $0x70] sm:$0xf]
      %v601 = vld [vmem:[%s508 + $0x74] sm:$0xf]
      %v602 = vld [vmem:[%s508 + $0x78] sm:$0xf]
      %v603 = vld [vmem:[%s508 + $0x7c] sm:$0xf]
      %v604 = vld [vmem:[%s508 + $0x80] sm:$0xf]
      %v605 = vld [vmem:[%s508 + $0x84] sm:$0xf]
      %v606 = vld [vmem:[%s508 + $0x88] sm:$0xf]
      %v607 = vld [vmem:[%s508 + $0x8c] sm:$0xf]
      %v608 = vld [vmem:[%s508 + $0x90] sm:$0xf]
      %v609 = vld [vmem:[%s508 + $0x94] sm:$0xf]
      %v610 = vld [vmem:[%s508 + $0x98] sm:$0xf]
      %v611 = vld [vmem:[%s508 + $0x9c] sm:$0xf]
      %v612 = vld [vmem:[%s508 + $0xa0] sm:$0xf]
      %v613 = vld [vmem:[%s508 + $0xa4] sm:$0xf]
      %v614 = vld [vmem:[%s508 + $0xa8] sm:$0xf]
      %v615 = vld [vmem:[%s508 + $0xac] sm:$0xf]
      %v616 = vld [vmem:[%s508 + $0xb0] sm:$0xf]
      %v617 = vld [vmem:[%s508 + $0xb4] sm:$0xf]
      %v618 = vld [vmem:[%s508 + $0xb8] sm:$0xf]
      %v619 = vld [vmem:[%s508 + $0xbc] sm:$0xf]
      %v620 = vld [vmem:[%s508 + $0xc0] sm:$0xf]
      %v621 = vld [vmem:[%s508 + $0xc4] sm:$0xf]
      %v622 = vld [vmem:[%s508 + $0xc8] sm:$0xf]
      %v623 = vld [vmem:[%s508 + $0xcc] sm:$0xf]
      %v624 = vld [vmem:[%s508 + $0xd0] sm:$0xf]
      %v625 = vld [vmem:[%s508 + $0xd4] sm:$0xf]
      %v626 = vld [vmem:[%s508 + $0xd8] sm:$0xf]
      %v627 = vld [vmem:[%s508 + $0xdc] sm:$0xf]
      %v628 = vld [vmem:[%s508 + $0xe0] sm:$0xf]
      %v629 = vld [vmem:[%s508 + $0xe4] sm:$0xf]
      %v630 = vld [vmem:[%s508 + $0xe8] sm:$0xf]
      %v631 = vld [vmem:[%s508 + $0xec] sm:$0xf]
      %v632 = vld [vmem:[%s508 + $0xf0] sm:$0xf]
      %v633 = vld [vmem:[%s508 + $0xf4] sm:$0xf]
      %v634 = vld [vmem:[%s508 + $0xf8] sm:$0xf]
      %v635 = vld [vmem:[%s508 + $0xfc] sm:$0xf]
      %v636 = vld [vmem:[%s6] sm:$0x3]
      %v638 = vlaneseq
      %v639 = vshrl.u32 %v638, 7
      %v640 = vsub.s32 0, %v639
      %v641 = vrot.slane %v636, %v640
      %v642 = vlaneseq
      %v643 = vshrl.u32 %v642, 7
      %v644 = vsub.s32 1, %v643
      %v645 = vrot.slane %v636, %v644
      %v712 = vunpack.c.l.b16 %v572
      %v713 = vunpack.c.l.b16 %v573
      %v714 = vunpack.c.l.b16 %v574
      %v715 = vunpack.c.l.b16 %v575
      %v716 = vunpack.c.l.b16 %v576
      %v717 = vunpack.c.l.b16 %v577
      %v718 = vunpack.c.l.b16 %v578
      %v719 = vunpack.c.l.b16 %v579
      %v720 = vunpack.c.l.b16 %v580
      %v721 = vunpack.c.l.b16 %v581
      %v722 = vunpack.c.l.b16 %v582
      %v723 = vunpack.c.l.b16 %v583
      %v724 = vunpack.c.l.b16 %v584
      %v725 = vunpack.c.l.b16 %v585
      %v726 = vunpack.c.l.b16 %v586
      %v727 = vunpack.c.l.b16 %v587
      %v728 = vunpack.c.l.b16 %v588
      %v729 = vunpack.c.l.b16 %v589
      %v730 = vunpack.c.l.b16 %v590
      %v731 = vunpack.c.l.b16 %v591
      %v732 = vunpack.c.l.b16 %v592
      %v733 = vunpack.c.l.b16 %v593
      %v734 = vunpack.c.l.b16 %v594
      %v735 = vunpack.c.l.b16 %v595
      %v736 = vunpack.c.l.b16 %v596
      %v737 = vunpack.c.l.b16 %v597
      %v738 = vunpack.c.l.b16 %v598
      %v739 = vunpack.c.l.b16 %v599
      %v740 = vunpack.c.l.b16 %v600
      %v741 = vunpack.c.l.b16 %v601
      %v742 = vunpack.c.l.b16 %v602
      %v743 = vunpack.c.l.b16 %v603
      %v744 = vunpack.c.l.b16 %v604
      %v745 = vunpack.c.l.b16 %v605
      %v746 = vunpack.c.l.b16 %v606
      %v747 = vunpack.c.l.b16 %v607
      %v748 = vunpack.c.l.b16 %v608
      %v749 = vunpack.c.l.b16 %v609
      %v750 = vunpack.c.l.b16 %v610
      %v751 = vunpack.c.l.b16 %v611
      %v752 = vunpack.c.l.b16 %v612
      %v753 = vunpack.c.l.b16 %v613
      %v754 = vunpack.c.l.b16 %v614
      %v755 = vunpack.c.l.b16 %v615
      %v756 = vunpack.c.l.b16 %v616
      %v757 = vunpack.c.l.b16 %v617
      %v758 = vunpack.c.l.b16 %v618
      %v759 = vunpack.c.l.b16 %v619
      %v760 = vunpack.c.l.b16 %v620
      %v761 = vunpack.c.l.b16 %v621
      %v762 = vunpack.c.l.b16 %v622
      %v763 = vunpack.c.l.b16 %v623
      %v764 = vunpack.c.l.b16 %v624
      %v765 = vunpack.c.l.b16 %v625
      %v766 = vunpack.c.l.b16 %v626
      %v767 = vunpack.c.l.b16 %v627
      %v768 = vunpack.c.l.b16 %v628
      %v769 = vunpack.c.l.b16 %v629
      %v770 = vunpack.c.l.b16 %v630
      %v771 = vunpack.c.l.b16 %v631
      %v772 = vunpack.c.l.b16 %v632
      %v773 = vunpack.c.l.b16 %v633
      %v774 = vunpack.c.l.b16 %v634
      %v775 = vunpack.c.l.b16 %v635
      %v776 = vpack.c.b16 %v713, %v712
      %v777 = vpack.c.b16 %v715, %v714
      %v778 = vpack.c.b16 %v717, %v716
      %v779 = vpack.c.b16 %v719, %v718
      %v780 = vpack.c.b16 %v721, %v720
      %v781 = vpack.c.b16 %v723, %v722
      %v782 = vpack.c.b16 %v725, %v724
      %v783 = vpack.c.b16 %v727, %v726
      %v784 = vpack.c.b16 %v729, %v728
      %v785 = vpack.c.b16 %v731, %v730
      %v786 = vpack.c.b16 %v733, %v732
      %v787 = vpack.c.b16 %v735, %v734
      %v788 = vpack.c.b16 %v737, %v736
      %v789 = vpack.c.b16 %v739, %v738
      %v790 = vpack.c.b16 %v741, %v740
      %v791 = vpack.c.b16 %v743, %v742
      %v792 = vpack.c.b16 %v745, %v744
      %v793 = vpack.c.b16 %v747, %v746
      %v794 = vpack.c.b16 %v749, %v748
      %v795 = vpack.c.b16 %v751, %v750
      %v796 = vpack.c.b16 %v753, %v752
      %v797 = vpack.c.b16 %v755, %v754
      %v798 = vpack.c.b16 %v757, %v756
      %v799 = vpack.c.b16 %v759, %v758
      %v800 = vpack.c.b16 %v761, %v760
      %v801 = vpack.c.b16 %v763, %v762
      %v802 = vpack.c.b16 %v765, %v764
      %v803 = vpack.c.b16 %v767, %v766
      %v804 = vpack.c.b16 %v769, %v768
      %v805 = vpack.c.b16 %v771, %v770
      %v806 = vpack.c.b16 %v773, %v772
      %v807 = vpack.c.b16 %v775, %v774
      %v856 = vunpack.c.l.b16 %v556
      %v857 = vunpack.c.h.b16 %v556
      %v858 = vunpack.c.l.b16 %v557
      %v859 = vunpack.c.h.b16 %v557
      %v860 = vunpack.c.l.b16 %v558
      %v861 = vunpack.c.h.b16 %v558
      %v862 = vunpack.c.l.b16 %v559
      %v863 = vunpack.c.h.b16 %v559
      %v864 = vunpack.c.l.b16 %v560
      %v865 = vunpack.c.h.b16 %v560
      %v866 = vunpack.c.l.b16 %v561
      %v867 = vunpack.c.h.b16 %v561
      %v868 = vunpack.c.l.b16 %v562
      %v869 = vunpack.c.h.b16 %v562
      %v870 = vunpack.c.l.b16 %v563
      %v871 = vunpack.c.h.b16 %v563
      %v872 = vunpack.c.l.b16 %v564
      %v873 = vunpack.c.h.b16 %v564
      %v874 = vunpack.c.l.b16 %v565
      %v875 = vunpack.c.h.b16 %v565
      %v876 = vunpack.c.l.b16 %v566
      %v877 = vunpack.c.h.b16 %v566
      %v878 = vunpack.c.l.b16 %v567
      %v879 = vunpack.c.h.b16 %v567
      %v880 = vunpack.c.l.b16 %v568
      %v881 = vunpack.c.h.b16 %v568
      %v882 = vunpack.c.l.b16 %v569
      %v883 = vunpack.c.h.b16 %v569
      %v884 = vunpack.c.l.b16 %v570
      %v885 = vunpack.c.h.b16 %v570
      %v886 = vunpack.c.l.b16 %v571
      %v887 = vunpack.c.h.b16 %v571
      %v888 = vpack.c.b16 %v858, %v856
      %v889 = vpack.c.b16 %v859, %v857
      %v890 = vpack.c.b16 %v862, %v860
      %v891 = vpack.c.b16 %v863, %v861
      %v892 = vpack.c.b16 %v866, %v864
      %v893 = vpack.c.b16 %v867, %v865
      %v894 = vpack.c.b16 %v870, %v868
      %v895 = vpack.c.b16 %v871, %v869
      %v896 = vpack.c.b16 %v874, %v872
      %v897 = vpack.c.b16 %v875, %v873
      %v898 = vpack.c.b16 %v878, %v876
      %v899 = vpack.c.b16 %v879, %v877
      %v900 = vpack.c.b16 %v882, %v880
      %v901 = vpack.c.b16 %v883, %v881
      %v902 = vpack.c.b16 %v886, %v884
      %v903 = vpack.c.b16 %v887, %v885
      %920 = vmatprep.subr.bf16.mxu0 %v903
      %921 = vmatpush1.bf16.msra.mxu0 %v902
      %922 = vmatprep.subr.bf16.mxu0 %v901
      %923 = vmatpush1.bf16.msra.mxu0 %v900
      %924 = vmatprep.subr.bf16.mxu0 %v899
      %925 = vmatpush1.bf16.msra.mxu0 %v898
      %926 = vmatprep.subr.bf16.mxu0 %v897
      %927 = vmatpush1.bf16.msra.mxu0 %v896
      %928 = vmatprep.subr.bf16.mxu0 %v895
      %929 = vmatpush1.bf16.msra.mxu0 %v894
      %930 = vmatprep.subr.bf16.mxu0 %v893
      %931 = vmatpush1.bf16.msra.mxu0 %v892
      %932 = vmatprep.subr.bf16.mxu0 %v891
      %933 = vmatpush1.bf16.msra.mxu0 %v890
      %934 = vmatprep.subr.bf16.mxu0 %v889
      %935 = vmatpush1.bf16.msra.mxu0 %v888
      %936 = vmatprep.subr.bf16.mxu0 0
      %937 = vmatpush2.bf16.msra.mxu0 0
      %938 = vmatprep.subr.bf16.mxu0 0
      %939 = vmatpush2.bf16.msra.mxu0 0
      %940 = vmatprep.subr.bf16.mxu0 0
      %941 = vmatpush2.bf16.msra.mxu0 0
      %942 = vmatprep.subr.bf16.mxu0 0
      %943 = vmatpush2.bf16.msra.mxu0 0
      %944 = vmatprep.subr.bf16.mxu0 0
      %945 = vmatpush2.bf16.msra.mxu0 0
      %946 = vmatprep.subr.bf16.mxu0 0
      %947 = vmatpush2.bf16.msra.mxu0 0
      %948 = vmatprep.subr.bf16.mxu0 0
      %949 = vmatpush2.bf16.msra.mxu0 0
      %950 = vmatprep.subr.bf16.mxu0 0
      %951 = vmatpush2.bf16.msra.mxu0 0
      %952 = vmatprep.mubr.bf16.mxu0 0
      %953 = vmatmul.mubr.bf16.gmra.mxu0 %v776
      %v954 = vpop.f32.mrf.mxu0
      %v955 = vadd.f32 %v641, %v954
      %v956 = vpop.f32.mrf.mxu0
      %v957 = vadd.f32 %v645, %v956
      %v958 = vpop.f32.mrf.mxu0
      %v959 = vadd.f32 %v641, %v958
      %v960 = vpop.f32.mrf.mxu0
      %v961 = vadd.f32 %v645, %v960
      %962 = vmatprep.mubr.bf16.mxu0 0
      %963 = vmatmul.mubr.bf16.gmra.mxu0 %v777
      %v964 = vpop.f32.mrf.mxu0
      %v965 = vadd.f32 %v641, %v964
      %v966 = vpop.f32.mrf.mxu0
      %v967 = vadd.f32 %v645, %v966
      %v968 = vpop.f32.mrf.mxu0
      %v969 = vadd.f32 %v641, %v968
      %v970 = vpop.f32.mrf.mxu0
      %v971 = vadd.f32 %v645, %v970
      %972 = vmatprep.mubr.bf16.mxu0 0
      %973 = vmatmul.mubr.bf16.gmra.mxu0 %v778
      %v974 = vpop.f32.mrf.mxu0
      %v975 = vadd.f32 %v641, %v974
      %v976 = vpop.f32.mrf.mxu0
      %v977 = vadd.f32 %v645, %v976
      %v978 = vpop.f32.mrf.mxu0
      %v979 = vadd.f32 %v641, %v978
      %v980 = vpop.f32.mrf.mxu0
      %v981 = vadd.f32 %v645, %v980
      %982 = vmatprep.mubr.bf16.mxu0 0
      %983 = vmatmul.mubr.bf16.gmra.mxu0 %v779
      %v984 = vpop.f32.mrf.mxu0
      %v985 = vadd.f32 %v641, %v984
      %v986 = vpop.f32.mrf.mxu0
      %v987 = vadd.f32 %v645, %v986
      %v988 = vpop.f32.mrf.mxu0
      %v989 = vadd.f32 %v641, %v988
      %v990 = vpop.f32.mrf.mxu0
      %v991 = vadd.f32 %v645, %v990
      %992 = vmatprep.mubr.bf16.mxu0 0
      %993 = vmatmul.mubr.bf16.gmra.mxu0 %v780
      %v994 = vpop.f32.mrf.mxu0
      %v995 = vadd.f32 %v641, %v994
      %v996 = vpop.f32.mrf.mxu0
      %v997 = vadd.f32 %v645, %v996
      %v998 = vpop.f32.mrf.mxu0
      %v999 = vadd.f32 %v641, %v998
      %v1000 = vpop.f32.mrf.mxu0
      %v1001 = vadd.f32 %v645, %v1000
      %1002 = vmatprep.mubr.bf16.mxu0 0
      %1003 = vmatmul.mubr.bf16.gmra.mxu0 %v781
      %v1004 = vpop.f32.mrf.mxu0
      %v1005 = vadd.f32 %v641, %v1004
      %v1006 = vpop.f32.mrf.mxu0
      %v1007 = vadd.f32 %v645, %v1006
      %v1008 = vpop.f32.mrf.mxu0
      %v1009 = vadd.f32 %v641, %v1008
      %v1010 = vpop.f32.mrf.mxu0
      %v1011 = vadd.f32 %v645, %v1010
      %1012 = vmatprep.mubr.bf16.mxu0 0
      %1013 = vmatmul.mubr.bf16.gmra.mxu0 %v782
      %v1014 = vpop.f32.mrf.mxu0
      %v1015 = vadd.f32 %v641, %v1014
      %v1016 = vpop.f32.mrf.mxu0
      %v1017 = vadd.f32 %v645, %v1016
      %v1018 = vpop.f32.mrf.mxu0
      %v1019 = vadd.f32 %v641, %v1018
      %v1020 = vpop.f32.mrf.mxu0
      %v1021 = vadd.f32 %v645, %v1020
      %1022 = vmatprep.mubr.bf16.mxu0 0
      %1023 = vmatmul.mubr.bf16.gmra.mxu0 %v783
      %v1024 = vpop.f32.mrf.mxu0
      %v1025 = vadd.f32 %v641, %v1024
      %v1026 = vpop.f32.mrf.mxu0
      %v1027 = vadd.f32 %v645, %v1026
      %v1028 = vpop.f32.mrf.mxu0
      %v1029 = vadd.f32 %v641, %v1028
      %v1030 = vpop.f32.mrf.mxu0
      %v1031 = vadd.f32 %v645, %v1030
      %1032 = vmatprep.mubr.bf16.mxu0 0
      %1033 = vmatmul.mubr.bf16.gmra.mxu0 %v784
      %v1034 = vpop.f32.mrf.mxu0
      %v1035 = vadd.f32 %v641, %v1034
      %v1036 = vpop.f32.mrf.mxu0
      %v1037 = vadd.f32 %v645, %v1036
      %v1038 = vpop.f32.mrf.mxu0
      %v1039 = vadd.f32 %v641, %v1038
      %v1040 = vpop.f32.mrf.mxu0
      %v1041 = vadd.f32 %v645, %v1040
      %1042 = vmatprep.mubr.bf16.mxu0 0
      %1043 = vmatmul.mubr.bf16.gmra.mxu0 %v785
      %v1044 = vpop.f32.mrf.mxu0
      %v1045 = vadd.f32 %v641, %v1044
      %v1046 = vpop.f32.mrf.mxu0
      %v1047 = vadd.f32 %v645, %v1046
      %v1048 = vpop.f32.mrf.mxu0
      %v1049 = vadd.f32 %v641, %v1048
      %v1050 = vpop.f32.mrf.mxu0
      %v1051 = vadd.f32 %v645, %v1050
      %1052 = vmatprep.mubr.bf16.mxu0 0
      %1053 = vmatmul.mubr.bf16.gmra.mxu0 %v786
      %v1054 = vpop.f32.mrf.mxu0
      %v1055 = vadd.f32 %v641, %v1054
      %v1056 = vpop.f32.mrf.mxu0
      %v1057 = vadd.f32 %v645, %v1056
      %v1058 = vpop.f32.mrf.mxu0
      %v1059 = vadd.f32 %v641, %v1058
      %v1060 = vpop.f32.mrf.mxu0
      %v1061 = vadd.f32 %v645, %v1060
      %1062 = vmatprep.mubr.bf16.mxu0 0
      %1063 = vmatmul.mubr.bf16.gmra.mxu0 %v787
      %v1064 = vpop.f32.mrf.mxu0
      %v1065 = vadd.f32 %v641, %v1064
      %v1066 = vpop.f32.mrf.mxu0
      %v1067 = vadd.f32 %v645, %v1066
      %v1068 = vpop.f32.mrf.mxu0
      %v1069 = vadd.f32 %v641, %v1068
      %v1070 = vpop.f32.mrf.mxu0
      %v1071 = vadd.f32 %v645, %v1070
      %1072 = vmatprep.mubr.bf16.mxu0 0
      %1073 = vmatmul.mubr.bf16.gmra.mxu0 %v788
      %v1074 = vpop.f32.mrf.mxu0
      %v1075 = vadd.f32 %v641, %v1074
      %v1076 = vpop.f32.mrf.mxu0
      %v1077 = vadd.f32 %v645, %v1076
      %v1078 = vpop.f32.mrf.mxu0
      %v1079 = vadd.f32 %v641, %v1078
      %v1080 = vpop.f32.mrf.mxu0
      %v1081 = vadd.f32 %v645, %v1080
      %1082 = vmatprep.mubr.bf16.mxu0 0
      %1083 = vmatmul.mubr.bf16.gmra.mxu0 %v789
      %v1084 = vpop.f32.mrf.mxu0
      %v1085 = vadd.f32 %v641, %v1084
      %v1086 = vpop.f32.mrf.mxu0
      %v1087 = vadd.f32 %v645, %v1086
      %v1088 = vpop.f32.mrf.mxu0
      %v1089 = vadd.f32 %v641, %v1088
      %v1090 = vpop.f32.mrf.mxu0
      %v1091 = vadd.f32 %v645, %v1090
      %1092 = vmatprep.mubr.bf16.mxu0 0
      %1093 = vmatmul.mubr.bf16.gmra.mxu0 %v790
      %v1094 = vpop.f32.mrf.mxu0
      %v1095 = vadd.f32 %v641, %v1094
      %v1096 = vpop.f32.mrf.mxu0
      %v1097 = vadd.f32 %v645, %v1096
      %v1098 = vpop.f32.mrf.mxu0
      %v1099 = vadd.f32 %v641, %v1098
      %v1100 = vpop.f32.mrf.mxu0
      %v1101 = vadd.f32 %v645, %v1100
      %1102 = vmatprep.mubr.bf16.mxu0 0
      %1103 = vmatmul.mubr.bf16.gmra.mxu0 %v791
      %v1104 = vpop.f32.mrf.mxu0
      %v1105 = vadd.f32 %v641, %v1104
      %v1106 = vpop.f32.mrf.mxu0
      %v1107 = vadd.f32 %v645, %v1106
      %v1108 = vpop.f32.mrf.mxu0
      %v1109 = vadd.f32 %v641, %v1108
      %v1110 = vpop.f32.mrf.mxu0
      %v1111 = vadd.f32 %v645, %v1110
      %1112 = vmatprep.mubr.bf16.mxu0 0
      %1113 = vmatmul.mubr.bf16.gmra.mxu0 %v792
      %v1114 = vpop.f32.mrf.mxu0
      %v1115 = vadd.f32 %v641, %v1114
      %v1116 = vpop.f32.mrf.mxu0
      %v1117 = vadd.f32 %v645, %v1116
      %v1118 = vpop.f32.mrf.mxu0
      %v1119 = vadd.f32 %v641, %v1118
      %v1120 = vpop.f32.mrf.mxu0
      %v1121 = vadd.f32 %v645, %v1120
      %1122 = vmatprep.mubr.bf16.mxu0 0
      %1123 = vmatmul.mubr.bf16.gmra.mxu0 %v793
      %v1124 = vpop.f32.mrf.mxu0
      %v1125 = vadd.f32 %v641, %v1124
      %v1126 = vpop.f32.mrf.mxu0
      %v1127 = vadd.f32 %v645, %v1126
      %v1128 = vpop.f32.mrf.mxu0
      %v1129 = vadd.f32 %v641, %v1128
      %v1130 = vpop.f32.mrf.mxu0
      %v1131 = vadd.f32 %v645, %v1130
      %1132 = vmatprep.mubr.bf16.mxu0 0
      %1133 = vmatmul.mubr.bf16.gmra.mxu0 %v794
      %v1134 = vpop.f32.mrf.mxu0
      %v1135 = vadd.f32 %v641, %v1134
      %v1136 = vpop.f32.mrf.mxu0
      %v1137 = vadd.f32 %v645, %v1136
      %v1138 = vpop.f32.mrf.mxu0
      %v1139 = vadd.f32 %v641, %v1138
      %v1140 = vpop.f32.mrf.mxu0
      %v1141 = vadd.f32 %v645, %v1140
      %1142 = vmatprep.mubr.bf16.mxu0 0
      %1143 = vmatmul.mubr.bf16.gmra.mxu0 %v795
      %v1144 = vpop.f32.mrf.mxu0
      %v1145 = vadd.f32 %v641, %v1144
      %v1146 = vpop.f32.mrf.mxu0
      %v1147 = vadd.f32 %v645, %v1146
      %v1148 = vpop.f32.mrf.mxu0
      %v1149 = vadd.f32 %v641, %v1148
      %v1150 = vpop.f32.mrf.mxu0
      %v1151 = vadd.f32 %v645, %v1150
      %1152 = vmatprep.mubr.bf16.mxu0 0
      %1153 = vmatmul.mubr.bf16.gmra.mxu0 %v796
      %v1154 = vpop.f32.mrf.mxu0
      %v1155 = vadd.f32 %v641, %v1154
      %v1156 = vpop.f32.mrf.mxu0
      %v1157 = vadd.f32 %v645, %v1156
      %v1158 = vpop.f32.mrf.mxu0
      %v1159 = vadd.f32 %v641, %v1158
      %v1160 = vpop.f32.mrf.mxu0
      %v1161 = vadd.f32 %v645, %v1160
      %1162 = vmatprep.mubr.bf16.mxu0 0
      %1163 = vmatmul.mubr.bf16.gmra.mxu0 %v797
      %v1164 = vpop.f32.mrf.mxu0
      %v1165 = vadd.f32 %v641, %v1164
      %v1166 = vpop.f32.mrf.mxu0
      %v1167 = vadd.f32 %v645, %v1166
      %v1168 = vpop.f32.mrf.mxu0
      %v1169 = vadd.f32 %v641, %v1168
      %v1170 = vpop.f32.mrf.mxu0
      %v1171 = vadd.f32 %v645, %v1170
      %1172 = vmatprep.mubr.bf16.mxu0 0
      %1173 = vmatmul.mubr.bf16.gmra.mxu0 %v798
      %v1174 = vpop.f32.mrf.mxu0
      %v1175 = vadd.f32 %v641, %v1174
      %v1176 = vpop.f32.mrf.mxu0
      %v1177 = vadd.f32 %v645, %v1176
      %v1178 = vpop.f32.mrf.mxu0
      %v1179 = vadd.f32 %v641, %v1178
      %v1180 = vpop.f32.mrf.mxu0
      %v1181 = vadd.f32 %v645, %v1180
      %1182 = vmatprep.mubr.bf16.mxu0 0
      %1183 = vmatmul.mubr.bf16.gmra.mxu0 %v799
      %v1184 = vpop.f32.mrf.mxu0
      %v1185 = vadd.f32 %v641, %v1184
      %v1186 = vpop.f32.mrf.mxu0
      %v1187 = vadd.f32 %v645, %v1186
      %v1188 = vpop.f32.mrf.mxu0
      %v1189 = vadd.f32 %v641, %v1188
      %v1190 = vpop.f32.mrf.mxu0
      %v1191 = vadd.f32 %v645, %v1190
      %1192 = vmatprep.mubr.bf16.mxu0 0
      %1193 = vmatmul.mubr.bf16.gmra.mxu0 %v800
      %v1194 = vpop.f32.mrf.mxu0
      %v1195 = vadd.f32 %v641, %v1194
      %v1196 = vpop.f32.mrf.mxu0
      %v1197 = vadd.f32 %v645, %v1196
      %v1198 = vpop.f32.mrf.mxu0
      %v1199 = vadd.f32 %v641, %v1198
      %v1200 = vpop.f32.mrf.mxu0
      %v1201 = vadd.f32 %v645, %v1200
      %1202 = vmatprep.mubr.bf16.mxu0 0
      %1203 = vmatmul.mubr.bf16.gmra.mxu0 %v801
      %v1204 = vpop.f32.mrf.mxu0
      %v1205 = vadd.f32 %v641, %v1204
      %v1206 = vpop.f32.mrf.mxu0
      %v1207 = vadd.f32 %v645, %v1206
      %v1208 = vpop.f32.mrf.mxu0
      %v1209 = vadd.f32 %v641, %v1208
      %v1210 = vpop.f32.mrf.mxu0
      %v1211 = vadd.f32 %v645, %v1210
      %1212 = vmatprep.mubr.bf16.mxu0 0
      %1213 = vmatmul.mubr.bf16.gmra.mxu0 %v802
      %v1214 = vpop.f32.mrf.mxu0
      %v1215 = vadd.f32 %v641, %v1214
      %v1216 = vpop.f32.mrf.mxu0
      %v1217 = vadd.f32 %v645, %v1216
      %v1218 = vpop.f32.mrf.mxu0
      %v1219 = vadd.f32 %v641, %v1218
      %v1220 = vpop.f32.mrf.mxu0
      %v1221 = vadd.f32 %v645, %v1220
      %1222 = vmatprep.mubr.bf16.mxu0 0
      %1223 = vmatmul.mubr.bf16.gmra.mxu0 %v803
      %v1224 = vpop.f32.mrf.mxu0
      %v1225 = vadd.f32 %v641, %v1224
      %v1226 = vpop.f32.mrf.mxu0
      %v1227 = vadd.f32 %v645, %v1226
      %v1228 = vpop.f32.mrf.mxu0
      %v1229 = vadd.f32 %v641, %v1228
      %v1230 = vpop.f32.mrf.mxu0
      %v1231 = vadd.f32 %v645, %v1230
      %1232 = vmatprep.mubr.bf16.mxu0 0
      %1233 = vmatmul.mubr.bf16.gmra.mxu0 %v804
      %v1234 = vpop.f32.mrf.mxu0
      %v1235 = vadd.f32 %v641, %v1234
      %v1236 = vpop.f32.mrf.mxu0
      %v1237 = vadd.f32 %v645, %v1236
      %v1238 = vpop.f32.mrf.mxu0
      %v1239 = vadd.f32 %v641, %v1238
      %v1240 = vpop.f32.mrf.mxu0
      %v1241 = vadd.f32 %v645, %v1240
      %1242 = vmatprep.mubr.bf16.mxu0 0
      %1243 = vmatmul.mubr.bf16.gmra.mxu0 %v805
      %v1244 = vpop.f32.mrf.mxu0
      %v1245 = vadd.f32 %v641, %v1244
      %v1246 = vpop.f32.mrf.mxu0
      %v1247 = vadd.f32 %v645, %v1246
      %v1248 = vpop.f32.mrf.mxu0
      %v1249 = vadd.f32 %v641, %v1248
      %v1250 = vpop.f32.mrf.mxu0
      %v1251 = vadd.f32 %v645, %v1250
      %1252 = vmatprep.mubr.bf16.mxu0 0
      %1253 = vmatmul.mubr.bf16.gmra.mxu0 %v806
      %v1254 = vpop.f32.mrf.mxu0
      %v1255 = vadd.f32 %v641, %v1254
      %v1256 = vpop.f32.mrf.mxu0
      %v1257 = vadd.f32 %v645, %v1256
      %v1258 = vpop.f32.mrf.mxu0
      %v1259 = vadd.f32 %v641, %v1258
      %v1260 = vpop.f32.mrf.mxu0
      %v1261 = vadd.f32 %v645, %v1260
      %1262 = vmatprep.mubr.bf16.mxu0 0
      %1263 = vmatmul.mubr.bf16.gmra.mxu0 %v807
      %v1264 = vpop.f32.mrf.mxu0
      %v1265 = vadd.f32 %v641, %v1264
      %v1266 = vpop.f32.mrf.mxu0
      %v1267 = vadd.f32 %v645, %v1266
      %v1268 = vpop.f32.mrf.mxu0
      %v1269 = vadd.f32 %v641, %v1268
      %v1270 = vpop.f32.mrf.mxu0
      %v1271 = vadd.f32 %v645, %v1270
      %1272 = vdwg.mxu0
      %v1273 = vld [vmem:[%s6] sm:$0x1]
      %p1274 = scmp.eq.s32.totalorder %s27, 0
      %s1275 = scalar_select %p1274, 0.0, 1.0
      %p1276 = scmp.eq.s32.totalorder %s27, 1
      %s1277 = scalar_select %p1276, 0.0, 1.0
      %v1278 = vld [vmem:[%s522] sm:$0xf]
      %v1279 = vld [vmem:[%s522 + $0x4] sm:$0xf]
      %v1280 = vld [vmem:[%s522 + $0x8] sm:$0xf]
      %v1281 = vld [vmem:[%s522 + $0xc] sm:$0xf]
      %v1283 = vlaneseq
      %v1284 = vshrl.u32 %v1283, 7
      %v1285 = vsub.s32 0, %v1284
      %v1286 = vrot.slane %v1273, %v1285
      %v1292 = vunpack.c.l.b16 %v1278
      %v1293 = vunpack.c.l.b16 %v1279
      %v1294 = vunpack.c.l.b16 %v1280
      %v1295 = vunpack.c.l.b16 %v1281
      %v1296 = vpack.c.b16 %v1293, %v1292
      %v1297 = vpack.c.b16 %v1295, %v1294
      %1300 = vmatprep.subr.bf16.mxu0 0
      %1301 = vmatpush1.bf16.msra.mxu0 %v902
      %1302 = vmatprep.subr.bf16.mxu0 0
      %1303 = vmatpush1.bf16.msra.mxu0 %v900
      %1304 = vmatprep.subr.bf16.mxu0 0
      %1305 = vmatpush1.bf16.msra.mxu0 %v898
      %1306 = vmatprep.subr.bf16.mxu0 0
      %1307 = vmatpush1.bf16.msra.mxu0 %v896
      %1308 = vmatprep.subr.bf16.mxu0 0
      %1309 = vmatpush1.bf16.msra.mxu0 %v894
      %1310 = vmatprep.subr.bf16.mxu0 0
      %1311 = vmatpush1.bf16.msra.mxu0 %v892
      %1312 = vmatprep.subr.bf16.mxu0 0
      %1313 = vmatpush1.bf16.msra.mxu0 %v890
      %1314 = vmatprep.subr.bf16.mxu0 0
      %1315 = vmatpush1.bf16.msra.mxu0 %v888
      %1316 = vmatprep.subr.bf16.mxu0 0
      %1317 = vmatpush2.bf16.msra.mxu0 0
      %1318 = vmatprep.subr.bf16.mxu0 0
      %1319 = vmatpush2.bf16.msra.mxu0 0
      %1320 = vmatprep.subr.bf16.mxu0 0
      %1321 = vmatpush2.bf16.msra.mxu0 0
      %1322 = vmatprep.subr.bf16.mxu0 0
      %1323 = vmatpush2.bf16.msra.mxu0 0
      %1324 = vmatprep.subr.bf16.mxu0 0
      %1325 = vmatpush2.bf16.msra.mxu0 0
      %1326 = vmatprep.subr.bf16.mxu0 0
      %1327 = vmatpush2.bf16.msra.mxu0 0
      %1328 = vmatprep.subr.bf16.mxu0 0
      %1329 = vmatpush2.bf16.msra.mxu0 0
      %1330 = vmatprep.subr.bf16.mxu0 0
      %1331 = vmatpush2.bf16.msra.mxu0 0
      %1332 = vmatprep.mubr.bf16.mxu0 0
      %1333 = vmatmul.mubr.bf16.gmra.mxu0 %v1296
      %v1334 = vpop.f32.mrf.mxu0
      %v1335 = vadd.f32 %v1286, %v1334
      %v1336 = vpop.f32.mrf.mxu0
      %v1337 = vpop.f32.mrf.mxu0
      %v1338 = vadd.f32 %v1286, %v1337
      %v1339 = vpop.f32.mrf.mxu0
      %1340 = vmatprep.mubr.bf16.mxu0 0
      %1341 = vmatmul.mubr.bf16.gmra.mxu0 %v1297
      %v1342 = vpop.f32.mrf.mxu0
      %v1343 = vadd.f32 %v1286, %v1342
      %v1344 = vpop.f32.mrf.mxu0
      %v1345 = vpop.f32.mrf.mxu0
      %v1346 = vadd.f32 %v1286, %v1345
      %v1347 = vpop.f32.mrf.mxu0
      %1348 = vdwg.mxu0
      %v1349 = vstv %s1275
      %v1350 = vmul.f32 %v1335, %v1349
      %v1351 = vmul.f32 %v1338, %v1349
      %v1352 = vmul.f32 %v1343, %v1349
      %v1353 = vmul.f32 %v1346, %v1349
      %v1354 = vld [vmem:[%s539] sm:$0xf]
      %v1355 = vld [vmem:[%s539 + $0x4] sm:$0xf]
      %v1356 = vld [vmem:[%s539 + $0x8] sm:$0xf]
      %v1357 = vld [vmem:[%s539 + $0xc] sm:$0xf]
      %v1362 = vunpack.c.l.b16 %v1354
      %v1363 = vunpack.c.l.b16 %v1355
      %v1364 = vunpack.c.l.b16 %v1356
      %v1365 = vunpack.c.l.b16 %v1357
      %v1366 = vpack.c.b16 %v1363, %v1362
      %v1367 = vpack.c.b16 %v1365, %v1364
      %1370 = vmatprep.subr.bf16.mxu0 0
      %1371 = vmatpush1.bf16.msra.mxu0 %v902
      %1372 = vmatprep.subr.bf16.mxu0 0
      %1373 = vmatpush1.bf16.msra.mxu0 %v900
      %1374 = vmatprep.subr.bf16.mxu0 0
      %1375 = vmatpush1.bf16.msra.mxu0 %v898
      %1376 = vmatprep.subr.bf16.mxu0 0
      %1377 = vmatpush1.bf16.msra.mxu0 %v896
      %1378 = vmatprep.subr.bf16.mxu0 0
      %1379 = vmatpush1.bf16.msra.mxu0 %v894
      %1380 = vmatprep.subr.bf16.mxu0 0
      %1381 = vmatpush1.bf16.msra.mxu0 %v892
      %1382 = vmatprep.subr.bf16.mxu0 0
      %1383 = vmatpush1.bf16.msra.mxu0 %v890
      %1384 = vmatprep.subr.bf16.mxu0 0
      %1385 = vmatpush1.bf16.msra.mxu0 %v888
      %1386 = vmatprep.subr.bf16.mxu0 0
      %1387 = vmatpush2.bf16.msra.mxu0 0
      %1388 = vmatprep.subr.bf16.mxu0 0
      %1389 = vmatpush2.bf16.msra.mxu0 0
      %1390 = vmatprep.subr.bf16.mxu0 0
      %1391 = vmatpush2.bf16.msra.mxu0 0
      %1392 = vmatprep.subr.bf16.mxu0 0
      %1393 = vmatpush2.bf16.msra.mxu0 0
      %1394 = vmatprep.subr.bf16.mxu0 0
      %1395 = vmatpush2.bf16.msra.mxu0 0
      %1396 = vmatprep.subr.bf16.mxu0 0
      %1397 = vmatpush2.bf16.msra.mxu0 0
      %1398 = vmatprep.subr.bf16.mxu0 0
      %1399 = vmatpush2.bf16.msra.mxu0 0
      %1400 = vmatprep.subr.bf16.mxu0 0
      %1401 = vmatpush2.bf16.msra.mxu0 0
      %1402 = vmatprep.mubr.bf16.mxu0 0
      %1403 = vmatmul.mubr.bf16.gmra.mxu0 %v1366
      %v1404 = vpop.f32.mrf.mxu0
      %v1405 = vadd.f32 %v1286, %v1404
      %v1406 = vpop.f32.mrf.mxu0
      %v1407 = vpop.f32.mrf.mxu0
      %v1408 = vadd.f32 %v1286, %v1407
      %v1409 = vpop.f32.mrf.mxu0
      %1410 = vmatprep.mubr.bf16.mxu0 0
      %1411 = vmatmul.mubr.bf16.gmra.mxu0 %v1367
      %v1412 = vpop.f32.mrf.mxu0
      %v1413 = vadd.f32 %v1286, %v1412
      %v1414 = vpop.f32.mrf.mxu0
      %v1415 = vpop.f32.mrf.mxu0
      %v1416 = vadd.f32 %v1286, %v1415
      %v1417 = vpop.f32.mrf.mxu0
      %1418 = vdwg.mxu0
      %v1419 = vstv %s1277
      %v1420 = vmul.f32 %v1405, %v1419
      %v1421 = vmul.f32 %v1408, %v1419
      %v1422 = vmul.f32 %v1413, %v1419
      %v1423 = vmul.f32 %v1416, %v1419
      %v1424 = vrot.slane %v1350, 7
      %v1425 = vrot.slane %v1351, 7
      %v1426 = vrot.slane %v1352, 7
      %v1427 = vrot.slane %v1353, 7
      %v1428 = vrot.slane %v955, 7
      %v1429 = vrot.slane %v959, 7
      %v1430 = vrot.slane %v965, 7
      %v1431 = vrot.slane %v969, 7
      %v1432 = vrot.slane %v975, 7
      %v1433 = vrot.slane %v979, 7
      %v1434 = vrot.slane %v985, 7
      %v1435 = vrot.slane %v989, 7
      %v1436 = vrot.slane %v995, 7
      %v1437 = vrot.slane %v999, 7
      %v1438 = vrot.slane %v1005, 7
      %v1439 = vrot.slane %v1009, 7
      %v1440 = vrot.slane %v1015, 7
      %v1441 = vrot.slane %v1019, 7
      %v1442 = vrot.slane %v1025, 7
      %v1443 = vrot.slane %v1029, 7
      %v1444 = vrot.slane %v1035, 7
      %v1445 = vrot.slane %v1039, 7
      %v1446 = vrot.slane %v1045, 7
      %v1447 = vrot.slane %v1049, 7
      %v1448 = vrot.slane %v1055, 7
      %v1449 = vrot.slane %v1059, 7
      %v1450 = vrot.slane %v1065, 7
      %v1451 = vrot.slane %v1069, 7
      %v1452 = vrot.slane %v1075, 7
      %v1453 = vrot.slane %v1079, 7
      %v1454 = vrot.slane %v1085, 7
      %v1455 = vrot.slane %v1089, 7
      %v1456 = vrot.slane %v1095, 7
      %v1457 = vrot.slane %v1099, 7
      %v1458 = vrot.slane %v1105, 7
      %v1459 = vrot.slane %v1109, 7
      %v1460 = vrot.slane %v1115, 7
      %v1461 = vrot.slane %v1119, 7
      %v1462 = vrot.slane %v1125, 7
      %v1463 = vrot.slane %v1129, 7
      %v1464 = vrot.slane %v1135, 7
      %v1465 = vrot.slane %v1139, 7
      %v1466 = vrot.slane %v1145, 7
      %v1467 = vrot.slane %v1149, 7
      %v1468 = vrot.slane %v1155, 7
      %v1469 = vrot.slane %v1159, 7
      %v1470 = vrot.slane %v1165, 7
      %v1471 = vrot.slane %v1169, 7
      %v1472 = vrot.slane %v1175, 7
      %v1473 = vrot.slane %v1179, 7
      %v1474 = vrot.slane %v1185, 7
      %v1475 = vrot.slane %v1189, 7
      %v1476 = vrot.slane %v1195, 7
      %v1477 = vrot.slane %v1199, 7
      %v1478 = vrot.slane %v1205, 7
      %v1479 = vrot.slane %v1209, 7
      %v1480 = vrot.slane %v1215, 7
      %v1481 = vrot.slane %v1219, 7
      %v1482 = vrot.slane %v1225, 7
      %v1483 = vrot.slane %v1229, 7
      %v1484 = vrot.slane %v1235, 7
      %v1485 = vrot.slane %v1239, 7
      %v1486 = vrot.slane %v1245, 7
      %v1487 = vrot.slane %v1249, 7
      %v1488 = vrot.slane %v1255, 7
      %v1489 = vrot.slane %v1259, 7
      %v1490 = vrot.slane %v1265, 7
      %v1491 = vrot.slane %v1269, 7
      %v1492 = vrot.slane %v1420, 7
      %v1493 = vrot.slane %v1421, 7
      %v1494 = vrot.slane %v1422, 7
      %v1495 = vrot.slane %v1423, 7
      %v1496 = vlaneseq
      %v1497 = vshrl.u32 %v1496, 7
      %vm1498 = vcmp.lt.s32.totalorder %v1497, 1
      %v1499 = vsel %vm1498, %v1494, %v1495
      %v1500 = vsel %vm1498, %v1493, %v1494
      %v1501 = vsel %vm1498, %v1492, %v1493
      %v1502 = vsel %vm1498, %v1491, %v1492
      %v1503 = vsel %vm1498, %v1490, %v1491
      %v1504 = vsel %vm1498, %v1489, %v1490
      %v1505 = vsel %vm1498, %v1488, %v1489
      %v1506 = vsel %vm1498, %v1487, %v1488
      %v1507 = vsel %vm1498, %v1486, %v1487
      %v1508 = vsel %vm1498, %v1485, %v1486
      %v1509 = vsel %vm1498, %v1484, %v1485
      %v1510 = vsel %vm1498, %v1483, %v1484
      %v1511 = vsel %vm1498, %v1482, %v1483
      %v1512 = vsel %vm1498, %v1481, %v1482
      %v1513 = vsel %vm1498, %v1480, %v1481
      %v1514 = vsel %vm1498, %v1479, %v1480
      %v1515 = vsel %vm1498, %v1478, %v1479
      %v1516 = vsel %vm1498, %v1477, %v1478
      %v1517 = vsel %vm1498, %v1476, %v1477
      %v1518 = vsel %vm1498, %v1475, %v1476
      %v1519 = vsel %vm1498, %v1474, %v1475
      %v1520 = vsel %vm1498, %v1473, %v1474
      %v1521 = vsel %vm1498, %v1472, %v1473
      %v1522 = vsel %vm1498, %v1471, %v1472
      %v1523 = vsel %vm1498, %v1470, %v1471
      %v1524 = vsel %vm1498, %v1469, %v1470
      %v1525 = vsel %vm1498, %v1468, %v1469
      %v1526 = vsel %vm1498, %v1467, %v1468
      %v1527 = vsel %vm1498, %v1466, %v1467
      %v1528 = vsel %vm1498, %v1465, %v1466
      %v1529 = vsel %vm1498, %v1464, %v1465
      %v1530 = vsel %vm1498, %v1463, %v1464
      %v1531 = vsel %vm1498, %v1462, %v1463
      %v1532 = vsel %vm1498, %v1461, %v1462
      %v1533 = vsel %vm1498, %v1460, %v1461
      %v1534 = vsel %vm1498, %v1459, %v1460
      %v1535 = vsel %vm1498, %v1458, %v1459
      %v1536 = vsel %vm1498, %v1457, %v1458
      %v1537 = vsel %vm1498, %v1456, %v1457
      %v1538 = vsel %vm1498, %v1455, %v1456
      %v1539 = vsel %vm1498, %v1454, %v1455
      %v1540 = vsel %vm1498, %v1453, %v1454
      %v1541 = vsel %vm1498, %v1452, %v1453
      %v1542 = vsel %vm1498, %v1451, %v1452
      %v1543 = vsel %vm1498, %v1450, %v1451
      %v1544 = vsel %vm1498, %v1449, %v1450
      %v1545 = vsel %vm1498, %v1448, %v1449
      %v1546 = vsel %vm1498, %v1447, %v1448
      %v1547 = vsel %vm1498, %v1446, %v1447
      %v1548 = vsel %vm1498, %v1445, %v1446
      %v1549 = vsel %vm1498, %v1444, %v1445
      %v1550 = vsel %vm1498, %v1443, %v1444
      %v1551 = vsel %vm1498, %v1442, %v1443
      %v1552 = vsel %vm1498, %v1441, %v1442
      %v1553 = vsel %vm1498, %v1440, %v1441
      %v1554 = vsel %vm1498, %v1439, %v1440
      %v1555 = vsel %vm1498, %v1438, %v1439
      %v1556 = vsel %vm1498, %v1437, %v1438
      %v1557 = vsel %vm1498, %v1436, %v1437
      %v1558 = vsel %vm1498, %v1435, %v1436
      %v1559 = vsel %vm1498, %v1434, %v1435
      %v1560 = vsel %vm1498, %v1433, %v1434
      %v1561 = vsel %vm1498, %v1432, %v1433
      %v1562 = vsel %vm1498, %v1431, %v1432
      %v1563 = vsel %vm1498, %v1430, %v1431
      %v1564 = vsel %vm1498, %v1429, %v1430
      %v1565 = vsel %vm1498, %v1428, %v1429
      %v1566 = vsel %vm1498, %v1427, %v1428
      %v1567 = vsel %vm1498, %v1426, %v1427
      %v1568 = vsel %vm1498, %v1425, %v1426
      %v1569 = vsel %vm1498, %v1424, %v1425
      %v1570 = vsel %vm1498, %v1495, %v1424
      %v1571 = vld [vmem:[%s3] sm:$0xff]
      %v1572 = vld [vmem:[%s3 + $0x8] sm:$0xff]
      %v1573 = vld [vmem:[%s3 + $0x10] sm:$0xff]
      %v1574 = vld [vmem:[%s3 + $0x18] sm:$0xff]
      %v1575 = vld [vmem:[%s3 + $0x20] sm:$0xff]
      %v1576 = vld [vmem:[%s3 + $0x28] sm:$0xff]
      %v1577 = vld [vmem:[%s3 + $0x30] sm:$0xff]
      %v1578 = vld [vmem:[%s3 + $0x38] sm:$0xff]
      %v1579 = vld [vmem:[%s3 + $0x40] sm:$0xff]
      %v1580 = vld [vmem:[%s3 + $0x48] sm:$0xff]
      %v1581 = vld [vmem:[%s3 + $0x50] sm:$0xff]
      %v1582 = vld [vmem:[%s3 + $0x58] sm:$0xff]
      %v1583 = vld [vmem:[%s3 + $0x60] sm:$0xff]
      %v1584 = vld [vmem:[%s3 + $0x68] sm:$0xff]
      %v1585 = vld [vmem:[%s3 + $0x70] sm:$0xff]
      %v1586 = vld [vmem:[%s3 + $0x78] sm:$0xff]
      %v1587 = vld [vmem:[%s3 + $0x80] sm:$0xff]
      %v1588 = vld [vmem:[%s3 + $0x88] sm:$0xff]
      %v1589 = vld [vmem:[%s3 + $0x90] sm:$0xff]
      %v1590 = vld [vmem:[%s3 + $0x98] sm:$0xff]
      %v1591 = vld [vmem:[%s3 + $0xa0] sm:$0xff]
      %v1592 = vld [vmem:[%s3 + $0xa8] sm:$0xff]
      %v1593 = vld [vmem:[%s3 + $0xb0] sm:$0xff]
      %v1594 = vld [vmem:[%s3 + $0xb8] sm:$0xff]
      %v1595 = vld [vmem:[%s3 + $0xc0] sm:$0xff]
      %v1596 = vld [vmem:[%s3 + $0xc8] sm:$0xff]
      %v1597 = vld [vmem:[%s3 + $0xd0] sm:$0xff]
      %v1598 = vld [vmem:[%s3 + $0xd8] sm:$0xff]
      %v1599 = vld [vmem:[%s3 + $0xe0] sm:$0xff]
      %v1600 = vld [vmem:[%s3 + $0xe8] sm:$0xff]
      %v1601 = vld [vmem:[%s3 + $0xf0] sm:$0xff]
      %v1602 = vld [vmem:[%s3 + $0xf8] sm:$0xff]
      %v1603 = vld [vmem:[%s3 + $0x100] sm:$0xff]
      %v1604 = vld [vmem:[%s3 + $0x108] sm:$0xff]
      %v1605 = vld [vmem:[%s3 + $0x110] sm:$0xff]
      %v1606 = vld [vmem:[%s3 + $0x118] sm:$0xff]
      %v1607 = vld [vmem:[%s3 + $0x120] sm:$0xff]
      %v1608 = vld [vmem:[%s3 + $0x128] sm:$0xff]
      %v1609 = vld [vmem:[%s3 + $0x130] sm:$0xff]
      %v1610 = vld [vmem:[%s3 + $0x138] sm:$0xff]
      %v1611 = vld [vmem:[%s3 + $0x140] sm:$0xff]
      %v1612 = vld [vmem:[%s3 + $0x148] sm:$0xff]
      %v1613 = vld [vmem:[%s3 + $0x150] sm:$0xff]
      %v1614 = vld [vmem:[%s3 + $0x158] sm:$0xff]
      %v1615 = vld [vmem:[%s3 + $0x160] sm:$0xff]
      %v1616 = vld [vmem:[%s3 + $0x168] sm:$0xff]
      %v1617 = vld [vmem:[%s3 + $0x170] sm:$0xff]
      %v1618 = vld [vmem:[%s3 + $0x178] sm:$0xff]
      %v1619 = vld [vmem:[%s3 + $0x180] sm:$0xff]
      %v1620 = vld [vmem:[%s3 + $0x188] sm:$0xff]
      %v1621 = vld [vmem:[%s3 + $0x190] sm:$0xff]
      %v1622 = vld [vmem:[%s3 + $0x198] sm:$0xff]
      %v1623 = vld [vmem:[%s3 + $0x1a0] sm:$0xff]
      %v1624 = vld [vmem:[%s3 + $0x1a8] sm:$0xff]
      %v1625 = vld [vmem:[%s3 + $0x1b0] sm:$0xff]
      %v1626 = vld [vmem:[%s3 + $0x1b8] sm:$0xff]
      %v1627 = vld [vmem:[%s3 + $0x1c0] sm:$0xff]
      %v1628 = vld [vmem:[%s3 + $0x1c8] sm:$0xff]
      %v1629 = vld [vmem:[%s3 + $0x1d0] sm:$0xff]
      %v1630 = vld [vmem:[%s3 + $0x1d8] sm:$0xff]
      %v1631 = vld [vmem:[%s3 + $0x1e0] sm:$0xff]
      %v1632 = vld [vmem:[%s3 + $0x1e8] sm:$0xff]
      %v1633 = vld [vmem:[%s3 + $0x1f0] sm:$0xff]
      %v1634 = vld [vmem:[%s3 + $0x1f8] sm:$0xff]
      %v1635 = vld [vmem:[%s3 + $0x200] sm:$0xff]
      %v1636 = vld [vmem:[%s3 + $0x208] sm:$0xff]
      %v1637 = vld [vmem:[%s3 + $0x210] sm:$0xff]
      %v1638 = vld [vmem:[%s3 + $0x218] sm:$0xff]
      %v1639 = vld [vmem:[%s3 + $0x220] sm:$0xff]
      %v1640 = vld [vmem:[%s3 + $0x228] sm:$0xff]
      %v1641 = vld [vmem:[%s3 + $0x230] sm:$0xff]
      %v1642 = vld [vmem:[%s3 + $0x238] sm:$0xff]
      %1644 = vset.pattern.permute.xlu0 0
      %1645 = vperm.xlu0 %1644, %v1571
      %v1646 = vpop.permute.xlu0 %1645
      %1649 = vset.pattern.permute.xlu0 0
      %1650 = vperm.xlu0 %1649, %v1572
      %v1651 = vpop.permute.xlu0 %1650
      %1654 = vset.pattern.permute.xlu0 0
      %1655 = vperm.xlu0 %1654, %v1573
      %v1656 = vpop.permute.xlu0 %1655
      %1659 = vset.pattern.permute.xlu0 0
      %1660 = vperm.xlu0 %1659, %v1574
      %v1661 = vpop.permute.xlu0 %1660
      %1664 = vset.pattern.permute.xlu0 0
      %1665 = vperm.xlu0 %1664, %v1575
      %v1666 = vpop.permute.xlu0 %1665
      %1669 = vset.pattern.permute.xlu0 0
      %1670 = vperm.xlu0 %1669, %v1576
      %v1671 = vpop.permute.xlu0 %1670
      %1674 = vset.pattern.permute.xlu0 0
      %1675 = vperm.xlu0 %1674, %v1577
      %v1676 = vpop.permute.xlu0 %1675
      %1679 = vset.pattern.permute.xlu0 0
      %1680 = vperm.xlu0 %1679, %v1578
      %v1681 = vpop.permute.xlu0 %1680
      %1684 = vset.pattern.permute.xlu0 0
      %1685 = vperm.xlu0 %1684, %v1579
      %v1686 = vpop.permute.xlu0 %1685
      %1689 = vset.pattern.permute.xlu0 0
      %1690 = vperm.xlu0 %1689, %v1580
      %v1691 = vpop.permute.xlu0 %1690
      %1694 = vset.pattern.permute.xlu0 0
      %1695 = vperm.xlu0 %1694, %v1581
      %v1696 = vpop.permute.xlu0 %1695
      %1699 = vset.pattern.permute.xlu0 0
      %1700 = vperm.xlu0 %1699, %v1582
      %v1701 = vpop.permute.xlu0 %1700
      %1704 = vset.pattern.permute.xlu0 0
      %1705 = vperm.xlu0 %1704, %v1583
      %v1706 = vpop.permute.xlu0 %1705
      %1709 = vset.pattern.permute.xlu0 0
      %1710 = vperm.xlu0 %1709, %v1584
      %v1711 = vpop.permute.xlu0 %1710
      %1714 = vset.pattern.permute.xlu0 0
      %1715 = vperm.xlu0 %1714, %v1585
      %v1716 = vpop.permute.xlu0 %1715
      %1719 = vset.pattern.permute.xlu0 0
      %1720 = vperm.xlu0 %1719, %v1586
      %v1721 = vpop.permute.xlu0 %1720
      %1724 = vset.pattern.permute.xlu0 0
      %1725 = vperm.xlu0 %1724, %v1587
      %v1726 = vpop.permute.xlu0 %1725
      %1729 = vset.pattern.permute.xlu0 0
      %1730 = vperm.xlu0 %1729, %v1588
      %v1731 = vpop.permute.xlu0 %1730
      %1734 = vset.pattern.permute.xlu0 0
      %1735 = vperm.xlu0 %1734, %v1589
      %v1736 = vpop.permute.xlu0 %1735
      %1739 = vset.pattern.permute.xlu0 0
      %1740 = vperm.xlu0 %1739, %v1590
      %v1741 = vpop.permute.xlu0 %1740
      %1744 = vset.pattern.permute.xlu0 0
      %1745 = vperm.xlu0 %1744, %v1591
      %v1746 = vpop.permute.xlu0 %1745
      %1749 = vset.pattern.permute.xlu0 0
      %1750 = vperm.xlu0 %1749, %v1592
      %v1751 = vpop.permute.xlu0 %1750
      %1754 = vset.pattern.permute.xlu0 0
      %1755 = vperm.xlu0 %1754, %v1593
      %v1756 = vpop.permute.xlu0 %1755
      %1759 = vset.pattern.permute.xlu0 0
      %1760 = vperm.xlu0 %1759, %v1594
      %v1761 = vpop.permute.xlu0 %1760
      %1764 = vset.pattern.permute.xlu0 0
      %1765 = vperm.xlu0 %1764, %v1595
      %v1766 = vpop.permute.xlu0 %1765
      %1769 = vset.pattern.permute.xlu0 0
      %1770 = vperm.xlu0 %1769, %v1596
      %v1771 = vpop.permute.xlu0 %1770
      %1774 = vset.pattern.permute.xlu0 0
      %1775 = vperm.xlu0 %1774, %v1597
      %v1776 = vpop.permute.xlu0 %1775
      %1779 = vset.pattern.permute.xlu0 0
      %1780 = vperm.xlu0 %1779, %v1598
      %v1781 = vpop.permute.xlu0 %1780
      %1784 = vset.pattern.permute.xlu0 0
      %1785 = vperm.xlu0 %1784, %v1599
      %v1786 = vpop.permute.xlu0 %1785
      %1789 = vset.pattern.permute.xlu0 0
      %1790 = vperm.xlu0 %1789, %v1600
      %v1791 = vpop.permute.xlu0 %1790
      %1794 = vset.pattern.permute.xlu0 0
      %1795 = vperm.xlu0 %1794, %v1601
      %v1796 = vpop.permute.xlu0 %1795
      %1799 = vset.pattern.permute.xlu0 0
      %1800 = vperm.xlu0 %1799, %v1602
      %v1801 = vpop.permute.xlu0 %1800
      %1804 = vset.pattern.permute.xlu0 0
      %1805 = vperm.xlu0 %1804, %v1603
      %v1806 = vpop.permute.xlu0 %1805
      %1809 = vset.pattern.permute.xlu0 0
      %1810 = vperm.xlu0 %1809, %v1604
      %v1811 = vpop.permute.xlu0 %1810
      %1814 = vset.pattern.permute.xlu0 0
      %1815 = vperm.xlu0 %1814, %v1605
      %v1816 = vpop.permute.xlu0 %1815
      %1819 = vset.pattern.permute.xlu0 0
      %1820 = vperm.xlu0 %1819, %v1606
      %v1821 = vpop.permute.xlu0 %1820
      %1824 = vset.pattern.permute.xlu0 0
      %1825 = vperm.xlu0 %1824, %v1607
      %v1826 = vpop.permute.xlu0 %1825
      %1829 = vset.pattern.permute.xlu0 0
      %1830 = vperm.xlu0 %1829, %v1608
      %v1831 = vpop.permute.xlu0 %1830
      %1834 = vset.pattern.permute.xlu0 0
      %1835 = vperm.xlu0 %1834, %v1609
      %v1836 = vpop.permute.xlu0 %1835
      %1839 = vset.pattern.permute.xlu0 0
      %1840 = vperm.xlu0 %1839, %v1610
      %v1841 = vpop.permute.xlu0 %1840
      %1844 = vset.pattern.permute.xlu0 0
      %1845 = vperm.xlu0 %1844, %v1611
      %v1846 = vpop.permute.xlu0 %1845
      %1849 = vset.pattern.permute.xlu0 0
      %1850 = vperm.xlu0 %1849, %v1612
      %v1851 = vpop.permute.xlu0 %1850
      %1854 = vset.pattern.permute.xlu0 0
      %1855 = vperm.xlu0 %1854, %v1613
      %v1856 = vpop.permute.xlu0 %1855
      %1859 = vset.pattern.permute.xlu0 0
      %1860 = vperm.xlu0 %1859, %v1614
      %v1861 = vpop.permute.xlu0 %1860
      %1864 = vset.pattern.permute.xlu0 0
      %1865 = vperm.xlu0 %1864, %v1615
      %v1866 = vpop.permute.xlu0 %1865
      %1869 = vset.pattern.permute.xlu0 0
      %1870 = vperm.xlu0 %1869, %v1616
      %v1871 = vpop.permute.xlu0 %1870
      %1874 = vset.pattern.permute.xlu0 0
      %1875 = vperm.xlu0 %1874, %v1617
      %v1876 = vpop.permute.xlu0 %1875
      %1879 = vset.pattern.permute.xlu0 0
      %1880 = vperm.xlu0 %1879, %v1618
      %v1881 = vpop.permute.xlu0 %1880
      %1884 = vset.pattern.permute.xlu0 0
      %1885 = vperm.xlu0 %1884, %v1619
      %v1886 = vpop.permute.xlu0 %1885
      %1889 = vset.pattern.permute.xlu0 0
      %1890 = vperm.xlu0 %1889, %v1620
      %v1891 = vpop.permute.xlu0 %1890
      %1894 = vset.pattern.permute.xlu0 0
      %1895 = vperm.xlu0 %1894, %v1621
      %v1896 = vpop.permute.xlu0 %1895
      %1899 = vset.pattern.permute.xlu0 0
      %1900 = vperm.xlu0 %1899, %v1622
      %v1901 = vpop.permute.xlu0 %1900
      %1904 = vset.pattern.permute.xlu0 0
      %1905 = vperm.xlu0 %1904, %v1623
      %v1906 = vpop.permute.xlu0 %1905
      %1909 = vset.pattern.permute.xlu0 0
      %1910 = vperm.xlu0 %1909, %v1624
      %v1911 = vpop.permute.xlu0 %1910
      %1914 = vset.pattern.permute.xlu0 0
      %1915 = vperm.xlu0 %1914, %v1625
      %v1916 = vpop.permute.xlu0 %1915
      %1919 = vset.pattern.permute.xlu0 0
      %1920 = vperm.xlu0 %1919, %v1626
      %v1921 = vpop.permute.xlu0 %1920
      %1924 = vset.pattern.permute.xlu0 0
      %1925 = vperm.xlu0 %1924, %v1627
      %v1926 = vpop.permute.xlu0 %1925
      %1929 = vset.pattern.permute.xlu0 0
      %1930 = vperm.xlu0 %1929, %v1628
      %v1931 = vpop.permute.xlu0 %1930
      %1934 = vset.pattern.permute.xlu0 0
      %1935 = vperm.xlu0 %1934, %v1629
      %v1936 = vpop.permute.xlu0 %1935
      %1939 = vset.pattern.permute.xlu0 0
      %1940 = vperm.xlu0 %1939, %v1630
      %v1941 = vpop.permute.xlu0 %1940
      %1944 = vset.pattern.permute.xlu0 0
      %1945 = vperm.xlu0 %1944, %v1631
      %v1946 = vpop.permute.xlu0 %1945
      %1949 = vset.pattern.permute.xlu0 0
      %1950 = vperm.xlu0 %1949, %v1632
      %v1951 = vpop.permute.xlu0 %1950
      %1954 = vset.pattern.permute.xlu0 0
      %1955 = vperm.xlu0 %1954, %v1633
      %v1956 = vpop.permute.xlu0 %1955
      %1959 = vset.pattern.permute.xlu0 0
      %1960 = vperm.xlu0 %1959, %v1634
      %v1961 = vpop.permute.xlu0 %1960
      %1964 = vset.pattern.permute.xlu0 0
      %1965 = vperm.xlu0 %1964, %v1635
      %v1966 = vpop.permute.xlu0 %1965
      %1969 = vset.pattern.permute.xlu0 0
      %1970 = vperm.xlu0 %1969, %v1636
      %v1971 = vpop.permute.xlu0 %1970
      %1974 = vset.pattern.permute.xlu0 0
      %1975 = vperm.xlu0 %1974, %v1637
      %v1976 = vpop.permute.xlu0 %1975
      %1979 = vset.pattern.permute.xlu0 0
      %1980 = vperm.xlu0 %1979, %v1638
      %v1981 = vpop.permute.xlu0 %1980
      %1984 = vset.pattern.permute.xlu0 0
      %1985 = vperm.xlu0 %1984, %v1639
      %v1986 = vpop.permute.xlu0 %1985
      %1989 = vset.pattern.permute.xlu0 0
      %1990 = vperm.xlu0 %1989, %v1640
      %v1991 = vpop.permute.xlu0 %1990
      %1994 = vset.pattern.permute.xlu0 0
      %1995 = vperm.xlu0 %1994, %v1641
      %v1996 = vpop.permute.xlu0 %1995
      %1999 = vset.pattern.permute.xlu0 0
      %2000 = vperm.xlu0 %1999, %v1642
      %v2001 = vpop.permute.xlu0 %2000
      %v2003 = vmul.f32 %v1570, %v1646
      %v2004 = vmul.f32 %v1569, %v1651
      %v2005 = vmul.f32 %v1568, %v1656
      %v2006 = vmul.f32 %v1567, %v1661
      %v2007 = vmul.f32 %v1566, %v1666
      %v2008 = vmul.f32 %v1565, %v1671
      %v2009 = vmul.f32 %v1564, %v1676
      %v2010 = vmul.f32 %v1563, %v1681
      %v2011 = vmul.f32 %v1562, %v1686
      %v2012 = vmul.f32 %v1561, %v1691
      %v2013 = vmul.f32 %v1560, %v1696
      %v2014 = vmul.f32 %v1559, %v1701
      %v2015 = vmul.f32 %v1558, %v1706
      %v2016 = vmul.f32 %v1557, %v1711
      %v2017 = vmul.f32 %v1556, %v1716
      %v2018 = vmul.f32 %v1555, %v1721
      %v2019 = vmul.f32 %v1554, %v1726
      %v2020 = vmul.f32 %v1553, %v1731
      %v2021 = vmul.f32 %v1552, %v1736
      %v2022 = vmul.f32 %v1551, %v1741
      %v2023 = vmul.f32 %v1550, %v1746
      %v2024 = vmul.f32 %v1549, %v1751
      %v2025 = vmul.f32 %v1548, %v1756
      %v2026 = vmul.f32 %v1547, %v1761
      %v2027 = vmul.f32 %v1546, %v1766
      %v2028 = vmul.f32 %v1545, %v1771
      %v2029 = vmul.f32 %v1544, %v1776
      %v2030 = vmul.f32 %v1543, %v1781
      %v2031 = vmul.f32 %v1542, %v1786
      %v2032 = vmul.f32 %v1541, %v1791
      %v2033 = vmul.f32 %v1540, %v1796
      %v2034 = vmul.f32 %v1539, %v1801
      %v2035 = vmul.f32 %v1538, %v1806
      %v2036 = vmul.f32 %v1537, %v1811
      %v2037 = vmul.f32 %v1536, %v1816
      %v2038 = vmul.f32 %v1535, %v1821
      %v2039 = vmul.f32 %v1534, %v1826
      %v2040 = vmul.f32 %v1533, %v1831
      %v2041 = vmul.f32 %v1532, %v1836
      %v2042 = vmul.f32 %v1531, %v1841
      %v2043 = vmul.f32 %v1530, %v1846
      %v2044 = vmul.f32 %v1529, %v1851
      %v2045 = vmul.f32 %v1528, %v1856
      %v2046 = vmul.f32 %v1527, %v1861
      %v2047 = vmul.f32 %v1526, %v1866
      %v2048 = vmul.f32 %v1525, %v1871
      %v2049 = vmul.f32 %v1524, %v1876
      %v2050 = vmul.f32 %v1523, %v1881
      %v2051 = vmul.f32 %v1522, %v1886
      %v2052 = vmul.f32 %v1521, %v1891
      %v2053 = vmul.f32 %v1520, %v1896
      %v2054 = vmul.f32 %v1519, %v1901
      %v2055 = vmul.f32 %v1518, %v1906
      %v2056 = vmul.f32 %v1517, %v1911
      %v2057 = vmul.f32 %v1516, %v1916
      %v2058 = vmul.f32 %v1515, %v1921
      %v2059 = vmul.f32 %v1514, %v1926
      %v2060 = vmul.f32 %v1513, %v1931
      %v2061 = vmul.f32 %v1512, %v1936
      %v2062 = vmul.f32 %v1511, %v1941
      %v2063 = vmul.f32 %v1510, %v1946
      %v2064 = vmul.f32 %v1509, %v1951
      %v2065 = vmul.f32 %v1508, %v1956
      %v2066 = vmul.f32 %v1507, %v1961
      %v2067 = vmul.f32 %v1506, %v1966
      %v2068 = vmul.f32 %v1505, %v1971
      %v2069 = vmul.f32 %v1504, %v1976
      %v2070 = vmul.f32 %v1503, %v1981
      %v2071 = vmul.f32 %v1502, %v1986
      %v2072 = vmul.f32 %v1501, %v1991
      %v2073 = vmul.f32 %v1500, %v1996
      %v2074 = vmul.f32 %v1499, %v2001
      %v2075 = vrot.slane %v1350, 1
      %v2076 = vrot.slane %v1351, 1
      %v2077 = vrot.slane %v1352, 1
      %v2078 = vrot.slane %v1353, 1
      %v2079 = vrot.slane %v955, 1
      %v2080 = vrot.slane %v959, 1
      %v2081 = vrot.slane %v965, 1
      %v2082 = vrot.slane %v969, 1
      %v2083 = vrot.slane %v975, 1
      %v2084 = vrot.slane %v979, 1
      %v2085 = vrot.slane %v985, 1
      %v2086 = vrot.slane %v989, 1
      %v2087 = vrot.slane %v995, 1
      %v2088 = vrot.slane %v999, 1
      %v2089 = vrot.slane %v1005, 1
      %v2090 = vrot.slane %v1009, 1
      %v2091 = vrot.slane %v1015, 1
      %v2092 = vrot.slane %v1019, 1
      %v2093 = vrot.slane %v1025, 1
      %v2094 = vrot.slane %v1029, 1
      %v2095 = vrot.slane %v1035, 1
      %v2096 = vrot.slane %v1039, 1
      %v2097 = vrot.slane %v1045, 1
      %v2098 = vrot.slane %v1049, 1
      %v2099 = vrot.slane %v1055, 1
      %v2100 = vrot.slane %v1059, 1
      %v2101 = vrot.slane %v1065, 1
      %v2102 = vrot.slane %v1069, 1
      %v2103 = vrot.slane %v1075, 1
      %v2104 = vrot.slane %v1079, 1
      %v2105 = vrot.slane %v1085, 1
      %v2106 = vrot.slane %v1089, 1
      %v2107 = vrot.slane %v1095, 1
      %v2108 = vrot.slane %v1099, 1
      %v2109 = vrot.slane %v1105, 1
      %v2110 = vrot.slane %v1109, 1
      %v2111 = vrot.slane %v1115, 1
      %v2112 = vrot.slane %v1119, 1
      %v2113 = vrot.slane %v1125, 1
      %v2114 = vrot.slane %v1129, 1
      %v2115 = vrot.slane %v1135, 1
      %v2116 = vrot.slane %v1139, 1
      %v2117 = vrot.slane %v1145, 1
      %v2118 = vrot.slane %v1149, 1
      %v2119 = vrot.slane %v1155, 1
      %v2120 = vrot.slane %v1159, 1
      %v2121 = vrot.slane %v1165, 1
      %v2122 = vrot.slane %v1169, 1
      %v2123 = vrot.slane %v1175, 1
      %v2124 = vrot.slane %v1179, 1
      %v2125 = vrot.slane %v1185, 1
      %v2126 = vrot.slane %v1189, 1
      %v2127 = vrot.slane %v1195, 1
      %v2128 = vrot.slane %v1199, 1
      %v2129 = vrot.slane %v1205, 1
      %v2130 = vrot.slane %v1209, 1
      %v2131 = vrot.slane %v1215, 1
      %v2132 = vrot.slane %v1219, 1
      %v2133 = vrot.slane %v1225, 1
      %v2134 = vrot.slane %v1229, 1
      %v2135 = vrot.slane %v1235, 1
      %v2136 = vrot.slane %v1239, 1
      %v2137 = vrot.slane %v1245, 1
      %v2138 = vrot.slane %v1249, 1
      %v2139 = vrot.slane %v1255, 1
      %v2140 = vrot.slane %v1259, 1
      %v2141 = vrot.slane %v1265, 1
      %v2142 = vrot.slane %v1269, 1
      %v2143 = vrot.slane %v1420, 1
      %v2144 = vrot.slane %v1421, 1
      %v2145 = vrot.slane %v1422, 1
      %v2146 = vrot.slane %v1423, 1
      %vm2147 = vcmp.lt.s32.totalorder %v1497, 7
      %v2148 = vsel %vm2147, %v2145, %v2146
      %v2149 = vsel %vm2147, %v2144, %v2145
      %v2150 = vsel %vm2147, %v2143, %v2144
      %v2151 = vsel %vm2147, %v2142, %v2143
      %v2152 = vsel %vm2147, %v2141, %v2142
      %v2153 = vsel %vm2147, %v2140, %v2141
      %v2154 = vsel %vm2147, %v2139, %v2140
      %v2155 = vsel %vm2147, %v2138, %v2139
      %v2156 = vsel %vm2147, %v2137, %v2138
      %v2157 = vsel %vm2147, %v2136, %v2137
      %v2158 = vsel %vm2147, %v2135, %v2136
      %v2159 = vsel %vm2147, %v2134, %v2135
      %v2160 = vsel %vm2147, %v2133, %v2134
      %v2161 = vsel %vm2147, %v2132, %v2133
      %v2162 = vsel %vm2147, %v2131, %v2132
      %v2163 = vsel %vm2147, %v2130, %v2131
      %v2164 = vsel %vm2147, %v2129, %v2130
      %v2165 = vsel %vm2147, %v2128, %v2129
      %v2166 = vsel %vm2147, %v2127, %v2128
      %v2167 = vsel %vm2147, %v2126, %v2127
      %v2168 = vsel %vm2147, %v2125, %v2126
      %v2169 = vsel %vm2147, %v2124, %v2125
      %v2170 = vsel %vm2147, %v2123, %v2124
      %v2171 = vsel %vm2147, %v2122, %v2123
      %v2172 = vsel %vm2147, %v2121, %v2122
      %v2173 = vsel %vm2147, %v2120, %v2121
      %v2174 = vsel %vm2147, %v2119, %v2120
      %v2175 = vsel %vm2147, %v2118, %v2119
      %v2176 = vsel %vm2147, %v2117, %v2118
      %v2177 = vsel %vm2147, %v2116, %v2117
      %v2178 = vsel %vm2147, %v2115, %v2116
      %v2179 = vsel %vm2147, %v2114, %v2115
      %v2180 = vsel %vm2147, %v2113, %v2114
      %v2181 = vsel %vm2147, %v2112, %v2113
      %v2182 = vsel %vm2147, %v2111, %v2112
      %v2183 = vsel %vm2147, %v2110, %v2111
      %v2184 = vsel %vm2147, %v2109, %v2110
      %v2185 = vsel %vm2147, %v2108, %v2109
      %v2186 = vsel %vm2147, %v2107, %v2108
      %v2187 = vsel %vm2147, %v2106, %v2107
      %v2188 = vsel %vm2147, %v2105, %v2106
      %v2189 = vsel %vm2147, %v2104, %v2105
      %v2190 = vsel %vm2147, %v2103, %v2104
      %v2191 = vsel %vm2147, %v2102, %v2103
      %v2192 = vsel %vm2147, %v2101, %v2102
      %v2193 = vsel %vm2147, %v2100, %v2101
      %v2194 = vsel %vm2147, %v2099, %v2100
      %v2195 = vsel %vm2147, %v2098, %v2099
      %v2196 = vsel %vm2147, %v2097, %v2098
      %v2197 = vsel %vm2147, %v2096, %v2097
      %v2198 = vsel %vm2147, %v2095, %v2096
      %v2199 = vsel %vm2147, %v2094, %v2095
      %v2200 = vsel %vm2147, %v2093, %v2094
      %v2201 = vsel %vm2147, %v2092, %v2093
      %v2202 = vsel %vm2147, %v2091, %v2092
      %v2203 = vsel %vm2147, %v2090, %v2091
      %v2204 = vsel %vm2147, %v2089, %v2090
      %v2205 = vsel %vm2147, %v2088, %v2089
      %v2206 = vsel %vm2147, %v2087, %v2088
      %v2207 = vsel %vm2147, %v2086, %v2087
      %v2208 = vsel %vm2147, %v2085, %v2086
      %v2209 = vsel %vm2147, %v2084, %v2085
      %v2210 = vsel %vm2147, %v2083, %v2084
      %v2211 = vsel %vm2147, %v2082, %v2083
      %v2212 = vsel %vm2147, %v2081, %v2082
      %v2213 = vsel %vm2147, %v2080, %v2081
      %v2214 = vsel %vm2147, %v2079, %v2080
      %v2215 = vsel %vm2147, %v2078, %v2079
      %v2216 = vsel %vm2147, %v2077, %v2078
      %v2217 = vsel %vm2147, %v2076, %v2077
      %v2218 = vsel %vm2147, %v2075, %v2076
      %v2219 = vsel %vm2147, %v2146, %v2075
      %v2220 = vld [vmem:[%s4] sm:$0xff]
      %v2221 = vld [vmem:[%s4 + $0x8] sm:$0xff]
      %v2222 = vld [vmem:[%s4 + $0x10] sm:$0xff]
      %v2223 = vld [vmem:[%s4 + $0x18] sm:$0xff]
      %v2224 = vld [vmem:[%s4 + $0x20] sm:$0xff]
      %v2225 = vld [vmem:[%s4 + $0x28] sm:$0xff]
      %v2226 = vld [vmem:[%s4 + $0x30] sm:$0xff]
      %v2227 = vld [vmem:[%s4 + $0x38] sm:$0xff]
      %v2228 = vld [vmem:[%s4 + $0x40] sm:$0xff]
      %v2229 = vld [vmem:[%s4 + $0x48] sm:$0xff]
      %v2230 = vld [vmem:[%s4 + $0x50] sm:$0xff]
      %v2231 = vld [vmem:[%s4 + $0x58] sm:$0xff]
      %v2232 = vld [vmem:[%s4 + $0x60] sm:$0xff]
      %v2233 = vld [vmem:[%s4 + $0x68] sm:$0xff]
      %v2234 = vld [vmem:[%s4 + $0x70] sm:$0xff]
      %v2235 = vld [vmem:[%s4 + $0x78] sm:$0xff]
      %v2236 = vld [vmem:[%s4 + $0x80] sm:$0xff]
      %v2237 = vld [vmem:[%s4 + $0x88] sm:$0xff]
      %v2238 = vld [vmem:[%s4 + $0x90] sm:$0xff]
      %v2239 = vld [vmem:[%s4 + $0x98] sm:$0xff]
      %v2240 = vld [vmem:[%s4 + $0xa0] sm:$0xff]
      %v2241 = vld [vmem:[%s4 + $0xa8] sm:$0xff]
      %v2242 = vld [vmem:[%s4 + $0xb0] sm:$0xff]
      %v2243 = vld [vmem:[%s4 + $0xb8] sm:$0xff]
      %v2244 = vld [vmem:[%s4 + $0xc0] sm:$0xff]
      %v2245 = vld [vmem:[%s4 + $0xc8] sm:$0xff]
      %v2246 = vld [vmem:[%s4 + $0xd0] sm:$0xff]
      %v2247 = vld [vmem:[%s4 + $0xd8] sm:$0xff]
      %v2248 = vld [vmem:[%s4 + $0xe0] sm:$0xff]
      %v2249 = vld [vmem:[%s4 + $0xe8] sm:$0xff]
      %v2250 = vld [vmem:[%s4 + $0xf0] sm:$0xff]
      %v2251 = vld [vmem:[%s4 + $0xf8] sm:$0xff]
      %v2252 = vld [vmem:[%s4 + $0x100] sm:$0xff]
      %v2253 = vld [vmem:[%s4 + $0x108] sm:$0xff]
      %v2254 = vld [vmem:[%s4 + $0x110] sm:$0xff]
      %v2255 = vld [vmem:[%s4 + $0x118] sm:$0xff]
      %v2256 = vld [vmem:[%s4 + $0x120] sm:$0xff]
      %v2257 = vld [vmem:[%s4 + $0x128] sm:$0xff]
      %v2258 = vld [vmem:[%s4 + $0x130] sm:$0xff]
      %v2259 = vld [vmem:[%s4 + $0x138] sm:$0xff]
      %v2260 = vld [vmem:[%s4 + $0x140] sm:$0xff]
      %v2261 = vld [vmem:[%s4 + $0x148] sm:$0xff]
      %v2262 = vld [vmem:[%s4 + $0x150] sm:$0xff]
      %v2263 = vld [vmem:[%s4 + $0x158] sm:$0xff]
      %v2264 = vld [vmem:[%s4 + $0x160] sm:$0xff]
      %v2265 = vld [vmem:[%s4 + $0x168] sm:$0xff]
      %v2266 = vld [vmem:[%s4 + $0x170] sm:$0xff]
      %v2267 = vld [vmem:[%s4 + $0x178] sm:$0xff]
      %v2268 = vld [vmem:[%s4 + $0x180] sm:$0xff]
      %v2269 = vld [vmem:[%s4 + $0x188] sm:$0xff]
      %v2270 = vld [vmem:[%s4 + $0x190] sm:$0xff]
      %v2271 = vld [vmem:[%s4 + $0x198] sm:$0xff]
      %v2272 = vld [vmem:[%s4 + $0x1a0] sm:$0xff]
      %v2273 = vld [vmem:[%s4 + $0x1a8] sm:$0xff]
      %v2274 = vld [vmem:[%s4 + $0x1b0] sm:$0xff]
      %v2275 = vld [vmem:[%s4 + $0x1b8] sm:$0xff]
      %v2276 = vld [vmem:[%s4 + $0x1c0] sm:$0xff]
      %v2277 = vld [vmem:[%s4 + $0x1c8] sm:$0xff]
      %v2278 = vld [vmem:[%s4 + $0x1d0] sm:$0xff]
      %v2279 = vld [vmem:[%s4 + $0x1d8] sm:$0xff]
      %v2280 = vld [vmem:[%s4 + $0x1e0] sm:$0xff]
      %v2281 = vld [vmem:[%s4 + $0x1e8] sm:$0xff]
      %v2282 = vld [vmem:[%s4 + $0x1f0] sm:$0xff]
      %v2283 = vld [vmem:[%s4 + $0x1f8] sm:$0xff]
      %v2284 = vld [vmem:[%s4 + $0x200] sm:$0xff]
      %v2285 = vld [vmem:[%s4 + $0x208] sm:$0xff]
      %v2286 = vld [vmem:[%s4 + $0x210] sm:$0xff]
      %v2287 = vld [vmem:[%s4 + $0x218] sm:$0xff]
      %v2288 = vld [vmem:[%s4 + $0x220] sm:$0xff]
      %v2289 = vld [vmem:[%s4 + $0x228] sm:$0xff]
      %v2290 = vld [vmem:[%s4 + $0x230] sm:$0xff]
      %v2291 = vld [vmem:[%s4 + $0x238] sm:$0xff]
      %2293 = vset.pattern.permute.xlu0 0
      %2294 = vperm.xlu0 %2293, %v2220
      %v2295 = vpop.permute.xlu0 %2294
      %2298 = vset.pattern.permute.xlu0 0
      %2299 = vperm.xlu0 %2298, %v2221
      %v2300 = vpop.permute.xlu0 %2299
      %2303 = vset.pattern.permute.xlu0 0
      %2304 = vperm.xlu0 %2303, %v2222
      %v2305 = vpop.permute.xlu0 %2304
      %2308 = vset.pattern.permute.xlu0 0
      %2309 = vperm.xlu0 %2308, %v2223
      %v2310 = vpop.permute.xlu0 %2309
      %2313 = vset.pattern.permute.xlu0 0
      %2314 = vperm.xlu0 %2313, %v2224
      %v2315 = vpop.permute.xlu0 %2314
      %2318 = vset.pattern.permute.xlu0 0
      %2319 = vperm.xlu0 %2318, %v2225
      %v2320 = vpop.permute.xlu0 %2319
      %2323 = vset.pattern.permute.xlu0 0
      %2324 = vperm.xlu0 %2323, %v2226
      %v2325 = vpop.permute.xlu0 %2324
      %2328 = vset.pattern.permute.xlu0 0
      %2329 = vperm.xlu0 %2328, %v2227
      %v2330 = vpop.permute.xlu0 %2329
      %2333 = vset.pattern.permute.xlu0 0
      %2334 = vperm.xlu0 %2333, %v2228
      %v2335 = vpop.permute.xlu0 %2334
      %2338 = vset.pattern.permute.xlu0 0
      %2339 = vperm.xlu0 %2338, %v2229
      %v2340 = vpop.permute.xlu0 %2339
      %2343 = vset.pattern.permute.xlu0 0
      %2344 = vperm.xlu0 %2343, %v2230
      %v2345 = vpop.permute.xlu0 %2344
      %2348 = vset.pattern.permute.xlu0 0
      %2349 = vperm.xlu0 %2348, %v2231
      %v2350 = vpop.permute.xlu0 %2349
      %2353 = vset.pattern.permute.xlu0 0
      %2354 = vperm.xlu0 %2353, %v2232
      %v2355 = vpop.permute.xlu0 %2354
      %2358 = vset.pattern.permute.xlu0 0
      %2359 = vperm.xlu0 %2358, %v2233
      %v2360 = vpop.permute.xlu0 %2359
      %2363 = vset.pattern.permute.xlu0 0
      %2364 = vperm.xlu0 %2363, %v2234
      %v2365 = vpop.permute.xlu0 %2364
      %2368 = vset.pattern.permute.xlu0 0
      %2369 = vperm.xlu0 %2368, %v2235
      %v2370 = vpop.permute.xlu0 %2369
      %2373 = vset.pattern.permute.xlu0 0
      %2374 = vperm.xlu0 %2373, %v2236
      %v2375 = vpop.permute.xlu0 %2374
      %2378 = vset.pattern.permute.xlu0 0
      %2379 = vperm.xlu0 %2378, %v2237
      %v2380 = vpop.permute.xlu0 %2379
      %2383 = vset.pattern.permute.xlu0 0
      %2384 = vperm.xlu0 %2383, %v2238
      %v2385 = vpop.permute.xlu0 %2384
      %2388 = vset.pattern.permute.xlu0 0
      %2389 = vperm.xlu0 %2388, %v2239
      %v2390 = vpop.permute.xlu0 %2389
      %2393 = vset.pattern.permute.xlu0 0
      %2394 = vperm.xlu0 %2393, %v2240
      %v2395 = vpop.permute.xlu0 %2394
      %2398 = vset.pattern.permute.xlu0 0
      %2399 = vperm.xlu0 %2398, %v2241
      %v2400 = vpop.permute.xlu0 %2399
      %2403 = vset.pattern.permute.xlu0 0
      %2404 = vperm.xlu0 %2403, %v2242
      %v2405 = vpop.permute.xlu0 %2404
      %2408 = vset.pattern.permute.xlu0 0
      %2409 = vperm.xlu0 %2408, %v2243
      %v2410 = vpop.permute.xlu0 %2409
      %2413 = vset.pattern.permute.xlu0 0
      %2414 = vperm.xlu0 %2413, %v2244
      %v2415 = vpop.permute.xlu0 %2414
      %2418 = vset.pattern.permute.xlu0 0
      %2419 = vperm.xlu0 %2418, %v2245
      %v2420 = vpop.permute.xlu0 %2419
      %2423 = vset.pattern.permute.xlu0 0
      %2424 = vperm.xlu0 %2423, %v2246
      %v2425 = vpop.permute.xlu0 %2424
      %2428 = vset.pattern.permute.xlu0 0
      %2429 = vperm.xlu0 %2428, %v2247
      %v2430 = vpop.permute.xlu0 %2429
      %2433 = vset.pattern.permute.xlu0 0
      %2434 = vperm.xlu0 %2433, %v2248
      %v2435 = vpop.permute.xlu0 %2434
      %2438 = vset.pattern.permute.xlu0 0
      %2439 = vperm.xlu0 %2438, %v2249
      %v2440 = vpop.permute.xlu0 %2439
      %2443 = vset.pattern.permute.xlu0 0
      %2444 = vperm.xlu0 %2443, %v2250
      %v2445 = vpop.permute.xlu0 %2444
      %2448 = vset.pattern.permute.xlu0 0
      %2449 = vperm.xlu0 %2448, %v2251
      %v2450 = vpop.permute.xlu0 %2449
      %2453 = vset.pattern.permute.xlu0 0
      %2454 = vperm.xlu0 %2453, %v2252
      %v2455 = vpop.permute.xlu0 %2454
      %2458 = vset.pattern.permute.xlu0 0
      %2459 = vperm.xlu0 %2458, %v2253
      %v2460 = vpop.permute.xlu0 %2459
      %2463 = vset.pattern.permute.xlu0 0
      %2464 = vperm.xlu0 %2463, %v2254
      %v2465 = vpop.permute.xlu0 %2464
      %2468 = vset.pattern.permute.xlu0 0
      %2469 = vperm.xlu0 %2468, %v2255
      %v2470 = vpop.permute.xlu0 %2469
      %2473 = vset.pattern.permute.xlu0 0
      %2474 = vperm.xlu0 %2473, %v2256
      %v2475 = vpop.permute.xlu0 %2474
      %2478 = vset.pattern.permute.xlu0 0
      %2479 = vperm.xlu0 %2478, %v2257
      %v2480 = vpop.permute.xlu0 %2479
      %2483 = vset.pattern.permute.xlu0 0
      %2484 = vperm.xlu0 %2483, %v2258
      %v2485 = vpop.permute.xlu0 %2484
      %2488 = vset.pattern.permute.xlu0 0
      %2489 = vperm.xlu0 %2488, %v2259
      %v2490 = vpop.permute.xlu0 %2489
      %2493 = vset.pattern.permute.xlu0 0
      %2494 = vperm.xlu0 %2493, %v2260
      %v2495 = vpop.permute.xlu0 %2494
      %2498 = vset.pattern.permute.xlu0 0
      %2499 = vperm.xlu0 %2498, %v2261
      %v2500 = vpop.permute.xlu0 %2499
      %2503 = vset.pattern.permute.xlu0 0
      %2504 = vperm.xlu0 %2503, %v2262
      %v2505 = vpop.permute.xlu0 %2504
      %2508 = vset.pattern.permute.xlu0 0
      %2509 = vperm.xlu0 %2508, %v2263
      %v2510 = vpop.permute.xlu0 %2509
      %2513 = vset.pattern.permute.xlu0 0
      %2514 = vperm.xlu0 %2513, %v2264
      %v2515 = vpop.permute.xlu0 %2514
      %2518 = vset.pattern.permute.xlu0 0
      %2519 = vperm.xlu0 %2518, %v2265
      %v2520 = vpop.permute.xlu0 %2519
      %2523 = vset.pattern.permute.xlu0 0
      %2524 = vperm.xlu0 %2523, %v2266
      %v2525 = vpop.permute.xlu0 %2524
      %2528 = vset.pattern.permute.xlu0 0
      %2529 = vperm.xlu0 %2528, %v2267
      %v2530 = vpop.permute.xlu0 %2529
      %2533 = vset.pattern.permute.xlu0 0
      %2534 = vperm.xlu0 %2533, %v2268
      %v2535 = vpop.permute.xlu0 %2534
      %2538 = vset.pattern.permute.xlu0 0
      %2539 = vperm.xlu0 %2538, %v2269
      %v2540 = vpop.permute.xlu0 %2539
      %2543 = vset.pattern.permute.xlu0 0
      %2544 = vperm.xlu0 %2543, %v2270
      %v2545 = vpop.permute.xlu0 %2544
      %2548 = vset.pattern.permute.xlu0 0
      %2549 = vperm.xlu0 %2548, %v2271
      %v2550 = vpop.permute.xlu0 %2549
      %2553 = vset.pattern.permute.xlu0 0
      %2554 = vperm.xlu0 %2553, %v2272
      %v2555 = vpop.permute.xlu0 %2554
      %2558 = vset.pattern.permute.xlu0 0
      %2559 = vperm.xlu0 %2558, %v2273
      %v2560 = vpop.permute.xlu0 %2559
      %2563 = vset.pattern.permute.xlu0 0
      %2564 = vperm.xlu0 %2563, %v2274
      %v2565 = vpop.permute.xlu0 %2564
      %2568 = vset.pattern.permute.xlu0 0
      %2569 = vperm.xlu0 %2568, %v2275
      %v2570 = vpop.permute.xlu0 %2569
      %2573 = vset.pattern.permute.xlu0 0
      %2574 = vperm.xlu0 %2573, %v2276
      %v2575 = vpop.permute.xlu0 %2574
      %2578 = vset.pattern.permute.xlu0 0
      %2579 = vperm.xlu0 %2578, %v2277
      %v2580 = vpop.permute.xlu0 %2579
      %2583 = vset.pattern.permute.xlu0 0
      %2584 = vperm.xlu0 %2583, %v2278
      %v2585 = vpop.permute.xlu0 %2584
      %2588 = vset.pattern.permute.xlu0 0
      %2589 = vperm.xlu0 %2588, %v2279
      %v2590 = vpop.permute.xlu0 %2589
      %2593 = vset.pattern.permute.xlu0 0
      %2594 = vperm.xlu0 %2593, %v2280
      %v2595 = vpop.permute.xlu0 %2594
      %2598 = vset.pattern.permute.xlu0 0
      %2599 = vperm.xlu0 %2598, %v2281
      %v2600 = vpop.permute.xlu0 %2599
      %2603 = vset.pattern.permute.xlu0 0
      %2604 = vperm.xlu0 %2603, %v2282
      %v2605 = vpop.permute.xlu0 %2604
      %2608 = vset.pattern.permute.xlu0 0
      %2609 = vperm.xlu0 %2608, %v2283
      %v2610 = vpop.permute.xlu0 %2609
      %2613 = vset.pattern.permute.xlu0 0
      %2614 = vperm.xlu0 %2613, %v2284
      %v2615 = vpop.permute.xlu0 %2614
      %2618 = vset.pattern.permute.xlu0 0
      %2619 = vperm.xlu0 %2618, %v2285
      %v2620 = vpop.permute.xlu0 %2619
      %2623 = vset.pattern.permute.xlu0 0
      %2624 = vperm.xlu0 %2623, %v2286
      %v2625 = vpop.permute.xlu0 %2624
      %2628 = vset.pattern.permute.xlu0 0
      %2629 = vperm.xlu0 %2628, %v2287
      %v2630 = vpop.permute.xlu0 %2629
      %2633 = vset.pattern.permute.xlu0 0
      %2634 = vperm.xlu0 %2633, %v2288
      %v2635 = vpop.permute.xlu0 %2634
      %2638 = vset.pattern.permute.xlu0 0
      %2639 = vperm.xlu0 %2638, %v2289
      %v2640 = vpop.permute.xlu0 %2639
      %2643 = vset.pattern.permute.xlu0 0
      %2644 = vperm.xlu0 %2643, %v2290
      %v2645 = vpop.permute.xlu0 %2644
      %2648 = vset.pattern.permute.xlu0 0
      %2649 = vperm.xlu0 %2648, %v2291
      %v2650 = vpop.permute.xlu0 %2649
      %v2652 = vmul.f32 %v2218, %v2295
      %v2653 = vmul.f32 %v2217, %v2300
      %v2654 = vmul.f32 %v2216, %v2305
      %v2655 = vmul.f32 %v2215, %v2310
      %v2656 = vmul.f32 %v2214, %v2315
      %v2657 = vmul.f32 %v2213, %v2320
      %v2658 = vmul.f32 %v2212, %v2325
      %v2659 = vmul.f32 %v2211, %v2330
      %v2660 = vmul.f32 %v2210, %v2335
      %v2661 = vmul.f32 %v2209, %v2340
      %v2662 = vmul.f32 %v2208, %v2345
      %v2663 = vmul.f32 %v2207, %v2350
      %v2664 = vmul.f32 %v2206, %v2355
      %v2665 = vmul.f32 %v2205, %v2360
      %v2666 = vmul.f32 %v2204, %v2365
      %v2667 = vmul.f32 %v2203, %v2370
      %v2668 = vmul.f32 %v2202, %v2375
      %v2669 = vmul.f32 %v2201, %v2380
      %v2670 = vmul.f32 %v2200, %v2385
      %v2671 = vmul.f32 %v2199, %v2390
      %v2672 = vmul.f32 %v2198, %v2395
      %v2673 = vmul.f32 %v2197, %v2400
      %v2674 = vmul.f32 %v2196, %v2405
      %v2675 = vmul.f32 %v2195, %v2410
      %v2676 = vmul.f32 %v2194, %v2415
      %v2677 = vmul.f32 %v2193, %v2420
      %v2678 = vmul.f32 %v2192, %v2425
      %v2679 = vmul.f32 %v2191, %v2430
      %v2680 = vmul.f32 %v2190, %v2435
      %v2681 = vmul.f32 %v2189, %v2440
      %v2682 = vmul.f32 %v2188, %v2445
      %v2683 = vmul.f32 %v2187, %v2450
      %v2684 = vmul.f32 %v2186, %v2455
      %v2685 = vmul.f32 %v2185, %v2460
      %v2686 = vmul.f32 %v2184, %v2465
      %v2687 = vmul.f32 %v2183, %v2470
      %v2688 = vmul.f32 %v2182, %v2475
      %v2689 = vmul.f32 %v2181, %v2480
      %v2690 = vmul.f32 %v2180, %v2485
      %v2691 = vmul.f32 %v2179, %v2490
      %v2692 = vmul.f32 %v2178, %v2495
      %v2693 = vmul.f32 %v2177, %v2500
      %v2694 = vmul.f32 %v2176, %v2505
      %v2695 = vmul.f32 %v2175, %v2510
      %v2696 = vmul.f32 %v2174, %v2515
      %v2697 = vmul.f32 %v2173, %v2520
      %v2698 = vmul.f32 %v2172, %v2525
      %v2699 = vmul.f32 %v2171, %v2530
      %v2700 = vmul.f32 %v2170, %v2535
      %v2701 = vmul.f32 %v2169, %v2540
      %v2702 = vmul.f32 %v2168, %v2545
      %v2703 = vmul.f32 %v2167, %v2550
      %v2704 = vmul.f32 %v2166, %v2555
      %v2705 = vmul.f32 %v2165, %v2560
      %v2706 = vmul.f32 %v2164, %v2565
      %v2707 = vmul.f32 %v2163, %v2570
      %v2708 = vmul.f32 %v2162, %v2575
      %v2709 = vmul.f32 %v2161, %v2580
      %v2710 = vmul.f32 %v2160, %v2585
      %v2711 = vmul.f32 %v2159, %v2590
      %v2712 = vmul.f32 %v2158, %v2595
      %v2713 = vmul.f32 %v2157, %v2600
      %v2714 = vmul.f32 %v2156, %v2605
      %v2715 = vmul.f32 %v2155, %v2610
      %v2716 = vmul.f32 %v2154, %v2615
      %v2717 = vmul.f32 %v2153, %v2620
      %v2718 = vmul.f32 %v2152, %v2625
      %v2719 = vmul.f32 %v2151, %v2630
      %v2720 = vmul.f32 %v2150, %v2635
      %v2721 = vmul.f32 %v2149, %v2640
      %v2722 = vmul.f32 %v2148, %v2645
      %v2723 = vmul.f32 %v2219, %v2650
      %v2724 = vld [vmem:[%s7] sm:$0xff]
      %v2725 = vld [vmem:[%s7 + $0x8] sm:$0x1]
      %v2726 = vlaneseq
      %v2727 = vshrl.u32 %v2726, 7
      %v2728 = vsub.s32 0, %v2727
      %v2729 = vrot.slane %v2724, %v2728
      %v2730 = vmul.f32 %v2003, %v2729
      %v2731 = vmul.f32 %v2004, %v2729
      %v2732 = vmul.f32 %v2005, %v2729
      %v2733 = vmul.f32 %v2006, %v2729
      %v2734 = vmul.f32 %v2007, %v2729
      %v2735 = vmul.f32 %v2008, %v2729
      %v2736 = vmul.f32 %v2009, %v2729
      %v2737 = vmul.f32 %v2010, %v2729
      %v2738 = vmul.f32 %v2011, %v2729
      %v2739 = vmul.f32 %v2012, %v2729
      %v2740 = vmul.f32 %v2013, %v2729
      %v2741 = vmul.f32 %v2014, %v2729
      %v2742 = vmul.f32 %v2015, %v2729
      %v2743 = vmul.f32 %v2016, %v2729
      %v2744 = vmul.f32 %v2017, %v2729
      %v2745 = vmul.f32 %v2018, %v2729
      %v2746 = vmul.f32 %v2019, %v2729
      %v2747 = vmul.f32 %v2020, %v2729
      %v2748 = vmul.f32 %v2021, %v2729
      %v2749 = vmul.f32 %v2022, %v2729
      %v2750 = vmul.f32 %v2023, %v2729
      %v2751 = vmul.f32 %v2024, %v2729
      %v2752 = vmul.f32 %v2025, %v2729
      %v2753 = vmul.f32 %v2026, %v2729
      %v2754 = vmul.f32 %v2027, %v2729
      %v2755 = vmul.f32 %v2028, %v2729
      %v2756 = vmul.f32 %v2029, %v2729
      %v2757 = vmul.f32 %v2030, %v2729
      %v2758 = vmul.f32 %v2031, %v2729
      %v2759 = vmul.f32 %v2032, %v2729
      %v2760 = vmul.f32 %v2033, %v2729
      %v2761 = vmul.f32 %v2034, %v2729
      %v2762 = vmul.f32 %v2035, %v2729
      %v2763 = vmul.f32 %v2036, %v2729
      %v2764 = vmul.f32 %v2037, %v2729
      %v2765 = vmul.f32 %v2038, %v2729
      %v2766 = vmul.f32 %v2039, %v2729
      %v2767 = vmul.f32 %v2040, %v2729
      %v2768 = vmul.f32 %v2041, %v2729
      %v2769 = vmul.f32 %v2042, %v2729
      %v2770 = vmul.f32 %v2043, %v2729
      %v2771 = vmul.f32 %v2044, %v2729
      %v2772 = vmul.f32 %v2045, %v2729
      %v2773 = vmul.f32 %v2046, %v2729
      %v2774 = vmul.f32 %v2047, %v2729
      %v2775 = vmul.f32 %v2048, %v2729
      %v2776 = vmul.f32 %v2049, %v2729
      %v2777 = vmul.f32 %v2050, %v2729
      %v2778 = vmul.f32 %v2051, %v2729
      %v2779 = vmul.f32 %v2052, %v2729
      %v2780 = vmul.f32 %v2053, %v2729
      %v2781 = vmul.f32 %v2054, %v2729
      %v2782 = vmul.f32 %v2055, %v2729
      %v2783 = vmul.f32 %v2056, %v2729
      %v2784 = vmul.f32 %v2057, %v2729
      %v2785 = vmul.f32 %v2058, %v2729
      %v2786 = vmul.f32 %v2059, %v2729
      %v2787 = vmul.f32 %v2060, %v2729
      %v2788 = vmul.f32 %v2061, %v2729
      %v2789 = vmul.f32 %v2062, %v2729
      %v2790 = vmul.f32 %v2063, %v2729
      %v2791 = vmul.f32 %v2064, %v2729
      %v2792 = vmul.f32 %v2065, %v2729
      %v2793 = vmul.f32 %v2066, %v2729
      %v2794 = vadd.f32 %v2730, 0.0
      %v2795 = vadd.f32 %v2731, 0.0
      %v2796 = vadd.f32 %v2732, 0.0
      %v2797 = vadd.f32 %v2733, 0.0
      %v2798 = vadd.f32 %v2734, 0.0
      %v2799 = vadd.f32 %v2735, 0.0
      %v2800 = vadd.f32 %v2736, 0.0
      %v2801 = vadd.f32 %v2737, 0.0
      %v2802 = vadd.f32 %v2738, 0.0
      %v2803 = vadd.f32 %v2739, 0.0
      %v2804 = vadd.f32 %v2740, 0.0
      %v2805 = vadd.f32 %v2741, 0.0
      %v2806 = vadd.f32 %v2742, 0.0
      %v2807 = vadd.f32 %v2743, 0.0
      %v2808 = vadd.f32 %v2744, 0.0
      %v2809 = vadd.f32 %v2745, 0.0
      %v2810 = vadd.f32 %v2746, 0.0
      %v2811 = vadd.f32 %v2747, 0.0
      %v2812 = vadd.f32 %v2748, 0.0
      %v2813 = vadd.f32 %v2749, 0.0
      %v2814 = vadd.f32 %v2750, 0.0
      %v2815 = vadd.f32 %v2751, 0.0
      %v2816 = vadd.f32 %v2752, 0.0
      %v2817 = vadd.f32 %v2753, 0.0
      %v2818 = vadd.f32 %v2754, 0.0
      %v2819 = vadd.f32 %v2755, 0.0
      %v2820 = vadd.f32 %v2756, 0.0
      %v2821 = vadd.f32 %v2757, 0.0
      %v2822 = vadd.f32 %v2758, 0.0
      %v2823 = vadd.f32 %v2759, 0.0
      %v2824 = vadd.f32 %v2760, 0.0
      %v2825 = vadd.f32 %v2761, 0.0
      %v2826 = vadd.f32 %v2762, 0.0
      %v2827 = vadd.f32 %v2763, 0.0
      %v2828 = vadd.f32 %v2764, 0.0
      %v2829 = vadd.f32 %v2765, 0.0
      %v2830 = vadd.f32 %v2766, 0.0
      %v2831 = vadd.f32 %v2767, 0.0
      %v2832 = vadd.f32 %v2768, 0.0
      %v2833 = vadd.f32 %v2769, 0.0
      %v2834 = vadd.f32 %v2770, 0.0
      %v2835 = vadd.f32 %v2771, 0.0
      %v2836 = vadd.f32 %v2772, 0.0
      %v2837 = vadd.f32 %v2773, 0.0
      %v2838 = vadd.f32 %v2774, 0.0
      %v2839 = vadd.f32 %v2775, 0.0
      %v2840 = vadd.f32 %v2776, 0.0
      %v2841 = vadd.f32 %v2777, 0.0
      %v2842 = vadd.f32 %v2778, 0.0
      %v2843 = vadd.f32 %v2779, 0.0
      %v2844 = vadd.f32 %v2780, 0.0
      %v2845 = vadd.f32 %v2781, 0.0
      %v2846 = vadd.f32 %v2782, 0.0
      %v2847 = vadd.f32 %v2783, 0.0
      %v2848 = vadd.f32 %v2784, 0.0
      %v2849 = vadd.f32 %v2785, 0.0
      %v2850 = vadd.f32 %v2786, 0.0
      %v2851 = vadd.f32 %v2787, 0.0
      %v2852 = vadd.f32 %v2788, 0.0
      %v2853 = vadd.f32 %v2789, 0.0
      %v2854 = vadd.f32 %v2790, 0.0
      %v2855 = vadd.f32 %v2791, 0.0
      %v2856 = vadd.f32 %v2792, 0.0
      %v2857 = vadd.f32 %v2793, 0.0
      %v2858 = vlaneseq
      %v2859 = vshrl.u32 %v2858, 7
      %v2860 = vsub.s32 1, %v2859
      %v2861 = vrot.slane %v2724, %v2860
      %v2862 = vmul.f32 %v1350, %v2861
      %v2863 = vmul.f32 %v1351, %v2861
      %v2864 = vmul.f32 %v1352, %v2861
      %v2865 = vmul.f32 %v1353, %v2861
      %v2866 = vmul.f32 %v955, %v2861
      %v2867 = vmul.f32 %v959, %v2861
      %v2868 = vmul.f32 %v965, %v2861
      %v2869 = vmul.f32 %v969, %v2861
      %v2870 = vmul.f32 %v975, %v2861
      %v2871 = vmul.f32 %v979, %v2861
      %v2872 = vmul.f32 %v985, %v2861
      %v2873 = vmul.f32 %v989, %v2861
      %v2874 = vmul.f32 %v995, %v2861
      %v2875 = vmul.f32 %v999, %v2861
      %v2876 = vmul.f32 %v1005, %v2861
      %v2877 = vmul.f32 %v1009, %v2861
      %v2878 = vmul.f32 %v1015, %v2861
      %v2879 = vmul.f32 %v1019, %v2861
      %v2880 = vmul.f32 %v1025, %v2861
      %v2881 = vmul.f32 %v1029, %v2861
      %v2882 = vmul.f32 %v1035, %v2861
      %v2883 = vmul.f32 %v1039, %v2861
      %v2884 = vmul.f32 %v1045, %v2861
      %v2885 = vmul.f32 %v1049, %v2861
      %v2886 = vmul.f32 %v1055, %v2861
      %v2887 = vmul.f32 %v1059, %v2861
      %v2888 = vmul.f32 %v1065, %v2861
      %v2889 = vmul.f32 %v1069, %v2861
      %v2890 = vmul.f32 %v1075, %v2861
      %v2891 = vmul.f32 %v1079, %v2861
      %v2892 = vmul.f32 %v1085, %v2861
      %v2893 = vmul.f32 %v1089, %v2861
      %v2894 = vmul.f32 %v1095, %v2861
      %v2895 = vmul.f32 %v1099, %v2861
      %v2896 = vmul.f32 %v1105, %v2861
      %v2897 = vmul.f32 %v1109, %v2861
      %v2898 = vmul.f32 %v1115, %v2861
      %v2899 = vmul.f32 %v1119, %v2861
      %v2900 = vmul.f32 %v1125, %v2861
      %v2901 = vmul.f32 %v1129, %v2861
      %v2902 = vmul.f32 %v1135, %v2861
      %v2903 = vmul.f32 %v1139, %v2861
      %v2904 = vmul.f32 %v1145, %v2861
      %v2905 = vmul.f32 %v1149, %v2861
      %v2906 = vmul.f32 %v1155, %v2861
      %v2907 = vmul.f32 %v1159, %v2861
      %v2908 = vmul.f32 %v1165, %v2861
      %v2909 = vmul.f32 %v1169, %v2861
      %v2910 = vmul.f32 %v1175, %v2861
      %v2911 = vmul.f32 %v1179, %v2861
      %v2912 = vmul.f32 %v1185, %v2861
      %v2913 = vmul.f32 %v1189, %v2861
      %v2914 = vmul.f32 %v1195, %v2861
      %v2915 = vmul.f32 %v1199, %v2861
      %v2916 = vmul.f32 %v1205, %v2861
      %v2917 = vmul.f32 %v1209, %v2861
      %v2918 = vmul.f32 %v1215, %v2861
      %v2919 = vmul.f32 %v1219, %v2861
      %v2920 = vmul.f32 %v1225, %v2861
      %v2921 = vmul.f32 %v1229, %v2861
      %v2922 = vmul.f32 %v1235, %v2861
      %v2923 = vmul.f32 %v1239, %v2861
      %v2924 = vmul.f32 %v1245, %v2861
      %v2925 = vmul.f32 %v1249, %v2861
      %v2926 = vadd.f32 %v2794, %v2862
      %v2927 = vadd.f32 %v2795, %v2863
      %v2928 = vadd.f32 %v2796, %v2864
      %v2929 = vadd.f32 %v2797, %v2865
      %v2930 = vadd.f32 %v2798, %v2866
      %v2931 = vadd.f32 %v2799, %v2867
      %v2932 = vadd.f32 %v2800, %v2868
      %v2933 = vadd.f32 %v2801, %v2869
      %v2934 = vadd.f32 %v2802, %v2870
      %v2935 = vadd.f32 %v2803, %v2871
      %v2936 = vadd.f32 %v2804, %v2872
      %v2937 = vadd.f32 %v2805, %v2873
      %v2938 = vadd.f32 %v2806, %v2874
      %v2939 = vadd.f32 %v2807, %v2875
      %v2940 = vadd.f32 %v2808, %v2876
      %v2941 = vadd.f32 %v2809, %v2877
      %v2942 = vadd.f32 %v2810, %v2878
      %v2943 = vadd.f32 %v2811, %v2879
      %v2944 = vadd.f32 %v2812, %v2880
      %v2945 = vadd.f32 %v2813, %v2881
      %v2946 = vadd.f32 %v2814, %v2882
      %v2947 = vadd.f32 %v2815, %v2883
      %v2948 = vadd.f32 %v2816, %v2884
      %v2949 = vadd.f32 %v2817, %v2885
      %v2950 = vadd.f32 %v2818, %v2886
      %v2951 = vadd.f32 %v2819, %v2887
      %v2952 = vadd.f32 %v2820, %v2888
      %v2953 = vadd.f32 %v2821, %v2889
      %v2954 = vadd.f32 %v2822, %v2890
      %v2955 = vadd.f32 %v2823, %v2891
      %v2956 = vadd.f32 %v2824, %v2892
      %v2957 = vadd.f32 %v2825, %v2893
      %v2958 = vadd.f32 %v2826, %v2894
      %v2959 = vadd.f32 %v2827, %v2895
      %v2960 = vadd.f32 %v2828, %v2896
      %v2961 = vadd.f32 %v2829, %v2897
      %v2962 = vadd.f32 %v2830, %v2898
      %v2963 = vadd.f32 %v2831, %v2899
      %v2964 = vadd.f32 %v2832, %v2900
      %v2965 = vadd.f32 %v2833, %v2901
      %v2966 = vadd.f32 %v2834, %v2902
      %v2967 = vadd.f32 %v2835, %v2903
      %v2968 = vadd.f32 %v2836, %v2904
      %v2969 = vadd.f32 %v2837, %v2905
      %v2970 = vadd.f32 %v2838, %v2906
      %v2971 = vadd.f32 %v2839, %v2907
      %v2972 = vadd.f32 %v2840, %v2908
      %v2973 = vadd.f32 %v2841, %v2909
      %v2974 = vadd.f32 %v2842, %v2910
      %v2975 = vadd.f32 %v2843, %v2911
      %v2976 = vadd.f32 %v2844, %v2912
      %v2977 = vadd.f32 %v2845, %v2913
      %v2978 = vadd.f32 %v2846, %v2914
      %v2979 = vadd.f32 %v2847, %v2915
      %v2980 = vadd.f32 %v2848, %v2916
      %v2981 = vadd.f32 %v2849, %v2917
      %v2982 = vadd.f32 %v2850, %v2918
      %v2983 = vadd.f32 %v2851, %v2919
      %v2984 = vadd.f32 %v2852, %v2920
      %v2985 = vadd.f32 %v2853, %v2921
      %v2986 = vadd.f32 %v2854, %v2922
      %v2987 = vadd.f32 %v2855, %v2923
      %v2988 = vadd.f32 %v2856, %v2924
      %v2989 = vadd.f32 %v2857, %v2925
      %v2990 = vlaneseq
      %v2991 = vshrl.u32 %v2990, 7
      %v2992 = vsub.s32 2, %v2991
      %v2993 = vrot.slane %v2724, %v2992
      %v2994 = vmul.f32 %v2652, %v2993
      %v2995 = vmul.f32 %v2653, %v2993
      %v2996 = vmul.f32 %v2654, %v2993
      %v2997 = vmul.f32 %v2655, %v2993
      %v2998 = vmul.f32 %v2656, %v2993
      %v2999 = vmul.f32 %v2657, %v2993
      %v3000 = vmul.f32 %v2658, %v2993
      %v3001 = vmul.f32 %v2659, %v2993
      %v3002 = vmul.f32 %v2660, %v2993
      %v3003 = vmul.f32 %v2661, %v2993
      %v3004 = vmul.f32 %v2662, %v2993
      %v3005 = vmul.f32 %v2663, %v2993
      %v3006 = vmul.f32 %v2664, %v2993
      %v3007 = vmul.f32 %v2665, %v2993
      %v3008 = vmul.f32 %v2666, %v2993
      %v3009 = vmul.f32 %v2667, %v2993
      %v3010 = vmul.f32 %v2668, %v2993
      %v3011 = vmul.f32 %v2669, %v2993
      %v3012 = vmul.f32 %v2670, %v2993
      %v3013 = vmul.f32 %v2671, %v2993
      %v3014 = vmul.f32 %v2672, %v2993
      %v3015 = vmul.f32 %v2673, %v2993
      %v3016 = vmul.f32 %v2674, %v2993
      %v3017 = vmul.f32 %v2675, %v2993
      %v3018 = vmul.f32 %v2676, %v2993
      %v3019 = vmul.f32 %v2677, %v2993
      %v3020 = vmul.f32 %v2678, %v2993
      %v3021 = vmul.f32 %v2679, %v2993
      %v3022 = vmul.f32 %v2680, %v2993
      %v3023 = vmul.f32 %v2681, %v2993
      %v3024 = vmul.f32 %v2682, %v2993
      %v3025 = vmul.f32 %v2683, %v2993
      %v3026 = vmul.f32 %v2684, %v2993
      %v3027 = vmul.f32 %v2685, %v2993
      %v3028 = vmul.f32 %v2686, %v2993
      %v3029 = vmul.f32 %v2687, %v2993
      %v3030 = vmul.f32 %v2688, %v2993
      %v3031 = vmul.f32 %v2689, %v2993
      %v3032 = vmul.f32 %v2690, %v2993
      %v3033 = vmul.f32 %v2691, %v2993
      %v3034 = vmul.f32 %v2692, %v2993
      %v3035 = vmul.f32 %v2693, %v2993
      %v3036 = vmul.f32 %v2694, %v2993
      %v3037 = vmul.f32 %v2695, %v2993
      %v3038 = vmul.f32 %v2696, %v2993
      %v3039 = vmul.f32 %v2697, %v2993
      %v3040 = vmul.f32 %v2698, %v2993
      %v3041 = vmul.f32 %v2699, %v2993
      %v3042 = vmul.f32 %v2700, %v2993
      %v3043 = vmul.f32 %v2701, %v2993
      %v3044 = vmul.f32 %v2702, %v2993
      %v3045 = vmul.f32 %v2703, %v2993
      %v3046 = vmul.f32 %v2704, %v2993
      %v3047 = vmul.f32 %v2705, %v2993
      %v3048 = vmul.f32 %v2706, %v2993
      %v3049 = vmul.f32 %v2707, %v2993
      %v3050 = vmul.f32 %v2708, %v2993
      %v3051 = vmul.f32 %v2709, %v2993
      %v3052 = vmul.f32 %v2710, %v2993
      %v3053 = vmul.f32 %v2711, %v2993
      %v3054 = vmul.f32 %v2712, %v2993
      %v3055 = vmul.f32 %v2713, %v2993
      %v3056 = vmul.f32 %v2714, %v2993
      %v3057 = vmul.f32 %v2715, %v2993
      %v3058 = vadd.f32 %v2926, %v2994
      %v3059 = vadd.f32 %v2927, %v2995
      %v3060 = vadd.f32 %v2928, %v2996
      %v3061 = vadd.f32 %v2929, %v2997
      %v3062 = vadd.f32 %v2930, %v2998
      %v3063 = vadd.f32 %v2931, %v2999
      %v3064 = vadd.f32 %v2932, %v3000
      %v3065 = vadd.f32 %v2933, %v3001
      %v3066 = vadd.f32 %v2934, %v3002
      %v3067 = vadd.f32 %v2935, %v3003
      %v3068 = vadd.f32 %v2936, %v3004
      %v3069 = vadd.f32 %v2937, %v3005
      %v3070 = vadd.f32 %v2938, %v3006
      %v3071 = vadd.f32 %v2939, %v3007
      %v3072 = vadd.f32 %v2940, %v3008
      %v3073 = vadd.f32 %v2941, %v3009
      %v3074 = vadd.f32 %v2942, %v3010
      %v3075 = vadd.f32 %v2943, %v3011
      %v3076 = vadd.f32 %v2944, %v3012
      %v3077 = vadd.f32 %v2945, %v3013
      %v3078 = vadd.f32 %v2946, %v3014
      %v3079 = vadd.f32 %v2947, %v3015
      %v3080 = vadd.f32 %v2948, %v3016
      %v3081 = vadd.f32 %v2949, %v3017
      %v3082 = vadd.f32 %v2950, %v3018
      %v3083 = vadd.f32 %v2951, %v3019
      %v3084 = vadd.f32 %v2952, %v3020
      %v3085 = vadd.f32 %v2953, %v3021
      %v3086 = vadd.f32 %v2954, %v3022
      %v3087 = vadd.f32 %v2955, %v3023
      %v3088 = vadd.f32 %v2956, %v3024
      %v3089 = vadd.f32 %v2957, %v3025
      %v3090 = vadd.f32 %v2958, %v3026
      %v3091 = vadd.f32 %v2959, %v3027
      %v3092 = vadd.f32 %v2960, %v3028
      %v3093 = vadd.f32 %v2961, %v3029
      %v3094 = vadd.f32 %v2962, %v3030
      %v3095 = vadd.f32 %v2963, %v3031
      %v3096 = vadd.f32 %v2964, %v3032
      %v3097 = vadd.f32 %v2965, %v3033
      %v3098 = vadd.f32 %v2966, %v3034
      %v3099 = vadd.f32 %v2967, %v3035
      %v3100 = vadd.f32 %v2968, %v3036
      %v3101 = vadd.f32 %v2969, %v3037
      %v3102 = vadd.f32 %v2970, %v3038
      %v3103 = vadd.f32 %v2971, %v3039
      %v3104 = vadd.f32 %v2972, %v3040
      %v3105 = vadd.f32 %v2973, %v3041
      %v3106 = vadd.f32 %v2974, %v3042
      %v3107 = vadd.f32 %v2975, %v3043
      %v3108 = vadd.f32 %v2976, %v3044
      %v3109 = vadd.f32 %v2977, %v3045
      %v3110 = vadd.f32 %v2978, %v3046
      %v3111 = vadd.f32 %v2979, %v3047
      %v3112 = vadd.f32 %v2980, %v3048
      %v3113 = vadd.f32 %v2981, %v3049
      %v3114 = vadd.f32 %v2982, %v3050
      %v3115 = vadd.f32 %v2983, %v3051
      %v3116 = vadd.f32 %v2984, %v3052
      %v3117 = vadd.f32 %v2985, %v3053
      %v3118 = vadd.f32 %v2986, %v3054
      %v3119 = vadd.f32 %v2987, %v3055
      %v3120 = vadd.f32 %v2988, %v3056
      %v3121 = vadd.f32 %v2989, %v3057
      %v3122 = vlaneseq
      %v3123 = vshrl.u32 %v3122, 7
      %v3124 = vsub.s32 3, %v3123
      %v3125 = vrot.slane %v2724, %v3124
      %v3126 = vmul.f32 %v2007, %v3125
      %v3127 = vmul.f32 %v2008, %v3125
      %v3128 = vmul.f32 %v2009, %v3125
      %v3129 = vmul.f32 %v2010, %v3125
      %v3130 = vmul.f32 %v2011, %v3125
      %v3131 = vmul.f32 %v2012, %v3125
      %v3132 = vmul.f32 %v2013, %v3125
      %v3133 = vmul.f32 %v2014, %v3125
      %v3134 = vmul.f32 %v2015, %v3125
      %v3135 = vmul.f32 %v2016, %v3125
      %v3136 = vmul.f32 %v2017, %v3125
      %v3137 = vmul.f32 %v2018, %v3125
      %v3138 = vmul.f32 %v2019, %v3125
      %v3139 = vmul.f32 %v2020, %v3125
      %v3140 = vmul.f32 %v2021, %v3125
      %v3141 = vmul.f32 %v2022, %v3125
      %v3142 = vmul.f32 %v2023, %v3125
      %v3143 = vmul.f32 %v2024, %v3125
      %v3144 = vmul.f32 %v2025, %v3125
      %v3145 = vmul.f32 %v2026, %v3125
      %v3146 = vmul.f32 %v2027, %v3125
      %v3147 = vmul.f32 %v2028, %v3125
      %v3148 = vmul.f32 %v2029, %v3125
      %v3149 = vmul.f32 %v2030, %v3125
      %v3150 = vmul.f32 %v2031, %v3125
      %v3151 = vmul.f32 %v2032, %v3125
      %v3152 = vmul.f32 %v2033, %v3125
      %v3153 = vmul.f32 %v2034, %v3125
      %v3154 = vmul.f32 %v2035, %v3125
      %v3155 = vmul.f32 %v2036, %v3125
      %v3156 = vmul.f32 %v2037, %v3125
      %v3157 = vmul.f32 %v2038, %v3125
      %v3158 = vmul.f32 %v2039, %v3125
      %v3159 = vmul.f32 %v2040, %v3125
      %v3160 = vmul.f32 %v2041, %v3125
      %v3161 = vmul.f32 %v2042, %v3125
      %v3162 = vmul.f32 %v2043, %v3125
      %v3163 = vmul.f32 %v2044, %v3125
      %v3164 = vmul.f32 %v2045, %v3125
      %v3165 = vmul.f32 %v2046, %v3125
      %v3166 = vmul.f32 %v2047, %v3125
      %v3167 = vmul.f32 %v2048, %v3125
      %v3168 = vmul.f32 %v2049, %v3125
      %v3169 = vmul.f32 %v2050, %v3125
      %v3170 = vmul.f32 %v2051, %v3125
      %v3171 = vmul.f32 %v2052, %v3125
      %v3172 = vmul.f32 %v2053, %v3125
      %v3173 = vmul.f32 %v2054, %v3125
      %v3174 = vmul.f32 %v2055, %v3125
      %v3175 = vmul.f32 %v2056, %v3125
      %v3176 = vmul.f32 %v2057, %v3125
      %v3177 = vmul.f32 %v2058, %v3125
      %v3178 = vmul.f32 %v2059, %v3125
      %v3179 = vmul.f32 %v2060, %v3125
      %v3180 = vmul.f32 %v2061, %v3125
      %v3181 = vmul.f32 %v2062, %v3125
      %v3182 = vmul.f32 %v2063, %v3125
      %v3183 = vmul.f32 %v2064, %v3125
      %v3184 = vmul.f32 %v2065, %v3125
      %v3185 = vmul.f32 %v2066, %v3125
      %v3186 = vmul.f32 %v2067, %v3125
      %v3187 = vmul.f32 %v2068, %v3125
      %v3188 = vmul.f32 %v2069, %v3125
      %v3189 = vmul.f32 %v2070, %v3125
      %v3190 = vadd.f32 %v3058, %v3126
      %v3191 = vadd.f32 %v3059, %v3127
      %v3192 = vadd.f32 %v3060, %v3128
      %v3193 = vadd.f32 %v3061, %v3129
      %v3194 = vadd.f32 %v3062, %v3130
      %v3195 = vadd.f32 %v3063, %v3131
      %v3196 = vadd.f32 %v3064, %v3132
      %v3197 = vadd.f32 %v3065, %v3133
      %v3198 = vadd.f32 %v3066, %v3134
      %v3199 = vadd.f32 %v3067, %v3135
      %v3200 = vadd.f32 %v3068, %v3136
      %v3201 = vadd.f32 %v3069, %v3137
      %v3202 = vadd.f32 %v3070, %v3138
      %v3203 = vadd.f32 %v3071, %v3139
      %v3204 = vadd.f32 %v3072, %v3140
      %v3205 = vadd.f32 %v3073, %v3141
      %v3206 = vadd.f32 %v3074, %v3142
      %v3207 = vadd.f32 %v3075, %v3143
      %v3208 = vadd.f32 %v3076, %v3144
      %v3209 = vadd.f32 %v3077, %v3145
      %v3210 = vadd.f32 %v3078, %v3146
      %v3211 = vadd.f32 %v3079, %v3147
      %v3212 = vadd.f32 %v3080, %v3148
      %v3213 = vadd.f32 %v3081, %v3149
      %v3214 = vadd.f32 %v3082, %v3150
      %v3215 = vadd.f32 %v3083, %v3151
      %v3216 = vadd.f32 %v3084, %v3152
      %v3217 = vadd.f32 %v3085, %v3153
      %v3218 = vadd.f32 %v3086, %v3154
      %v3219 = vadd.f32 %v3087, %v3155
      %v3220 = vadd.f32 %v3088, %v3156
      %v3221 = vadd.f32 %v3089, %v3157
      %v3222 = vadd.f32 %v3090, %v3158
      %v3223 = vadd.f32 %v3091, %v3159
      %v3224 = vadd.f32 %v3092, %v3160
      %v3225 = vadd.f32 %v3093, %v3161
      %v3226 = vadd.f32 %v3094, %v3162
      %v3227 = vadd.f32 %v3095, %v3163
      %v3228 = vadd.f32 %v3096, %v3164
      %v3229 = vadd.f32 %v3097, %v3165
      %v3230 = vadd.f32 %v3098, %v3166
      %v3231 = vadd.f32 %v3099, %v3167
      %v3232 = vadd.f32 %v3100, %v3168
      %v3233 = vadd.f32 %v3101, %v3169
      %v3234 = vadd.f32 %v3102, %v3170
      %v3235 = vadd.f32 %v3103, %v3171
      %v3236 = vadd.f32 %v3104, %v3172
      %v3237 = vadd.f32 %v3105, %v3173
      %v3238 = vadd.f32 %v3106, %v3174
      %v3239 = vadd.f32 %v3107, %v3175
      %v3240 = vadd.f32 %v3108, %v3176
      %v3241 = vadd.f32 %v3109, %v3177
      %v3242 = vadd.f32 %v3110, %v3178
      %v3243 = vadd.f32 %v3111, %v3179
      %v3244 = vadd.f32 %v3112, %v3180
      %v3245 = vadd.f32 %v3113, %v3181
      %v3246 = vadd.f32 %v3114, %v3182
      %v3247 = vadd.f32 %v3115, %v3183
      %v3248 = vadd.f32 %v3116, %v3184
      %v3249 = vadd.f32 %v3117, %v3185
      %v3250 = vadd.f32 %v3118, %v3186
      %v3251 = vadd.f32 %v3119, %v3187
      %v3252 = vadd.f32 %v3120, %v3188
      %v3253 = vadd.f32 %v3121, %v3189
      %v3254 = vlaneseq
      %v3255 = vshrl.u32 %v3254, 7
      %v3256 = vsub.s32 4, %v3255
      %v3257 = vrot.slane %v2724, %v3256
      %v3258 = vmul.f32 %v955, %v3257
      %v3259 = vmul.f32 %v959, %v3257
      %v3260 = vmul.f32 %v965, %v3257
      %v3261 = vmul.f32 %v969, %v3257
      %v3262 = vmul.f32 %v975, %v3257
      %v3263 = vmul.f32 %v979, %v3257
      %v3264 = vmul.f32 %v985, %v3257
      %v3265 = vmul.f32 %v989, %v3257
      %v3266 = vmul.f32 %v995, %v3257
      %v3267 = vmul.f32 %v999, %v3257
      %v3268 = vmul.f32 %v1005, %v3257
      %v3269 = vmul.f32 %v1009, %v3257
      %v3270 = vmul.f32 %v1015, %v3257
      %v3271 = vmul.f32 %v1019, %v3257
      %v3272 = vmul.f32 %v1025, %v3257
      %v3273 = vmul.f32 %v1029, %v3257
      %v3274 = vmul.f32 %v1035, %v3257
      %v3275 = vmul.f32 %v1039, %v3257
      %v3276 = vmul.f32 %v1045, %v3257
      %v3277 = vmul.f32 %v1049, %v3257
      %v3278 = vmul.f32 %v1055, %v3257
      %v3279 = vmul.f32 %v1059, %v3257
      %v3280 = vmul.f32 %v1065, %v3257
      %v3281 = vmul.f32 %v1069, %v3257
      %v3282 = vmul.f32 %v1075, %v3257
      %v3283 = vmul.f32 %v1079, %v3257
      %v3284 = vmul.f32 %v1085, %v3257
      %v3285 = vmul.f32 %v1089, %v3257
      %v3286 = vmul.f32 %v1095, %v3257
      %v3287 = vmul.f32 %v1099, %v3257
      %v3288 = vmul.f32 %v1105, %v3257
      %v3289 = vmul.f32 %v1109, %v3257
      %v3290 = vmul.f32 %v1115, %v3257
      %v3291 = vmul.f32 %v1119, %v3257
      %v3292 = vmul.f32 %v1125, %v3257
      %v3293 = vmul.f32 %v1129, %v3257
      %v3294 = vmul.f32 %v1135, %v3257
      %v3295 = vmul.f32 %v1139, %v3257
      %v3296 = vmul.f32 %v1145, %v3257
      %v3297 = vmul.f32 %v1149, %v3257
      %v3298 = vmul.f32 %v1155, %v3257
      %v3299 = vmul.f32 %v1159, %v3257
      %v3300 = vmul.f32 %v1165, %v3257
      %v3301 = vmul.f32 %v1169, %v3257
      %v3302 = vmul.f32 %v1175, %v3257
      %v3303 = vmul.f32 %v1179, %v3257
      %v3304 = vmul.f32 %v1185, %v3257
      %v3305 = vmul.f32 %v1189, %v3257
      %v3306 = vmul.f32 %v1195, %v3257
      %v3307 = vmul.f32 %v1199, %v3257
      %v3308 = vmul.f32 %v1205, %v3257
      %v3309 = vmul.f32 %v1209, %v3257
      %v3310 = vmul.f32 %v1215, %v3257
      %v3311 = vmul.f32 %v1219, %v3257
      %v3312 = vmul.f32 %v1225, %v3257
      %v3313 = vmul.f32 %v1229, %v3257
      %v3314 = vmul.f32 %v1235, %v3257
      %v3315 = vmul.f32 %v1239, %v3257
      %v3316 = vmul.f32 %v1245, %v3257
      %v3317 = vmul.f32 %v1249, %v3257
      %v3318 = vmul.f32 %v1255, %v3257
      %v3319 = vmul.f32 %v1259, %v3257
      %v3320 = vmul.f32 %v1265, %v3257
      %v3321 = vmul.f32 %v1269, %v3257
      %v3322 = vadd.f32 %v3190, %v3258
      %v3323 = vadd.f32 %v3191, %v3259
      %v3324 = vadd.f32 %v3192, %v3260
      %v3325 = vadd.f32 %v3193, %v3261
      %v3326 = vadd.f32 %v3194, %v3262
      %v3327 = vadd.f32 %v3195, %v3263
      %v3328 = vadd.f32 %v3196, %v3264
      %v3329 = vadd.f32 %v3197, %v3265
      %v3330 = vadd.f32 %v3198, %v3266
      %v3331 = vadd.f32 %v3199, %v3267
      %v3332 = vadd.f32 %v3200, %v3268
      %v3333 = vadd.f32 %v3201, %v3269
      %v3334 = vadd.f32 %v3202, %v3270
      %v3335 = vadd.f32 %v3203, %v3271
      %v3336 = vadd.f32 %v3204, %v3272
      %v3337 = vadd.f32 %v3205, %v3273
      %v3338 = vadd.f32 %v3206, %v3274
      %v3339 = vadd.f32 %v3207, %v3275
      %v3340 = vadd.f32 %v3208, %v3276
      %v3341 = vadd.f32 %v3209, %v3277
      %v3342 = vadd.f32 %v3210, %v3278
      %v3343 = vadd.f32 %v3211, %v3279
      %v3344 = vadd.f32 %v3212, %v3280
      %v3345 = vadd.f32 %v3213, %v3281
      %v3346 = vadd.f32 %v3214, %v3282
      %v3347 = vadd.f32 %v3215, %v3283
      %v3348 = vadd.f32 %v3216, %v3284
      %v3349 = vadd.f32 %v3217, %v3285
      %v3350 = vadd.f32 %v3218, %v3286
      %v3351 = vadd.f32 %v3219, %v3287
      %v3352 = vadd.f32 %v3220, %v3288
      %v3353 = vadd.f32 %v3221, %v3289
      %v3354 = vadd.f32 %v3222, %v3290
      %v3355 = vadd.f32 %v3223, %v3291
      %v3356 = vadd.f32 %v3224, %v3292
      %v3357 = vadd.f32 %v3225, %v3293
      %v3358 = vadd.f32 %v3226, %v3294
      %v3359 = vadd.f32 %v3227, %v3295
      %v3360 = vadd.f32 %v3228, %v3296
      %v3361 = vadd.f32 %v3229, %v3297
      %v3362 = vadd.f32 %v3230, %v3298
      %v3363 = vadd.f32 %v3231, %v3299
      %v3364 = vadd.f32 %v3232, %v3300
      %v3365 = vadd.f32 %v3233, %v3301
      %v3366 = vadd.f32 %v3234, %v3302
      %v3367 = vadd.f32 %v3235, %v3303
      %v3368 = vadd.f32 %v3236, %v3304
      %v3369 = vadd.f32 %v3237, %v3305
      %v3370 = vadd.f32 %v3238, %v3306
      %v3371 = vadd.f32 %v3239, %v3307
      %v3372 = vadd.f32 %v3240, %v3308
      %v3373 = vadd.f32 %v3241, %v3309
      %v3374 = vadd.f32 %v3242, %v3310
      %v3375 = vadd.f32 %v3243, %v3311
      %v3376 = vadd.f32 %v3244, %v3312
      %v3377 = vadd.f32 %v3245, %v3313
      %v3378 = vadd.f32 %v3246, %v3314
      %v3379 = vadd.f32 %v3247, %v3315
      %v3380 = vadd.f32 %v3248, %v3316
      %v3381 = vadd.f32 %v3249, %v3317
      %v3382 = vadd.f32 %v3250, %v3318
      %v3383 = vadd.f32 %v3251, %v3319
      %v3384 = vadd.f32 %v3252, %v3320
      %v3385 = vadd.f32 %v3253, %v3321
      %v3386 = vlaneseq
      %v3387 = vshrl.u32 %v3386, 7
      %v3388 = vsub.s32 5, %v3387
      %v3389 = vrot.slane %v2724, %v3388
      %v3390 = vmul.f32 %v2656, %v3389
      %v3391 = vmul.f32 %v2657, %v3389
      %v3392 = vmul.f32 %v2658, %v3389
      %v3393 = vmul.f32 %v2659, %v3389
      %v3394 = vmul.f32 %v2660, %v3389
      %v3395 = vmul.f32 %v2661, %v3389
      %v3396 = vmul.f32 %v2662, %v3389
      %v3397 = vmul.f32 %v2663, %v3389
      %v3398 = vmul.f32 %v2664, %v3389
      %v3399 = vmul.f32 %v2665, %v3389
      %v3400 = vmul.f32 %v2666, %v3389
      %v3401 = vmul.f32 %v2667, %v3389
      %v3402 = vmul.f32 %v2668, %v3389
      %v3403 = vmul.f32 %v2669, %v3389
      %v3404 = vmul.f32 %v2670, %v3389
      %v3405 = vmul.f32 %v2671, %v3389
      %v3406 = vmul.f32 %v2672, %v3389
      %v3407 = vmul.f32 %v2673, %v3389
      %v3408 = vmul.f32 %v2674, %v3389
      %v3409 = vmul.f32 %v2675, %v3389
      %v3410 = vmul.f32 %v2676, %v3389
      %v3411 = vmul.f32 %v2677, %v3389
      %v3412 = vmul.f32 %v2678, %v3389
      %v3413 = vmul.f32 %v2679, %v3389
      %v3414 = vmul.f32 %v2680, %v3389
      %v3415 = vmul.f32 %v2681, %v3389
      %v3416 = vmul.f32 %v2682, %v3389
      %v3417 = vmul.f32 %v2683, %v3389
      %v3418 = vmul.f32 %v2684, %v3389
      %v3419 = vmul.f32 %v2685, %v3389
      %v3420 = vmul.f32 %v2686, %v3389
      %v3421 = vmul.f32 %v2687, %v3389
      %v3422 = vmul.f32 %v2688, %v3389
      %v3423 = vmul.f32 %v2689, %v3389
      %v3424 = vmul.f32 %v2690, %v3389
      %v3425 = vmul.f32 %v2691, %v3389
      %v3426 = vmul.f32 %v2692, %v3389
      %v3427 = vmul.f32 %v2693, %v3389
      %v3428 = vmul.f32 %v2694, %v3389
      %v3429 = vmul.f32 %v2695, %v3389
      %v3430 = vmul.f32 %v2696, %v3389
      %v3431 = vmul.f32 %v2697, %v3389
      %v3432 = vmul.f32 %v2698, %v3389
      %v3433 = vmul.f32 %v2699, %v3389
      %v3434 = vmul.f32 %v2700, %v3389
      %v3435 = vmul.f32 %v2701, %v3389
      %v3436 = vmul.f32 %v2702, %v3389
      %v3437 = vmul.f32 %v2703, %v3389
      %v3438 = vmul.f32 %v2704, %v3389
      %v3439 = vmul.f32 %v2705, %v3389
      %v3440 = vmul.f32 %v2706, %v3389
      %v3441 = vmul.f32 %v2707, %v3389
      %v3442 = vmul.f32 %v2708, %v3389
      %v3443 = vmul.f32 %v2709, %v3389
      %v3444 = vmul.f32 %v2710, %v3389
      %v3445 = vmul.f32 %v2711, %v3389
      %v3446 = vmul.f32 %v2712, %v3389
      %v3447 = vmul.f32 %v2713, %v3389
      %v3448 = vmul.f32 %v2714, %v3389
      %v3449 = vmul.f32 %v2715, %v3389
      %v3450 = vmul.f32 %v2716, %v3389
      %v3451 = vmul.f32 %v2717, %v3389
      %v3452 = vmul.f32 %v2718, %v3389
      %v3453 = vmul.f32 %v2719, %v3389
      %v3454 = vadd.f32 %v3322, %v3390
      %v3455 = vadd.f32 %v3323, %v3391
      %v3456 = vadd.f32 %v3324, %v3392
      %v3457 = vadd.f32 %v3325, %v3393
      %v3458 = vadd.f32 %v3326, %v3394
      %v3459 = vadd.f32 %v3327, %v3395
      %v3460 = vadd.f32 %v3328, %v3396
      %v3461 = vadd.f32 %v3329, %v3397
      %v3462 = vadd.f32 %v3330, %v3398
      %v3463 = vadd.f32 %v3331, %v3399
      %v3464 = vadd.f32 %v3332, %v3400
      %v3465 = vadd.f32 %v3333, %v3401
      %v3466 = vadd.f32 %v3334, %v3402
      %v3467 = vadd.f32 %v3335, %v3403
      %v3468 = vadd.f32 %v3336, %v3404
      %v3469 = vadd.f32 %v3337, %v3405
      %v3470 = vadd.f32 %v3338, %v3406
      %v3471 = vadd.f32 %v3339, %v3407
      %v3472 = vadd.f32 %v3340, %v3408
      %v3473 = vadd.f32 %v3341, %v3409
      %v3474 = vadd.f32 %v3342, %v3410
      %v3475 = vadd.f32 %v3343, %v3411
      %v3476 = vadd.f32 %v3344, %v3412
      %v3477 = vadd.f32 %v3345, %v3413
      %v3478 = vadd.f32 %v3346, %v3414
      %v3479 = vadd.f32 %v3347, %v3415
      %v3480 = vadd.f32 %v3348, %v3416
      %v3481 = vadd.f32 %v3349, %v3417
      %v3482 = vadd.f32 %v3350, %v3418
      %v3483 = vadd.f32 %v3351, %v3419
      %v3484 = vadd.f32 %v3352, %v3420
      %v3485 = vadd.f32 %v3353, %v3421
      %v3486 = vadd.f32 %v3354, %v3422
      %v3487 = vadd.f32 %v3355, %v3423
      %v3488 = vadd.f32 %v3356, %v3424
      %v3489 = vadd.f32 %v3357, %v3425
      %v3490 = vadd.f32 %v3358, %v3426
      %v3491 = vadd.f32 %v3359, %v3427
      %v3492 = vadd.f32 %v3360, %v3428
      %v3493 = vadd.f32 %v3361, %v3429
      %v3494 = vadd.f32 %v3362, %v3430
      %v3495 = vadd.f32 %v3363, %v3431
      %v3496 = vadd.f32 %v3364, %v3432
      %v3497 = vadd.f32 %v3365, %v3433
      %v3498 = vadd.f32 %v3366, %v3434
      %v3499 = vadd.f32 %v3367, %v3435
      %v3500 = vadd.f32 %v3368, %v3436
      %v3501 = vadd.f32 %v3369, %v3437
      %v3502 = vadd.f32 %v3370, %v3438
      %v3503 = vadd.f32 %v3371, %v3439
      %v3504 = vadd.f32 %v3372, %v3440
      %v3505 = vadd.f32 %v3373, %v3441
      %v3506 = vadd.f32 %v3374, %v3442
      %v3507 = vadd.f32 %v3375, %v3443
      %v3508 = vadd.f32 %v3376, %v3444
      %v3509 = vadd.f32 %v3377, %v3445
      %v3510 = vadd.f32 %v3378, %v3446
      %v3511 = vadd.f32 %v3379, %v3447
      %v3512 = vadd.f32 %v3380, %v3448
      %v3513 = vadd.f32 %v3381, %v3449
      %v3514 = vadd.f32 %v3382, %v3450
      %v3515 = vadd.f32 %v3383, %v3451
      %v3516 = vadd.f32 %v3384, %v3452
      %v3517 = vadd.f32 %v3385, %v3453
      %v3518 = vlaneseq
      %v3519 = vshrl.u32 %v3518, 7
      %v3520 = vsub.s32 6, %v3519
      %v3521 = vrot.slane %v2724, %v3520
      %v3522 = vmul.f32 %v2011, %v3521
      %v3523 = vmul.f32 %v2012, %v3521
      %v3524 = vmul.f32 %v2013, %v3521
      %v3525 = vmul.f32 %v2014, %v3521
      %v3526 = vmul.f32 %v2015, %v3521
      %v3527 = vmul.f32 %v2016, %v3521
      %v3528 = vmul.f32 %v2017, %v3521
      %v3529 = vmul.f32 %v2018, %v3521
      %v3530 = vmul.f32 %v2019, %v3521
      %v3531 = vmul.f32 %v2020, %v3521
      %v3532 = vmul.f32 %v2021, %v3521
      %v3533 = vmul.f32 %v2022, %v3521
      %v3534 = vmul.f32 %v2023, %v3521
      %v3535 = vmul.f32 %v2024, %v3521
      %v3536 = vmul.f32 %v2025, %v3521
      %v3537 = vmul.f32 %v2026, %v3521
      %v3538 = vmul.f32 %v2027, %v3521
      %v3539 = vmul.f32 %v2028, %v3521
      %v3540 = vmul.f32 %v2029, %v3521
      %v3541 = vmul.f32 %v2030, %v3521
      %v3542 = vmul.f32 %v2031, %v3521
      %v3543 = vmul.f32 %v2032, %v3521
      %v3544 = vmul.f32 %v2033, %v3521
      %v3545 = vmul.f32 %v2034, %v3521
      %v3546 = vmul.f32 %v2035, %v3521
      %v3547 = vmul.f32 %v2036, %v3521
      %v3548 = vmul.f32 %v2037, %v3521
      %v3549 = vmul.f32 %v2038, %v3521
      %v3550 = vmul.f32 %v2039, %v3521
      %v3551 = vmul.f32 %v2040, %v3521
      %v3552 = vmul.f32 %v2041, %v3521
      %v3553 = vmul.f32 %v2042, %v3521
      %v3554 = vmul.f32 %v2043, %v3521
      %v3555 = vmul.f32 %v2044, %v3521
      %v3556 = vmul.f32 %v2045, %v3521
      %v3557 = vmul.f32 %v2046, %v3521
      %v3558 = vmul.f32 %v2047, %v3521
      %v3559 = vmul.f32 %v2048, %v3521
      %v3560 = vmul.f32 %v2049, %v3521
      %v3561 = vmul.f32 %v2050, %v3521
      %v3562 = vmul.f32 %v2051, %v3521
      %v3563 = vmul.f32 %v2052, %v3521
      %v3564 = vmul.f32 %v2053, %v3521
      %v3565 = vmul.f32 %v2054, %v3521
      %v3566 = vmul.f32 %v2055, %v3521
      %v3567 = vmul.f32 %v2056, %v3521
      %v3568 = vmul.f32 %v2057, %v3521
      %v3569 = vmul.f32 %v2058, %v3521
      %v3570 = vmul.f32 %v2059, %v3521
      %v3571 = vmul.f32 %v2060, %v3521
      %v3572 = vmul.f32 %v2061, %v3521
      %v3573 = vmul.f32 %v2062, %v3521
      %v3574 = vmul.f32 %v2063, %v3521
      %v3575 = vmul.f32 %v2064, %v3521
      %v3576 = vmul.f32 %v2065, %v3521
      %v3577 = vmul.f32 %v2066, %v3521
      %v3578 = vmul.f32 %v2067, %v3521
      %v3579 = vmul.f32 %v2068, %v3521
      %v3580 = vmul.f32 %v2069, %v3521
      %v3581 = vmul.f32 %v2070, %v3521
      %v3582 = vmul.f32 %v2071, %v3521
      %v3583 = vmul.f32 %v2072, %v3521
      %v3584 = vmul.f32 %v2073, %v3521
      %v3585 = vmul.f32 %v2074, %v3521
      %v3586 = vadd.f32 %v3454, %v3522
      %v3587 = vadd.f32 %v3455, %v3523
      %v3588 = vadd.f32 %v3456, %v3524
      %v3589 = vadd.f32 %v3457, %v3525
      %v3590 = vadd.f32 %v3458, %v3526
      %v3591 = vadd.f32 %v3459, %v3527
      %v3592 = vadd.f32 %v3460, %v3528
      %v3593 = vadd.f32 %v3461, %v3529
      %v3594 = vadd.f32 %v3462, %v3530
      %v3595 = vadd.f32 %v3463, %v3531
      %v3596 = vadd.f32 %v3464, %v3532
      %v3597 = vadd.f32 %v3465, %v3533
      %v3598 = vadd.f32 %v3466, %v3534
      %v3599 = vadd.f32 %v3467, %v3535
      %v3600 = vadd.f32 %v3468, %v3536
      %v3601 = vadd.f32 %v3469, %v3537
      %v3602 = vadd.f32 %v3470, %v3538
      %v3603 = vadd.f32 %v3471, %v3539
      %v3604 = vadd.f32 %v3472, %v3540
      %v3605 = vadd.f32 %v3473, %v3541
      %v3606 = vadd.f32 %v3474, %v3542
      %v3607 = vadd.f32 %v3475, %v3543
      %v3608 = vadd.f32 %v3476, %v3544
      %v3609 = vadd.f32 %v3477, %v3545
      %v3610 = vadd.f32 %v3478, %v3546
      %v3611 = vadd.f32 %v3479, %v3547
      %v3612 = vadd.f32 %v3480, %v3548
      %v3613 = vadd.f32 %v3481, %v3549
      %v3614 = vadd.f32 %v3482, %v3550
      %v3615 = vadd.f32 %v3483, %v3551
      %v3616 = vadd.f32 %v3484, %v3552
      %v3617 = vadd.f32 %v3485, %v3553
      %v3618 = vadd.f32 %v3486, %v3554
      %v3619 = vadd.f32 %v3487, %v3555
      %v3620 = vadd.f32 %v3488, %v3556
      %v3621 = vadd.f32 %v3489, %v3557
      %v3622 = vadd.f32 %v3490, %v3558
      %v3623 = vadd.f32 %v3491, %v3559
      %v3624 = vadd.f32 %v3492, %v3560
      %v3625 = vadd.f32 %v3493, %v3561
      %v3626 = vadd.f32 %v3494, %v3562
      %v3627 = vadd.f32 %v3495, %v3563
      %v3628 = vadd.f32 %v3496, %v3564
      %v3629 = vadd.f32 %v3497, %v3565
      %v3630 = vadd.f32 %v3498, %v3566
      %v3631 = vadd.f32 %v3499, %v3567
      %v3632 = vadd.f32 %v3500, %v3568
      %v3633 = vadd.f32 %v3501, %v3569
      %v3634 = vadd.f32 %v3502, %v3570
      %v3635 = vadd.f32 %v3503, %v3571
      %v3636 = vadd.f32 %v3504, %v3572
      %v3637 = vadd.f32 %v3505, %v3573
      %v3638 = vadd.f32 %v3506, %v3574
      %v3639 = vadd.f32 %v3507, %v3575
      %v3640 = vadd.f32 %v3508, %v3576
      %v3641 = vadd.f32 %v3509, %v3577
      %v3642 = vadd.f32 %v3510, %v3578
      %v3643 = vadd.f32 %v3511, %v3579
      %v3644 = vadd.f32 %v3512, %v3580
      %v3645 = vadd.f32 %v3513, %v3581
      %v3646 = vadd.f32 %v3514, %v3582
      %v3647 = vadd.f32 %v3515, %v3583
      %v3648 = vadd.f32 %v3516, %v3584
      %v3649 = vadd.f32 %v3517, %v3585
      %v3650 = vlaneseq
      %v3651 = vshrl.u32 %v3650, 7
      %v3652 = vsub.s32 7, %v3651
      %v3653 = vrot.slane %v2724, %v3652
      %v3654 = vmul.f32 %v975, %v3653
      %v3655 = vmul.f32 %v979, %v3653
      %v3656 = vmul.f32 %v985, %v3653
      %v3657 = vmul.f32 %v989, %v3653
      %v3658 = vmul.f32 %v995, %v3653
      %v3659 = vmul.f32 %v999, %v3653
      %v3660 = vmul.f32 %v1005, %v3653
      %v3661 = vmul.f32 %v1009, %v3653
      %v3662 = vmul.f32 %v1015, %v3653
      %v3663 = vmul.f32 %v1019, %v3653
      %v3664 = vmul.f32 %v1025, %v3653
      %v3665 = vmul.f32 %v1029, %v3653
      %v3666 = vmul.f32 %v1035, %v3653
      %v3667 = vmul.f32 %v1039, %v3653
      %v3668 = vmul.f32 %v1045, %v3653
      %v3669 = vmul.f32 %v1049, %v3653
      %v3670 = vmul.f32 %v1055, %v3653
      %v3671 = vmul.f32 %v1059, %v3653
      %v3672 = vmul.f32 %v1065, %v3653
      %v3673 = vmul.f32 %v1069, %v3653
      %v3674 = vmul.f32 %v1075, %v3653
      %v3675 = vmul.f32 %v1079, %v3653
      %v3676 = vmul.f32 %v1085, %v3653
      %v3677 = vmul.f32 %v1089, %v3653
      %v3678 = vmul.f32 %v1095, %v3653
      %v3679 = vmul.f32 %v1099, %v3653
      %v3680 = vmul.f32 %v1105, %v3653
      %v3681 = vmul.f32 %v1109, %v3653
      %v3682 = vmul.f32 %v1115, %v3653
      %v3683 = vmul.f32 %v1119, %v3653
      %v3684 = vmul.f32 %v1125, %v3653
      %v3685 = vmul.f32 %v1129, %v3653
      %v3686 = vmul.f32 %v1135, %v3653
      %v3687 = vmul.f32 %v1139, %v3653
      %v3688 = vmul.f32 %v1145, %v3653
      %v3689 = vmul.f32 %v1149, %v3653
      %v3690 = vmul.f32 %v1155, %v3653
      %v3691 = vmul.f32 %v1159, %v3653
      %v3692 = vmul.f32 %v1165, %v3653
      %v3693 = vmul.f32 %v1169, %v3653
      %v3694 = vmul.f32 %v1175, %v3653
      %v3695 = vmul.f32 %v1179, %v3653
      %v3696 = vmul.f32 %v1185, %v3653
      %v3697 = vmul.f32 %v1189, %v3653
      %v3698 = vmul.f32 %v1195, %v3653
      %v3699 = vmul.f32 %v1199, %v3653
      %v3700 = vmul.f32 %v1205, %v3653
      %v3701 = vmul.f32 %v1209, %v3653
      %v3702 = vmul.f32 %v1215, %v3653
      %v3703 = vmul.f32 %v1219, %v3653
      %v3704 = vmul.f32 %v1225, %v3653
      %v3705 = vmul.f32 %v1229, %v3653
      %v3706 = vmul.f32 %v1235, %v3653
      %v3707 = vmul.f32 %v1239, %v3653
      %v3708 = vmul.f32 %v1245, %v3653
      %v3709 = vmul.f32 %v1249, %v3653
      %v3710 = vmul.f32 %v1255, %v3653
      %v3711 = vmul.f32 %v1259, %v3653
      %v3712 = vmul.f32 %v1265, %v3653
      %v3713 = vmul.f32 %v1269, %v3653
      %v3714 = vmul.f32 %v1420, %v3653
      %v3715 = vmul.f32 %v1421, %v3653
      %v3716 = vmul.f32 %v1422, %v3653
      %v3717 = vmul.f32 %v1423, %v3653
      %v3718 = vadd.f32 %v3586, %v3654
      %v3719 = vadd.f32 %v3587, %v3655
      %v3720 = vadd.f32 %v3588, %v3656
      %v3721 = vadd.f32 %v3589, %v3657
      %v3722 = vadd.f32 %v3590, %v3658
      %v3723 = vadd.f32 %v3591, %v3659
      %v3724 = vadd.f32 %v3592, %v3660
      %v3725 = vadd.f32 %v3593, %v3661
      %v3726 = vadd.f32 %v3594, %v3662
      %v3727 = vadd.f32 %v3595, %v3663
      %v3728 = vadd.f32 %v3596, %v3664
      %v3729 = vadd.f32 %v3597, %v3665
      %v3730 = vadd.f32 %v3598, %v3666
      %v3731 = vadd.f32 %v3599, %v3667
      %v3732 = vadd.f32 %v3600, %v3668
      %v3733 = vadd.f32 %v3601, %v3669
      %v3734 = vadd.f32 %v3602, %v3670
      %v3735 = vadd.f32 %v3603, %v3671
      %v3736 = vadd.f32 %v3604, %v3672
      %v3737 = vadd.f32 %v3605, %v3673
      %v3738 = vadd.f32 %v3606, %v3674
      %v3739 = vadd.f32 %v3607, %v3675
      %v3740 = vadd.f32 %v3608, %v3676
      %v3741 = vadd.f32 %v3609, %v3677
      %v3742 = vadd.f32 %v3610, %v3678
      %v3743 = vadd.f32 %v3611, %v3679
      %v3744 = vadd.f32 %v3612, %v3680
      %v3745 = vadd.f32 %v3613, %v3681
      %v3746 = vadd.f32 %v3614, %v3682
      %v3747 = vadd.f32 %v3615, %v3683
      %v3748 = vadd.f32 %v3616, %v3684
      %v3749 = vadd.f32 %v3617, %v3685
      %v3750 = vadd.f32 %v3618, %v3686
      %v3751 = vadd.f32 %v3619, %v3687
      %v3752 = vadd.f32 %v3620, %v3688
      %v3753 = vadd.f32 %v3621, %v3689
      %v3754 = vadd.f32 %v3622, %v3690
      %v3755 = vadd.f32 %v3623, %v3691
      %v3756 = vadd.f32 %v3624, %v3692
      %v3757 = vadd.f32 %v3625, %v3693
      %v3758 = vadd.f32 %v3626, %v3694
      %v3759 = vadd.f32 %v3627, %v3695
      %v3760 = vadd.f32 %v3628, %v3696
      %v3761 = vadd.f32 %v3629, %v3697
      %v3762 = vadd.f32 %v3630, %v3698
      %v3763 = vadd.f32 %v3631, %v3699
      %v3764 = vadd.f32 %v3632, %v3700
      %v3765 = vadd.f32 %v3633, %v3701
      %v3766 = vadd.f32 %v3634, %v3702
      %v3767 = vadd.f32 %v3635, %v3703
      %v3768 = vadd.f32 %v3636, %v3704
      %v3769 = vadd.f32 %v3637, %v3705
      %v3770 = vadd.f32 %v3638, %v3706
      %v3771 = vadd.f32 %v3639, %v3707
      %v3772 = vadd.f32 %v3640, %v3708
      %v3773 = vadd.f32 %v3641, %v3709
      %v3774 = vadd.f32 %v3642, %v3710
      %v3775 = vadd.f32 %v3643, %v3711
      %v3776 = vadd.f32 %v3644, %v3712
      %v3777 = vadd.f32 %v3645, %v3713
      %v3778 = vadd.f32 %v3646, %v3714
      %v3779 = vadd.f32 %v3647, %v3715
      %v3780 = vadd.f32 %v3648, %v3716
      %v3781 = vadd.f32 %v3649, %v3717
      %v3782 = vlaneseq
      %v3783 = vshrl.u32 %v3782, 7
      %v3784 = vsub.s32 0, %v3783
      %v3785 = vrot.slane %v2725, %v3784
      %v3786 = vmul.f32 %v2660, %v3785
      %v3787 = vmul.f32 %v2661, %v3785
      %v3788 = vmul.f32 %v2662, %v3785
      %v3789 = vmul.f32 %v2663, %v3785
      %v3790 = vmul.f32 %v2664, %v3785
      %v3791 = vmul.f32 %v2665, %v3785
      %v3792 = vmul.f32 %v2666, %v3785
      %v3793 = vmul.f32 %v2667, %v3785
      %v3794 = vmul.f32 %v2668, %v3785
      %v3795 = vmul.f32 %v2669, %v3785
      %v3796 = vmul.f32 %v2670, %v3785
      %v3797 = vmul.f32 %v2671, %v3785
      %v3798 = vmul.f32 %v2672, %v3785
      %v3799 = vmul.f32 %v2673, %v3785
      %v3800 = vmul.f32 %v2674, %v3785
      %v3801 = vmul.f32 %v2675, %v3785
      %v3802 = vmul.f32 %v2676, %v3785
      %v3803 = vmul.f32 %v2677, %v3785
      %v3804 = vmul.f32 %v2678, %v3785
      %v3805 = vmul.f32 %v2679, %v3785
      %v3806 = vmul.f32 %v2680, %v3785
      %v3807 = vmul.f32 %v2681, %v3785
      %v3808 = vmul.f32 %v2682, %v3785
      %v3809 = vmul.f32 %v2683, %v3785
      %v3810 = vmul.f32 %v2684, %v3785
      %v3811 = vmul.f32 %v2685, %v3785
      %v3812 = vmul.f32 %v2686, %v3785
      %v3813 = vmul.f32 %v2687, %v3785
      %v3814 = vmul.f32 %v2688, %v3785
      %v3815 = vmul.f32 %v2689, %v3785
      %v3816 = vmul.f32 %v2690, %v3785
      %v3817 = vmul.f32 %v2691, %v3785
      %v3818 = vmul.f32 %v2692, %v3785
      %v3819 = vmul.f32 %v2693, %v3785
      %v3820 = vmul.f32 %v2694, %v3785
      %v3821 = vmul.f32 %v2695, %v3785
      %v3822 = vmul.f32 %v2696, %v3785
      %v3823 = vmul.f32 %v2697, %v3785
      %v3824 = vmul.f32 %v2698, %v3785
      %v3825 = vmul.f32 %v2699, %v3785
      %v3826 = vmul.f32 %v2700, %v3785
      %v3827 = vmul.f32 %v2701, %v3785
      %v3828 = vmul.f32 %v2702, %v3785
      %v3829 = vmul.f32 %v2703, %v3785
      %v3830 = vmul.f32 %v2704, %v3785
      %v3831 = vmul.f32 %v2705, %v3785
      %v3832 = vmul.f32 %v2706, %v3785
      %v3833 = vmul.f32 %v2707, %v3785
      %v3834 = vmul.f32 %v2708, %v3785
      %v3835 = vmul.f32 %v2709, %v3785
      %v3836 = vmul.f32 %v2710, %v3785
      %v3837 = vmul.f32 %v2711, %v3785
      %v3838 = vmul.f32 %v2712, %v3785
      %v3839 = vmul.f32 %v2713, %v3785
      %v3840 = vmul.f32 %v2714, %v3785
      %v3841 = vmul.f32 %v2715, %v3785
      %v3842 = vmul.f32 %v2716, %v3785
      %v3843 = vmul.f32 %v2717, %v3785
      %v3844 = vmul.f32 %v2718, %v3785
      %v3845 = vmul.f32 %v2719, %v3785
      %v3846 = vmul.f32 %v2720, %v3785
      %v3847 = vmul.f32 %v2721, %v3785
      %v3848 = vmul.f32 %v2722, %v3785
      %v3849 = vmul.f32 %v2723, %v3785
      %v3850 = vadd.f32 %v3718, %v3786
      %v3851 = vadd.f32 %v3719, %v3787
      %v3852 = vadd.f32 %v3720, %v3788
      %v3853 = vadd.f32 %v3721, %v3789
      %v3854 = vadd.f32 %v3722, %v3790
      %v3855 = vadd.f32 %v3723, %v3791
      %v3856 = vadd.f32 %v3724, %v3792
      %v3857 = vadd.f32 %v3725, %v3793
      %v3858 = vadd.f32 %v3726, %v3794
      %v3859 = vadd.f32 %v3727, %v3795
      %v3860 = vadd.f32 %v3728, %v3796
      %v3861 = vadd.f32 %v3729, %v3797
      %v3862 = vadd.f32 %v3730, %v3798
      %v3863 = vadd.f32 %v3731, %v3799
      %v3864 = vadd.f32 %v3732, %v3800
      %v3865 = vadd.f32 %v3733, %v3801
      %v3866 = vadd.f32 %v3734, %v3802
      %v3867 = vadd.f32 %v3735, %v3803
      %v3868 = vadd.f32 %v3736, %v3804
      %v3869 = vadd.f32 %v3737, %v3805
      %v3870 = vadd.f32 %v3738, %v3806
      %v3871 = vadd.f32 %v3739, %v3807
      %v3872 = vadd.f32 %v3740, %v3808
      %v3873 = vadd.f32 %v3741, %v3809
      %v3874 = vadd.f32 %v3742, %v3810
      %v3875 = vadd.f32 %v3743, %v3811
      %v3876 = vadd.f32 %v3744, %v3812
      %v3877 = vadd.f32 %v3745, %v3813
      %v3878 = vadd.f32 %v3746, %v3814
      %v3879 = vadd.f32 %v3747, %v3815
      %v3880 = vadd.f32 %v3748, %v3816
      %v3881 = vadd.f32 %v3749, %v3817
      %v3882 = vadd.f32 %v3750, %v3818
      %v3883 = vadd.f32 %v3751, %v3819
      %v3884 = vadd.f32 %v3752, %v3820
      %v3885 = vadd.f32 %v3753, %v3821
      %v3886 = vadd.f32 %v3754, %v3822
      %v3887 = vadd.f32 %v3755, %v3823
      %v3888 = vadd.f32 %v3756, %v3824
      %v3889 = vadd.f32 %v3757, %v3825
      %v3890 = vadd.f32 %v3758, %v3826
      %v3891 = vadd.f32 %v3759, %v3827
      %v3892 = vadd.f32 %v3760, %v3828
      %v3893 = vadd.f32 %v3761, %v3829
      %v3894 = vadd.f32 %v3762, %v3830
      %v3895 = vadd.f32 %v3763, %v3831
      %v3896 = vadd.f32 %v3764, %v3832
      %v3897 = vadd.f32 %v3765, %v3833
      %v3898 = vadd.f32 %v3766, %v3834
      %v3899 = vadd.f32 %v3767, %v3835
      %v3900 = vadd.f32 %v3768, %v3836
      %v3901 = vadd.f32 %v3769, %v3837
      %v3902 = vadd.f32 %v3770, %v3838
      %v3903 = vadd.f32 %v3771, %v3839
      %v3904 = vadd.f32 %v3772, %v3840
      %v3905 = vadd.f32 %v3773, %v3841
      %v3906 = vadd.f32 %v3774, %v3842
      %v3907 = vadd.f32 %v3775, %v3843
      %v3908 = vadd.f32 %v3776, %v3844
      %v3909 = vadd.f32 %v3777, %v3845
      %v3910 = vadd.f32 %v3778, %v3846
      %v3911 = vadd.f32 %v3779, %v3847
      %v3912 = vadd.f32 %v3780, %v3848
      %v3913 = vadd.f32 %v3781, %v3849
      %v3914 = vld [vmem:[%s8] sm:$0x1]
      %v3916 = vlaneseq
      %v3917 = vshrl.u32 %v3916, 7
      %v3918 = vsub.s32 0, %v3917
      %v3919 = vrot.slane %v3914, %v3918
      %v3921 = vadd.f32 %v3850, %v3919
      %v3922 = vadd.f32 %v3851, %v3919
      %v3923 = vadd.f32 %v3852, %v3919
      %v3924 = vadd.f32 %v3853, %v3919
      %v3925 = vadd.f32 %v3854, %v3919
      %v3926 = vadd.f32 %v3855, %v3919
      %v3927 = vadd.f32 %v3856, %v3919
      %v3928 = vadd.f32 %v3857, %v3919
      %v3929 = vadd.f32 %v3858, %v3919
      %v3930 = vadd.f32 %v3859, %v3919
      %v3931 = vadd.f32 %v3860, %v3919
      %v3932 = vadd.f32 %v3861, %v3919
      %v3933 = vadd.f32 %v3862, %v3919
      %v3934 = vadd.f32 %v3863, %v3919
      %v3935 = vadd.f32 %v3864, %v3919
      %v3936 = vadd.f32 %v3865, %v3919
      %v3937 = vadd.f32 %v3866, %v3919
      %v3938 = vadd.f32 %v3867, %v3919
      %v3939 = vadd.f32 %v3868, %v3919
      %v3940 = vadd.f32 %v3869, %v3919
      %v3941 = vadd.f32 %v3870, %v3919
      %v3942 = vadd.f32 %v3871, %v3919
      %v3943 = vadd.f32 %v3872, %v3919
      %v3944 = vadd.f32 %v3873, %v3919
      %v3945 = vadd.f32 %v3874, %v3919
      %v3946 = vadd.f32 %v3875, %v3919
      %v3947 = vadd.f32 %v3876, %v3919
      %v3948 = vadd.f32 %v3877, %v3919
      %v3949 = vadd.f32 %v3878, %v3919
      %v3950 = vadd.f32 %v3879, %v3919
      %v3951 = vadd.f32 %v3880, %v3919
      %v3952 = vadd.f32 %v3881, %v3919
      %v3953 = vadd.f32 %v3882, %v3919
      %v3954 = vadd.f32 %v3883, %v3919
      %v3955 = vadd.f32 %v3884, %v3919
      %v3956 = vadd.f32 %v3885, %v3919
      %v3957 = vadd.f32 %v3886, %v3919
      %v3958 = vadd.f32 %v3887, %v3919
      %v3959 = vadd.f32 %v3888, %v3919
      %v3960 = vadd.f32 %v3889, %v3919
      %v3961 = vadd.f32 %v3890, %v3919
      %v3962 = vadd.f32 %v3891, %v3919
      %v3963 = vadd.f32 %v3892, %v3919
      %v3964 = vadd.f32 %v3893, %v3919
      %v3965 = vadd.f32 %v3894, %v3919
      %v3966 = vadd.f32 %v3895, %v3919
      %v3967 = vadd.f32 %v3896, %v3919
      %v3968 = vadd.f32 %v3897, %v3919
      %v3969 = vadd.f32 %v3898, %v3919
      %v3970 = vadd.f32 %v3899, %v3919
      %v3971 = vadd.f32 %v3900, %v3919
      %v3972 = vadd.f32 %v3901, %v3919
      %v3973 = vadd.f32 %v3902, %v3919
      %v3974 = vadd.f32 %v3903, %v3919
      %v3975 = vadd.f32 %v3904, %v3919
      %v3976 = vadd.f32 %v3905, %v3919
      %v3977 = vadd.f32 %v3906, %v3919
      %v3978 = vadd.f32 %v3907, %v3919
      %v3979 = vadd.f32 %v3908, %v3919
      %v3980 = vadd.f32 %v3909, %v3919
      %v3981 = vadd.f32 %v3910, %v3919
      %v3982 = vadd.f32 %v3911, %v3919
      %v3983 = vadd.f32 %v3912, %v3919
      %v3984 = vadd.f32 %v3913, %v3919
      %v3985 = vmul.f32 %v3921, 0.5
      %v3986 = vmul.f32 %v3922, 0.5
      %v3987 = vmul.f32 %v3923, 0.5
      %v3988 = vmul.f32 %v3924, 0.5
      %v3989 = vmul.f32 %v3925, 0.5
      %v3990 = vmul.f32 %v3926, 0.5
      %v3991 = vmul.f32 %v3927, 0.5
      %v3992 = vmul.f32 %v3928, 0.5
      %v3993 = vmul.f32 %v3929, 0.5
      %v3994 = vmul.f32 %v3930, 0.5
      %v3995 = vmul.f32 %v3931, 0.5
      %v3996 = vmul.f32 %v3932, 0.5
      %v3997 = vmul.f32 %v3933, 0.5
      %v3998 = vmul.f32 %v3934, 0.5
      %v3999 = vmul.f32 %v3935, 0.5
      %v4000 = vmul.f32 %v3936, 0.5
      %v4001 = vmul.f32 %v3937, 0.5
      %v4002 = vmul.f32 %v3938, 0.5
      %v4003 = vmul.f32 %v3939, 0.5
      %v4004 = vmul.f32 %v3940, 0.5
      %v4005 = vmul.f32 %v3941, 0.5
      %v4006 = vmul.f32 %v3942, 0.5
      %v4007 = vmul.f32 %v3943, 0.5
      %v4008 = vmul.f32 %v3944, 0.5
      %v4009 = vmul.f32 %v3945, 0.5
      %v4010 = vmul.f32 %v3946, 0.5
      %v4011 = vmul.f32 %v3947, 0.5
      %v4012 = vmul.f32 %v3948, 0.5
      %v4013 = vmul.f32 %v3949, 0.5
      %v4014 = vmul.f32 %v3950, 0.5
      %v4015 = vmul.f32 %v3951, 0.5
      %v4016 = vmul.f32 %v3952, 0.5
      %v4017 = vmul.f32 %v3953, 0.5
      %v4018 = vmul.f32 %v3954, 0.5
      %v4019 = vmul.f32 %v3955, 0.5
      %v4020 = vmul.f32 %v3956, 0.5
      %v4021 = vmul.f32 %v3957, 0.5
      %v4022 = vmul.f32 %v3958, 0.5
      %v4023 = vmul.f32 %v3959, 0.5
      %v4024 = vmul.f32 %v3960, 0.5
      %v4025 = vmul.f32 %v3961, 0.5
      %v4026 = vmul.f32 %v3962, 0.5
      %v4027 = vmul.f32 %v3963, 0.5
      %v4028 = vmul.f32 %v3964, 0.5
      %v4029 = vmul.f32 %v3965, 0.5
      %v4030 = vmul.f32 %v3966, 0.5
      %v4031 = vmul.f32 %v3967, 0.5
      %v4032 = vmul.f32 %v3968, 0.5
      %v4033 = vmul.f32 %v3969, 0.5
      %v4034 = vmul.f32 %v3970, 0.5
      %v4035 = vmul.f32 %v3971, 0.5
      %v4036 = vmul.f32 %v3972, 0.5
      %v4037 = vmul.f32 %v3973, 0.5
      %v4038 = vmul.f32 %v3974, 0.5
      %v4039 = vmul.f32 %v3975, 0.5
      %v4040 = vmul.f32 %v3976, 0.5
      %v4041 = vmul.f32 %v3977, 0.5
      %v4042 = vmul.f32 %v3978, 0.5
      %v4043 = vmul.f32 %v3979, 0.5
      %v4044 = vmul.f32 %v3980, 0.5
      %v4045 = vmul.f32 %v3981, 0.5
      %v4046 = vmul.f32 %v3982, 0.5
      %v4047 = vmul.f32 %v3983, 0.5
      %v4048 = vmul.f32 %v3984, 0.5
      %v4049 = vmul.f32 %v3921, 0.70710677
      %v4050 = vmul.f32 %v3922, 0.70710677
      %v4051 = vmul.f32 %v3923, 0.70710677
      %v4052 = vmul.f32 %v3924, 0.70710677
      %v4053 = vmul.f32 %v3925, 0.70710677
      %v4054 = vmul.f32 %v3926, 0.70710677
      %v4055 = vmul.f32 %v3927, 0.70710677
      %v4056 = vmul.f32 %v3928, 0.70710677
      %v4057 = vmul.f32 %v3929, 0.70710677
      %v4058 = vmul.f32 %v3930, 0.70710677
      %v4059 = vmul.f32 %v3931, 0.70710677
      %v4060 = vmul.f32 %v3932, 0.70710677
      %v4061 = vmul.f32 %v3933, 0.70710677
      %v4062 = vmul.f32 %v3934, 0.70710677
      %v4063 = vmul.f32 %v3935, 0.70710677
      %v4064 = vmul.f32 %v3936, 0.70710677
      %v4065 = vmul.f32 %v3937, 0.70710677
      %v4066 = vmul.f32 %v3938, 0.70710677
      %v4067 = vmul.f32 %v3939, 0.70710677
      %v4068 = vmul.f32 %v3940, 0.70710677
      %v4069 = vmul.f32 %v3941, 0.70710677
      %v4070 = vmul.f32 %v3942, 0.70710677
      %v4071 = vmul.f32 %v3943, 0.70710677
      %v4072 = vmul.f32 %v3944, 0.70710677
      %v4073 = vmul.f32 %v3945, 0.70710677
      %v4074 = vmul.f32 %v3946, 0.70710677
      %v4075 = vmul.f32 %v3947, 0.70710677
      %v4076 = vmul.f32 %v3948, 0.70710677
      %v4077 = vmul.f32 %v3949, 0.70710677
      %v4078 = vmul.f32 %v3950, 0.70710677
      %v4079 = vmul.f32 %v3951, 0.70710677
      %v4080 = vmul.f32 %v3952, 0.70710677
      %v4081 = vmul.f32 %v3953, 0.70710677
      %v4082 = vmul.f32 %v3954, 0.70710677
      %v4083 = vmul.f32 %v3955, 0.70710677
      %v4084 = vmul.f32 %v3956, 0.70710677
      %v4085 = vmul.f32 %v3957, 0.70710677
      %v4086 = vmul.f32 %v3958, 0.70710677
      %v4087 = vmul.f32 %v3959, 0.70710677
      %v4088 = vmul.f32 %v3960, 0.70710677
      %v4089 = vmul.f32 %v3961, 0.70710677
      %v4090 = vmul.f32 %v3962, 0.70710677
      %v4091 = vmul.f32 %v3963, 0.70710677
      %v4092 = vmul.f32 %v3964, 0.70710677
      %v4093 = vmul.f32 %v3965, 0.70710677
      %v4094 = vmul.f32 %v3966, 0.70710677
      %v4095 = vmul.f32 %v3967, 0.70710677
      %v4096 = vmul.f32 %v3968, 0.70710677
      %v4097 = vmul.f32 %v3969, 0.70710677
      %v4098 = vmul.f32 %v3970, 0.70710677
      %v4099 = vmul.f32 %v3971, 0.70710677
      %v4100 = vmul.f32 %v3972, 0.70710677
      %v4101 = vmul.f32 %v3973, 0.70710677
      %v4102 = vmul.f32 %v3974, 0.70710677
      %v4103 = vmul.f32 %v3975, 0.70710677
      %v4104 = vmul.f32 %v3976, 0.70710677
      %v4105 = vmul.f32 %v3977, 0.70710677
      %v4106 = vmul.f32 %v3978, 0.70710677
      %v4107 = vmul.f32 %v3979, 0.70710677
      %v4108 = vmul.f32 %v3980, 0.70710677
      %v4109 = vmul.f32 %v3981, 0.70710677
      %v4110 = vmul.f32 %v3982, 0.70710677
      %v4111 = vmul.f32 %v3983, 0.70710677
      %v4112 = vmul.f32 %v3984, 0.70710677
      %vm4113 = vcmp.ge.f32.partialorder %v4049, 0.0
      %vm4114 = vcmp.ge.f32.partialorder %v4050, 0.0
      %vm4115 = vcmp.ge.f32.partialorder %v4051, 0.0
      %vm4116 = vcmp.ge.f32.partialorder %v4052, 0.0
      %vm4117 = vcmp.ge.f32.partialorder %v4053, 0.0
      %vm4118 = vcmp.ge.f32.partialorder %v4054, 0.0
      %vm4119 = vcmp.ge.f32.partialorder %v4055, 0.0
      %vm4120 = vcmp.ge.f32.partialorder %v4056, 0.0
      %vm4121 = vcmp.ge.f32.partialorder %v4057, 0.0
      %vm4122 = vcmp.ge.f32.partialorder %v4058, 0.0
      %vm4123 = vcmp.ge.f32.partialorder %v4059, 0.0
      %vm4124 = vcmp.ge.f32.partialorder %v4060, 0.0
      %vm4125 = vcmp.ge.f32.partialorder %v4061, 0.0
      %vm4126 = vcmp.ge.f32.partialorder %v4062, 0.0
      %vm4127 = vcmp.ge.f32.partialorder %v4063, 0.0
      %vm4128 = vcmp.ge.f32.partialorder %v4064, 0.0
      %vm4129 = vcmp.ge.f32.partialorder %v4065, 0.0
      %vm4130 = vcmp.ge.f32.partialorder %v4066, 0.0
      %vm4131 = vcmp.ge.f32.partialorder %v4067, 0.0
      %vm4132 = vcmp.ge.f32.partialorder %v4068, 0.0
      %vm4133 = vcmp.ge.f32.partialorder %v4069, 0.0
      %vm4134 = vcmp.ge.f32.partialorder %v4070, 0.0
      %vm4135 = vcmp.ge.f32.partialorder %v4071, 0.0
      %vm4136 = vcmp.ge.f32.partialorder %v4072, 0.0
      %vm4137 = vcmp.ge.f32.partialorder %v4073, 0.0
      %vm4138 = vcmp.ge.f32.partialorder %v4074, 0.0
      %vm4139 = vcmp.ge.f32.partialorder %v4075, 0.0
      %vm4140 = vcmp.ge.f32.partialorder %v4076, 0.0
      %vm4141 = vcmp.ge.f32.partialorder %v4077, 0.0
      %vm4142 = vcmp.ge.f32.partialorder %v4078, 0.0
      %vm4143 = vcmp.ge.f32.partialorder %v4079, 0.0
      %vm4144 = vcmp.ge.f32.partialorder %v4080, 0.0
      %vm4145 = vcmp.ge.f32.partialorder %v4081, 0.0
      %vm4146 = vcmp.ge.f32.partialorder %v4082, 0.0
      %vm4147 = vcmp.ge.f32.partialorder %v4083, 0.0
      %vm4148 = vcmp.ge.f32.partialorder %v4084, 0.0
      %vm4149 = vcmp.ge.f32.partialorder %v4085, 0.0
      %vm4150 = vcmp.ge.f32.partialorder %v4086, 0.0
      %vm4151 = vcmp.ge.f32.partialorder %v4087, 0.0
      %vm4152 = vcmp.ge.f32.partialorder %v4088, 0.0
      %vm4153 = vcmp.ge.f32.partialorder %v4089, 0.0
      %vm4154 = vcmp.ge.f32.partialorder %v4090, 0.0
      %vm4155 = vcmp.ge.f32.partialorder %v4091, 0.0
      %vm4156 = vcmp.ge.f32.partialorder %v4092, 0.0
      %vm4157 = vcmp.ge.f32.partialorder %v4093, 0.0
      %vm4158 = vcmp.ge.f32.partialorder %v4094, 0.0
      %vm4159 = vcmp.ge.f32.partialorder %v4095, 0.0
      %vm4160 = vcmp.ge.f32.partialorder %v4096, 0.0
      %vm4161 = vcmp.ge.f32.partialorder %v4097, 0.0
      %vm4162 = vcmp.ge.f32.partialorder %v4098, 0.0
      %vm4163 = vcmp.ge.f32.partialorder %v4099, 0.0
      %vm4164 = vcmp.ge.f32.partialorder %v4100, 0.0
      %vm4165 = vcmp.ge.f32.partialorder %v4101, 0.0
      %vm4166 = vcmp.ge.f32.partialorder %v4102, 0.0
      %vm4167 = vcmp.ge.f32.partialorder %v4103, 0.0
      %vm4168 = vcmp.ge.f32.partialorder %v4104, 0.0
      %vm4169 = vcmp.ge.f32.partialorder %v4105, 0.0
      %vm4170 = vcmp.ge.f32.partialorder %v4106, 0.0
      %vm4171 = vcmp.ge.f32.partialorder %v4107, 0.0
      %vm4172 = vcmp.ge.f32.partialorder %v4108, 0.0
      %vm4173 = vcmp.ge.f32.partialorder %v4109, 0.0
      %vm4174 = vcmp.ge.f32.partialorder %v4110, 0.0
      %vm4175 = vcmp.ge.f32.partialorder %v4111, 0.0
      %vm4176 = vcmp.ge.f32.partialorder %v4112, 0.0
      %v4177 = vsel %vm4113, 1.0, -1.0
      %v4178 = vsel %vm4114, 1.0, -1.0
      %v4179 = vsel %vm4115, 1.0, -1.0
      %v4180 = vsel %vm4116, 1.0, -1.0
      %v4181 = vsel %vm4117, 1.0, -1.0
      %v4182 = vsel %vm4118, 1.0, -1.0
      %v4183 = vsel %vm4119, 1.0, -1.0
      %v4184 = vsel %vm4120, 1.0, -1.0
      %v4185 = vsel %vm4121, 1.0, -1.0
      %v4186 = vsel %vm4122, 1.0, -1.0
      %v4187 = vsel %vm4123, 1.0, -1.0
      %v4188 = vsel %vm4124, 1.0, -1.0
      %v4189 = vsel %vm4125, 1.0, -1.0
      %v4190 = vsel %vm4126, 1.0, -1.0
      %v4191 = vsel %vm4127, 1.0, -1.0
      %v4192 = vsel %vm4128, 1.0, -1.0
      %v4193 = vsel %vm4129, 1.0, -1.0
      %v4194 = vsel %vm4130, 1.0, -1.0
      %v4195 = vsel %vm4131, 1.0, -1.0
      %v4196 = vsel %vm4132, 1.0, -1.0
      %v4197 = vsel %vm4133, 1.0, -1.0
      %v4198 = vsel %vm4134, 1.0, -1.0
      %v4199 = vsel %vm4135, 1.0, -1.0
      %v4200 = vsel %vm4136, 1.0, -1.0
      %v4201 = vsel %vm4137, 1.0, -1.0
      %v4202 = vsel %vm4138, 1.0, -1.0
      %v4203 = vsel %vm4139, 1.0, -1.0
      %v4204 = vsel %vm4140, 1.0, -1.0
      %v4205 = vsel %vm4141, 1.0, -1.0
      %v4206 = vsel %vm4142, 1.0, -1.0
      %v4207 = vsel %vm4143, 1.0, -1.0
      %v4208 = vsel %vm4144, 1.0, -1.0
      %v4209 = vsel %vm4145, 1.0, -1.0
      %v4210 = vsel %vm4146, 1.0, -1.0
      %v4211 = vsel %vm4147, 1.0, -1.0
      %v4212 = vsel %vm4148, 1.0, -1.0
      %v4213 = vsel %vm4149, 1.0, -1.0
      %v4214 = vsel %vm4150, 1.0, -1.0
      %v4215 = vsel %vm4151, 1.0, -1.0
      %v4216 = vsel %vm4152, 1.0, -1.0
      %v4217 = vsel %vm4153, 1.0, -1.0
      %v4218 = vsel %vm4154, 1.0, -1.0
      %v4219 = vsel %vm4155, 1.0, -1.0
      %v4220 = vsel %vm4156, 1.0, -1.0
      %v4221 = vsel %vm4157, 1.0, -1.0
      %v4222 = vsel %vm4158, 1.0, -1.0
      %v4223 = vsel %vm4159, 1.0, -1.0
      %v4224 = vsel %vm4160, 1.0, -1.0
      %v4225 = vsel %vm4161, 1.0, -1.0
      %v4226 = vsel %vm4162, 1.0, -1.0
      %v4227 = vsel %vm4163, 1.0, -1.0
      %v4228 = vsel %vm4164, 1.0, -1.0
      %v4229 = vsel %vm4165, 1.0, -1.0
      %v4230 = vsel %vm4166, 1.0, -1.0
      %v4231 = vsel %vm4167, 1.0, -1.0
      %v4232 = vsel %vm4168, 1.0, -1.0
      %v4233 = vsel %vm4169, 1.0, -1.0
      %v4234 = vsel %vm4170, 1.0, -1.0
      %v4235 = vsel %vm4171, 1.0, -1.0
      %v4236 = vsel %vm4172, 1.0, -1.0
      %v4237 = vsel %vm4173, 1.0, -1.0
      %v4238 = vsel %vm4174, 1.0, -1.0
      %v4239 = vsel %vm4175, 1.0, -1.0
      %v4240 = vsel %vm4176, 1.0, -1.0
      %v4241 = vand.u32 2147483647, %v4049
      %v4242 = vand.u32 2147483647, %v4050
      %v4243 = vand.u32 2147483647, %v4051
      %v4244 = vand.u32 2147483647, %v4052
      %v4245 = vand.u32 2147483647, %v4053
      %v4246 = vand.u32 2147483647, %v4054
      %v4247 = vand.u32 2147483647, %v4055
      %v4248 = vand.u32 2147483647, %v4056
      %v4249 = vand.u32 2147483647, %v4057
      %v4250 = vand.u32 2147483647, %v4058
      %v4251 = vand.u32 2147483647, %v4059
      %v4252 = vand.u32 2147483647, %v4060
      %v4253 = vand.u32 2147483647, %v4061
      %v4254 = vand.u32 2147483647, %v4062
      %v4255 = vand.u32 2147483647, %v4063
      %v4256 = vand.u32 2147483647, %v4064
      %v4257 = vand.u32 2147483647, %v4065
      %v4258 = vand.u32 2147483647, %v4066
      %v4259 = vand.u32 2147483647, %v4067
      %v4260 = vand.u32 2147483647, %v4068
      %v4261 = vand.u32 2147483647, %v4069
      %v4262 = vand.u32 2147483647, %v4070
      %v4263 = vand.u32 2147483647, %v4071
      %v4264 = vand.u32 2147483647, %v4072
      %v4265 = vand.u32 2147483647, %v4073
      %v4266 = vand.u32 2147483647, %v4074
      %v4267 = vand.u32 2147483647, %v4075
      %v4268 = vand.u32 2147483647, %v4076
      %v4269 = vand.u32 2147483647, %v4077
      %v4270 = vand.u32 2147483647, %v4078
      %v4271 = vand.u32 2147483647, %v4079
      %v4272 = vand.u32 2147483647, %v4080
      %v4273 = vand.u32 2147483647, %v4081
      %v4274 = vand.u32 2147483647, %v4082
      %v4275 = vand.u32 2147483647, %v4083
      %v4276 = vand.u32 2147483647, %v4084
      %v4277 = vand.u32 2147483647, %v4085
      %v4278 = vand.u32 2147483647, %v4086
      %v4279 = vand.u32 2147483647, %v4087
      %v4280 = vand.u32 2147483647, %v4088
      %v4281 = vand.u32 2147483647, %v4089
      %v4282 = vand.u32 2147483647, %v4090
      %v4283 = vand.u32 2147483647, %v4091
      %v4284 = vand.u32 2147483647, %v4092
      %v4285 = vand.u32 2147483647, %v4093
      %v4286 = vand.u32 2147483647, %v4094
      %v4287 = vand.u32 2147483647, %v4095
      %v4288 = vand.u32 2147483647, %v4096
      %v4289 = vand.u32 2147483647, %v4097
      %v4290 = vand.u32 2147483647, %v4098
      %v4291 = vand.u32 2147483647, %v4099
      %v4292 = vand.u32 2147483647, %v4100
      %v4293 = vand.u32 2147483647, %v4101
      %v4294 = vand.u32 2147483647, %v4102
      %v4295 = vand.u32 2147483647, %v4103
      %v4296 = vand.u32 2147483647, %v4104
      %v4297 = vand.u32 2147483647, %v4105
      %v4298 = vand.u32 2147483647, %v4106
      %v4299 = vand.u32 2147483647, %v4107
      %v4300 = vand.u32 2147483647, %v4108
      %v4301 = vand.u32 2147483647, %v4109
      %v4302 = vand.u32 2147483647, %v4110
      %v4303 = vand.u32 2147483647, %v4111
      %v4304 = vand.u32 2147483647, %v4112
      %v4305 = vmul.f32 %v4241, 0.3275911
      %v4306 = vmul.f32 %v4242, 0.3275911
      %v4307 = vmul.f32 %v4243, 0.3275911
      %v4308 = vmul.f32 %v4244, 0.3275911
      %v4309 = vmul.f32 %v4245, 0.3275911
      %v4310 = vmul.f32 %v4246, 0.3275911
      %v4311 = vmul.f32 %v4247, 0.3275911
      %v4312 = vmul.f32 %v4248, 0.3275911
      %v4313 = vmul.f32 %v4249, 0.3275911
      %v4314 = vmul.f32 %v4250, 0.3275911
      %v4315 = vmul.f32 %v4251, 0.3275911
      %v4316 = vmul.f32 %v4252, 0.3275911
      %v4317 = vmul.f32 %v4253, 0.3275911
      %v4318 = vmul.f32 %v4254, 0.3275911
      %v4319 = vmul.f32 %v4255, 0.3275911
      %v4320 = vmul.f32 %v4256, 0.3275911
      %v4321 = vmul.f32 %v4257, 0.3275911
      %v4322 = vmul.f32 %v4258, 0.3275911
      %v4323 = vmul.f32 %v4259, 0.3275911
      %v4324 = vmul.f32 %v4260, 0.3275911
      %v4325 = vmul.f32 %v4261, 0.3275911
      %v4326 = vmul.f32 %v4262, 0.3275911
      %v4327 = vmul.f32 %v4263, 0.3275911
      %v4328 = vmul.f32 %v4264, 0.3275911
      %v4329 = vmul.f32 %v4265, 0.3275911
      %v4330 = vmul.f32 %v4266, 0.3275911
      %v4331 = vmul.f32 %v4267, 0.3275911
      %v4332 = vmul.f32 %v4268, 0.3275911
      %v4333 = vmul.f32 %v4269, 0.3275911
      %v4334 = vmul.f32 %v4270, 0.3275911
      %v4335 = vmul.f32 %v4271, 0.3275911
      %v4336 = vmul.f32 %v4272, 0.3275911
      %v4337 = vmul.f32 %v4273, 0.3275911
      %v4338 = vmul.f32 %v4274, 0.3275911
      %v4339 = vmul.f32 %v4275, 0.3275911
      %v4340 = vmul.f32 %v4276, 0.3275911
      %v4341 = vmul.f32 %v4277, 0.3275911
      %v4342 = vmul.f32 %v4278, 0.3275911
      %v4343 = vmul.f32 %v4279, 0.3275911
      %v4344 = vmul.f32 %v4280, 0.3275911
      %v4345 = vmul.f32 %v4281, 0.3275911
      %v4346 = vmul.f32 %v4282, 0.3275911
      %v4347 = vmul.f32 %v4283, 0.3275911
      %v4348 = vmul.f32 %v4284, 0.3275911
      %v4349 = vmul.f32 %v4285, 0.3275911
      %v4350 = vmul.f32 %v4286, 0.3275911
      %v4351 = vmul.f32 %v4287, 0.3275911
      %v4352 = vmul.f32 %v4288, 0.3275911
      %v4353 = vmul.f32 %v4289, 0.3275911
      %v4354 = vmul.f32 %v4290, 0.3275911
      %v4355 = vmul.f32 %v4291, 0.3275911
      %v4356 = vmul.f32 %v4292, 0.3275911
      %v4357 = vmul.f32 %v4293, 0.3275911
      %v4358 = vmul.f32 %v4294, 0.3275911
      %v4359 = vmul.f32 %v4295, 0.3275911
      %v4360 = vmul.f32 %v4296, 0.3275911
      %v4361 = vmul.f32 %v4297, 0.3275911
      %v4362 = vmul.f32 %v4298, 0.3275911
      %v4363 = vmul.f32 %v4299, 0.3275911
      %v4364 = vmul.f32 %v4300, 0.3275911
      %v4365 = vmul.f32 %v4301, 0.3275911
      %v4366 = vmul.f32 %v4302, 0.3275911
      %v4367 = vmul.f32 %v4303, 0.3275911
      %v4368 = vmul.f32 %v4304, 0.3275911
      %v4369 = vadd.f32 %v4305, 1.0
      %v4370 = vadd.f32 %v4306, 1.0
      %v4371 = vadd.f32 %v4307, 1.0
      %v4372 = vadd.f32 %v4308, 1.0
      %v4373 = vadd.f32 %v4309, 1.0
      %v4374 = vadd.f32 %v4310, 1.0
      %v4375 = vadd.f32 %v4311, 1.0
      %v4376 = vadd.f32 %v4312, 1.0
      %v4377 = vadd.f32 %v4313, 1.0
      %v4378 = vadd.f32 %v4314, 1.0
      %v4379 = vadd.f32 %v4315, 1.0
      %v4380 = vadd.f32 %v4316, 1.0
      %v4381 = vadd.f32 %v4317, 1.0
      %v4382 = vadd.f32 %v4318, 1.0
      %v4383 = vadd.f32 %v4319, 1.0
      %v4384 = vadd.f32 %v4320, 1.0
      %v4385 = vadd.f32 %v4321, 1.0
      %v4386 = vadd.f32 %v4322, 1.0
      %v4387 = vadd.f32 %v4323, 1.0
      %v4388 = vadd.f32 %v4324, 1.0
      %v4389 = vadd.f32 %v4325, 1.0
      %v4390 = vadd.f32 %v4326, 1.0
      %v4391 = vadd.f32 %v4327, 1.0
      %v4392 = vadd.f32 %v4328, 1.0
      %v4393 = vadd.f32 %v4329, 1.0
      %v4394 = vadd.f32 %v4330, 1.0
      %v4395 = vadd.f32 %v4331, 1.0
      %v4396 = vadd.f32 %v4332, 1.0
      %v4397 = vadd.f32 %v4333, 1.0
      %v4398 = vadd.f32 %v4334, 1.0
      %v4399 = vadd.f32 %v4335, 1.0
      %v4400 = vadd.f32 %v4336, 1.0
      %v4401 = vadd.f32 %v4337, 1.0
      %v4402 = vadd.f32 %v4338, 1.0
      %v4403 = vadd.f32 %v4339, 1.0
      %v4404 = vadd.f32 %v4340, 1.0
      %v4405 = vadd.f32 %v4341, 1.0
      %v4406 = vadd.f32 %v4342, 1.0
      %v4407 = vadd.f32 %v4343, 1.0
      %v4408 = vadd.f32 %v4344, 1.0
      %v4409 = vadd.f32 %v4345, 1.0
      %v4410 = vadd.f32 %v4346, 1.0
      %v4411 = vadd.f32 %v4347, 1.0
      %v4412 = vadd.f32 %v4348, 1.0
      %v4413 = vadd.f32 %v4349, 1.0
      %v4414 = vadd.f32 %v4350, 1.0
      %v4415 = vadd.f32 %v4351, 1.0
      %v4416 = vadd.f32 %v4352, 1.0
      %v4417 = vadd.f32 %v4353, 1.0
      %v4418 = vadd.f32 %v4354, 1.0
      %v4419 = vadd.f32 %v4355, 1.0
      %v4420 = vadd.f32 %v4356, 1.0
      %v4421 = vadd.f32 %v4357, 1.0
      %v4422 = vadd.f32 %v4358, 1.0
      %v4423 = vadd.f32 %v4359, 1.0
      %v4424 = vadd.f32 %v4360, 1.0
      %v4425 = vadd.f32 %v4361, 1.0
      %v4426 = vadd.f32 %v4362, 1.0
      %v4427 = vadd.f32 %v4363, 1.0
      %v4428 = vadd.f32 %v4364, 1.0
      %v4429 = vadd.f32 %v4365, 1.0
      %v4430 = vadd.f32 %v4366, 1.0
      %v4431 = vadd.f32 %v4367, 1.0
      %v4432 = vadd.f32 %v4368, 1.0
      %v4433 = vrcp.pop %v4369
      %v4434 = vrcp.pop %v4370
      %v4435 = vrcp.pop %v4371
      %v4436 = vrcp.pop %v4372
      %v4437 = vrcp.pop %v4373
      %v4438 = vrcp.pop %v4374
      %v4439 = vrcp.pop %v4375
      %v4440 = vrcp.pop %v4376
      %v4441 = vrcp.pop %v4377
      %v4442 = vrcp.pop %v4378
      %v4443 = vrcp.pop %v4379
      %v4444 = vrcp.pop %v4380
      %v4445 = vrcp.pop %v4381
      %v4446 = vrcp.pop %v4382
      %v4447 = vrcp.pop %v4383
      %v4448 = vrcp.pop %v4384
      %v4449 = vrcp.pop %v4385
      %v4450 = vrcp.pop %v4386
      %v4451 = vrcp.pop %v4387
      %v4452 = vrcp.pop %v4388
      %v4453 = vrcp.pop %v4389
      %v4454 = vrcp.pop %v4390
      %v4455 = vrcp.pop %v4391
      %v4456 = vrcp.pop %v4392
      %v4457 = vrcp.pop %v4393
      %v4458 = vrcp.pop %v4394
      %v4459 = vrcp.pop %v4395
      %v4460 = vrcp.pop %v4396
      %v4461 = vrcp.pop %v4397
      %v4462 = vrcp.pop %v4398
      %v4463 = vrcp.pop %v4399
      %v4464 = vrcp.pop %v4400
      %v4465 = vrcp.pop %v4401
      %v4466 = vrcp.pop %v4402
      %v4467 = vrcp.pop %v4403
      %v4468 = vrcp.pop %v4404
      %v4469 = vrcp.pop %v4405
      %v4470 = vrcp.pop %v4406
      %v4471 = vrcp.pop %v4407
      %v4472 = vrcp.pop %v4408
      %v4473 = vrcp.pop %v4409
      %v4474 = vrcp.pop %v4410
      %v4475 = vrcp.pop %v4411
      %v4476 = vrcp.pop %v4412
      %v4477 = vrcp.pop %v4413
      %v4478 = vrcp.pop %v4414
      %v4479 = vrcp.pop %v4415
      %v4480 = vrcp.pop %v4416
      %v4481 = vrcp.pop %v4417
      %v4482 = vrcp.pop %v4418
      %v4483 = vrcp.pop %v4419
      %v4484 = vrcp.pop %v4420
      %v4485 = vrcp.pop %v4421
      %v4486 = vrcp.pop %v4422
      %v4487 = vrcp.pop %v4423
      %v4488 = vrcp.pop %v4424
      %v4489 = vrcp.pop %v4425
      %v4490 = vrcp.pop %v4426
      %v4491 = vrcp.pop %v4427
      %v4492 = vrcp.pop %v4428
      %v4493 = vrcp.pop %v4429
      %v4494 = vrcp.pop %v4430
      %v4495 = vrcp.pop %v4431
      %v4496 = vrcp.pop %v4432
      %v4497 = vmul.f32 %v4433, 1.0614054
      %v4498 = vmul.f32 %v4434, 1.0614054
      %v4499 = vmul.f32 %v4435, 1.0614054
      %v4500 = vmul.f32 %v4436, 1.0614054
      %v4501 = vmul.f32 %v4437, 1.0614054
      %v4502 = vmul.f32 %v4438, 1.0614054
      %v4503 = vmul.f32 %v4439, 1.0614054
      %v4504 = vmul.f32 %v4440, 1.0614054
      %v4505 = vmul.f32 %v4441, 1.0614054
      %v4506 = vmul.f32 %v4442, 1.0614054
      %v4507 = vmul.f32 %v4443, 1.0614054
      %v4508 = vmul.f32 %v4444, 1.0614054
      %v4509 = vmul.f32 %v4445, 1.0614054
      %v4510 = vmul.f32 %v4446, 1.0614054
      %v4511 = vmul.f32 %v4447, 1.0614054
      %v4512 = vmul.f32 %v4448, 1.0614054
      %v4513 = vmul.f32 %v4449, 1.0614054
      %v4514 = vmul.f32 %v4450, 1.0614054
      %v4515 = vmul.f32 %v4451, 1.0614054
      %v4516 = vmul.f32 %v4452, 1.0614054
      %v4517 = vmul.f32 %v4453, 1.0614054
      %v4518 = vmul.f32 %v4454, 1.0614054
      %v4519 = vmul.f32 %v4455, 1.0614054
      %v4520 = vmul.f32 %v4456, 1.0614054
      %v4521 = vmul.f32 %v4457, 1.0614054
      %v4522 = vmul.f32 %v4458, 1.0614054
      %v4523 = vmul.f32 %v4459, 1.0614054
      %v4524 = vmul.f32 %v4460, 1.0614054
      %v4525 = vmul.f32 %v4461, 1.0614054
      %v4526 = vmul.f32 %v4462, 1.0614054
      %v4527 = vmul.f32 %v4463, 1.0614054
      %v4528 = vmul.f32 %v4464, 1.0614054
      %v4529 = vmul.f32 %v4465, 1.0614054
      %v4530 = vmul.f32 %v4466, 1.0614054
      %v4531 = vmul.f32 %v4467, 1.0614054
      %v4532 = vmul.f32 %v4468, 1.0614054
      %v4533 = vmul.f32 %v4469, 1.0614054
      %v4534 = vmul.f32 %v4470, 1.0614054
      %v4535 = vmul.f32 %v4471, 1.0614054
      %v4536 = vmul.f32 %v4472, 1.0614054
      %v4537 = vmul.f32 %v4473, 1.0614054
      %v4538 = vmul.f32 %v4474, 1.0614054
      %v4539 = vmul.f32 %v4475, 1.0614054
      %v4540 = vmul.f32 %v4476, 1.0614054
      %v4541 = vmul.f32 %v4477, 1.0614054
      %v4542 = vmul.f32 %v4478, 1.0614054
      %v4543 = vmul.f32 %v4479, 1.0614054
      %v4544 = vmul.f32 %v4480, 1.0614054
      %v4545 = vmul.f32 %v4481, 1.0614054
      %v4546 = vmul.f32 %v4482, 1.0614054
      %v4547 = vmul.f32 %v4483, 1.0614054
      %v4548 = vmul.f32 %v4484, 1.0614054
      %v4549 = vmul.f32 %v4485, 1.0614054
      %v4550 = vmul.f32 %v4486, 1.0614054
      %v4551 = vmul.f32 %v4487, 1.0614054
      %v4552 = vmul.f32 %v4488, 1.0614054
      %v4553 = vmul.f32 %v4489, 1.0614054
      %v4554 = vmul.f32 %v4490, 1.0614054
      %v4555 = vmul.f32 %v4491, 1.0614054
      %v4556 = vmul.f32 %v4492, 1.0614054
      %v4557 = vmul.f32 %v4493, 1.0614054
      %v4558 = vmul.f32 %v4494, 1.0614054
      %v4559 = vmul.f32 %v4495, 1.0614054
      %v4560 = vmul.f32 %v4496, 1.0614054
      %v4561 = vadd.f32 %v4497, -1.4531521
      %v4562 = vadd.f32 %v4498, -1.4531521
      %v4563 = vadd.f32 %v4499, -1.4531521
      %v4564 = vadd.f32 %v4500, -1.4531521
      %v4565 = vadd.f32 %v4501, -1.4531521
      %v4566 = vadd.f32 %v4502, -1.4531521
      %v4567 = vadd.f32 %v4503, -1.4531521
      %v4568 = vadd.f32 %v4504, -1.4531521
      %v4569 = vadd.f32 %v4505, -1.4531521
      %v4570 = vadd.f32 %v4506, -1.4531521
      %v4571 = vadd.f32 %v4507, -1.4531521
      %v4572 = vadd.f32 %v4508, -1.4531521
      %v4573 = vadd.f32 %v4509, -1.4531521
      %v4574 = vadd.f32 %v4510, -1.4531521
      %v4575 = vadd.f32 %v4511, -1.4531521
      %v4576 = vadd.f32 %v4512, -1.4531521
      %v4577 = vadd.f32 %v4513, -1.4531521
      %v4578 = vadd.f32 %v4514, -1.4531521
      %v4579 = vadd.f32 %v4515, -1.4531521
      %v4580 = vadd.f32 %v4516, -1.4531521
      %v4581 = vadd.f32 %v4517, -1.4531521
      %v4582 = vadd.f32 %v4518, -1.4531521
      %v4583 = vadd.f32 %v4519, -1.4531521
      %v4584 = vadd.f32 %v4520, -1.4531521
      %v4585 = vadd.f32 %v4521, -1.4531521
      %v4586 = vadd.f32 %v4522, -1.4531521
      %v4587 = vadd.f32 %v4523, -1.4531521
      %v4588 = vadd.f32 %v4524, -1.4531521
      %v4589 = vadd.f32 %v4525, -1.4531521
      %v4590 = vadd.f32 %v4526, -1.4531521
      %v4591 = vadd.f32 %v4527, -1.4531521
      %v4592 = vadd.f32 %v4528, -1.4531521
      %v4593 = vadd.f32 %v4529, -1.4531521
      %v4594 = vadd.f32 %v4530, -1.4531521
      %v4595 = vadd.f32 %v4531, -1.4531521
      %v4596 = vadd.f32 %v4532, -1.4531521
      %v4597 = vadd.f32 %v4533, -1.4531521
      %v4598 = vadd.f32 %v4534, -1.4531521
      %v4599 = vadd.f32 %v4535, -1.4531521
      %v4600 = vadd.f32 %v4536, -1.4531521
      %v4601 = vadd.f32 %v4537, -1.4531521
      %v4602 = vadd.f32 %v4538, -1.4531521
      %v4603 = vadd.f32 %v4539, -1.4531521
      %v4604 = vadd.f32 %v4540, -1.4531521
      %v4605 = vadd.f32 %v4541, -1.4531521
      %v4606 = vadd.f32 %v4542, -1.4531521
      %v4607 = vadd.f32 %v4543, -1.4531521
      %v4608 = vadd.f32 %v4544, -1.4531521
      %v4609 = vadd.f32 %v4545, -1.4531521
      %v4610 = vadd.f32 %v4546, -1.4531521
      %v4611 = vadd.f32 %v4547, -1.4531521
      %v4612 = vadd.f32 %v4548, -1.4531521
      %v4613 = vadd.f32 %v4549, -1.4531521
      %v4614 = vadd.f32 %v4550, -1.4531521
      %v4615 = vadd.f32 %v4551, -1.4531521
      %v4616 = vadd.f32 %v4552, -1.4531521
      %v4617 = vadd.f32 %v4553, -1.4531521
      %v4618 = vadd.f32 %v4554, -1.4531521
      %v4619 = vadd.f32 %v4555, -1.4531521
      %v4620 = vadd.f32 %v4556, -1.4531521
      %v4621 = vadd.f32 %v4557, -1.4531521
      %v4622 = vadd.f32 %v4558, -1.4531521
      %v4623 = vadd.f32 %v4559, -1.4531521
      %v4624 = vadd.f32 %v4560, -1.4531521
      %v4625 = vmul.f32 %v4561, %v4433
      %v4626 = vmul.f32 %v4562, %v4434
      %v4627 = vmul.f32 %v4563, %v4435
      %v4628 = vmul.f32 %v4564, %v4436
      %v4629 = vmul.f32 %v4565, %v4437
      %v4630 = vmul.f32 %v4566, %v4438
      %v4631 = vmul.f32 %v4567, %v4439
      %v4632 = vmul.f32 %v4568, %v4440
      %v4633 = vmul.f32 %v4569, %v4441
      %v4634 = vmul.f32 %v4570, %v4442
      %v4635 = vmul.f32 %v4571, %v4443
      %v4636 = vmul.f32 %v4572, %v4444
      %v4637 = vmul.f32 %v4573, %v4445
      %v4638 = vmul.f32 %v4574, %v4446
      %v4639 = vmul.f32 %v4575, %v4447
      %v4640 = vmul.f32 %v4576, %v4448
      %v4641 = vmul.f32 %v4577, %v4449
      %v4642 = vmul.f32 %v4578, %v4450
      %v4643 = vmul.f32 %v4579, %v4451
      %v4644 = vmul.f32 %v4580, %v4452
      %v4645 = vmul.f32 %v4581, %v4453
      %v4646 = vmul.f32 %v4582, %v4454
      %v4647 = vmul.f32 %v4583, %v4455
      %v4648 = vmul.f32 %v4584, %v4456
      %v4649 = vmul.f32 %v4585, %v4457
      %v4650 = vmul.f32 %v4586, %v4458
      %v4651 = vmul.f32 %v4587, %v4459
      %v4652 = vmul.f32 %v4588, %v4460
      %v4653 = vmul.f32 %v4589, %v4461
      %v4654 = vmul.f32 %v4590, %v4462
      %v4655 = vmul.f32 %v4591, %v4463
      %v4656 = vmul.f32 %v4592, %v4464
      %v4657 = vmul.f32 %v4593, %v4465
      %v4658 = vmul.f32 %v4594, %v4466
      %v4659 = vmul.f32 %v4595, %v4467
      %v4660 = vmul.f32 %v4596, %v4468
      %v4661 = vmul.f32 %v4597, %v4469
      %v4662 = vmul.f32 %v4598, %v4470
      %v4663 = vmul.f32 %v4599, %v4471
      %v4664 = vmul.f32 %v4600, %v4472
      %v4665 = vmul.f32 %v4601, %v4473
      %v4666 = vmul.f32 %v4602, %v4474
      %v4667 = vmul.f32 %v4603, %v4475
      %v4668 = vmul.f32 %v4604, %v4476
      %v4669 = vmul.f32 %v4605, %v4477
      %v4670 = vmul.f32 %v4606, %v4478
      %v4671 = vmul.f32 %v4607, %v4479
      %v4672 = vmul.f32 %v4608, %v4480
      %v4673 = vmul.f32 %v4609, %v4481
      %v4674 = vmul.f32 %v4610, %v4482
      %v4675 = vmul.f32 %v4611, %v4483
      %v4676 = vmul.f32 %v4612, %v4484
      %v4677 = vmul.f32 %v4613, %v4485
      %v4678 = vmul.f32 %v4614, %v4486
      %v4679 = vmul.f32 %v4615, %v4487
      %v4680 = vmul.f32 %v4616, %v4488
      %v4681 = vmul.f32 %v4617, %v4489
      %v4682 = vmul.f32 %v4618, %v4490
      %v4683 = vmul.f32 %v4619, %v4491
      %v4684 = vmul.f32 %v4620, %v4492
      %v4685 = vmul.f32 %v4621, %v4493
      %v4686 = vmul.f32 %v4622, %v4494
      %v4687 = vmul.f32 %v4623, %v4495
      %v4688 = vmul.f32 %v4624, %v4496
      %v4689 = vadd.f32 %v4625, 1.4214138
      %v4690 = vadd.f32 %v4626, 1.4214138
      %v4691 = vadd.f32 %v4627, 1.4214138
      %v4692 = vadd.f32 %v4628, 1.4214138
      %v4693 = vadd.f32 %v4629, 1.4214138
      %v4694 = vadd.f32 %v4630, 1.4214138
      %v4695 = vadd.f32 %v4631, 1.4214138
      %v4696 = vadd.f32 %v4632, 1.4214138
      %v4697 = vadd.f32 %v4633, 1.4214138
      %v4698 = vadd.f32 %v4634, 1.4214138
      %v4699 = vadd.f32 %v4635, 1.4214138
      %v4700 = vadd.f32 %v4636, 1.4214138
      %v4701 = vadd.f32 %v4637, 1.4214138
      %v4702 = vadd.f32 %v4638, 1.4214138
      %v4703 = vadd.f32 %v4639, 1.4214138
      %v4704 = vadd.f32 %v4640, 1.4214138
      %v4705 = vadd.f32 %v4641, 1.4214138
      %v4706 = vadd.f32 %v4642, 1.4214138
      %v4707 = vadd.f32 %v4643, 1.4214138
      %v4708 = vadd.f32 %v4644, 1.4214138
      %v4709 = vadd.f32 %v4645, 1.4214138
      %v4710 = vadd.f32 %v4646, 1.4214138
      %v4711 = vadd.f32 %v4647, 1.4214138
      %v4712 = vadd.f32 %v4648, 1.4214138
      %v4713 = vadd.f32 %v4649, 1.4214138
      %v4714 = vadd.f32 %v4650, 1.4214138
      %v4715 = vadd.f32 %v4651, 1.4214138
      %v4716 = vadd.f32 %v4652, 1.4214138
      %v4717 = vadd.f32 %v4653, 1.4214138
      %v4718 = vadd.f32 %v4654, 1.4214138
      %v4719 = vadd.f32 %v4655, 1.4214138
      %v4720 = vadd.f32 %v4656, 1.4214138
      %v4721 = vadd.f32 %v4657, 1.4214138
      %v4722 = vadd.f32 %v4658, 1.4214138
      %v4723 = vadd.f32 %v4659, 1.4214138
      %v4724 = vadd.f32 %v4660, 1.4214138
      %v4725 = vadd.f32 %v4661, 1.4214138
      %v4726 = vadd.f32 %v4662, 1.4214138
      %v4727 = vadd.f32 %v4663, 1.4214138
      %v4728 = vadd.f32 %v4664, 1.4214138
      %v4729 = vadd.f32 %v4665, 1.4214138
      %v4730 = vadd.f32 %v4666, 1.4214138
      %v4731 = vadd.f32 %v4667, 1.4214138
      %v4732 = vadd.f32 %v4668, 1.4214138
      %v4733 = vadd.f32 %v4669, 1.4214138
      %v4734 = vadd.f32 %v4670, 1.4214138
      %v4735 = vadd.f32 %v4671, 1.4214138
      %v4736 = vadd.f32 %v4672, 1.4214138
      %v4737 = vadd.f32 %v4673, 1.4214138
      %v4738 = vadd.f32 %v4674, 1.4214138
      %v4739 = vadd.f32 %v4675, 1.4214138
      %v4740 = vadd.f32 %v4676, 1.4214138
      %v4741 = vadd.f32 %v4677, 1.4214138
      %v4742 = vadd.f32 %v4678, 1.4214138
      %v4743 = vadd.f32 %v4679, 1.4214138
      %v4744 = vadd.f32 %v4680, 1.4214138
      %v4745 = vadd.f32 %v4681, 1.4214138
      %v4746 = vadd.f32 %v4682, 1.4214138
      %v4747 = vadd.f32 %v4683, 1.4214138
      %v4748 = vadd.f32 %v4684, 1.4214138
      %v4749 = vadd.f32 %v4685, 1.4214138
      %v4750 = vadd.f32 %v4686, 1.4214138
      %v4751 = vadd.f32 %v4687, 1.4214138
      %v4752 = vadd.f32 %v4688, 1.4214138
      %v4753 = vmul.f32 %v4689, %v4433
      %v4754 = vmul.f32 %v4690, %v4434
      %v4755 = vmul.f32 %v4691, %v4435
      %v4756 = vmul.f32 %v4692, %v4436
      %v4757 = vmul.f32 %v4693, %v4437
      %v4758 = vmul.f32 %v4694, %v4438
      %v4759 = vmul.f32 %v4695, %v4439
      %v4760 = vmul.f32 %v4696, %v4440
      %v4761 = vmul.f32 %v4697, %v4441
      %v4762 = vmul.f32 %v4698, %v4442
      %v4763 = vmul.f32 %v4699, %v4443
      %v4764 = vmul.f32 %v4700, %v4444
      %v4765 = vmul.f32 %v4701, %v4445
      %v4766 = vmul.f32 %v4702, %v4446
      %v4767 = vmul.f32 %v4703, %v4447
      %v4768 = vmul.f32 %v4704, %v4448
      %v4769 = vmul.f32 %v4705, %v4449
      %v4770 = vmul.f32 %v4706, %v4450
      %v4771 = vmul.f32 %v4707, %v4451
      %v4772 = vmul.f32 %v4708, %v4452
      %v4773 = vmul.f32 %v4709, %v4453
      %v4774 = vmul.f32 %v4710, %v4454
      %v4775 = vmul.f32 %v4711, %v4455
      %v4776 = vmul.f32 %v4712, %v4456
      %v4777 = vmul.f32 %v4713, %v4457
      %v4778 = vmul.f32 %v4714, %v4458
      %v4779 = vmul.f32 %v4715, %v4459
      %v4780 = vmul.f32 %v4716, %v4460
      %v4781 = vmul.f32 %v4717, %v4461
      %v4782 = vmul.f32 %v4718, %v4462
      %v4783 = vmul.f32 %v4719, %v4463
      %v4784 = vmul.f32 %v4720, %v4464
      %v4785 = vmul.f32 %v4721, %v4465
      %v4786 = vmul.f32 %v4722, %v4466
      %v4787 = vmul.f32 %v4723, %v4467
      %v4788 = vmul.f32 %v4724, %v4468
      %v4789 = vmul.f32 %v4725, %v4469
      %v4790 = vmul.f32 %v4726, %v4470
      %v4791 = vmul.f32 %v4727, %v4471
      %v4792 = vmul.f32 %v4728, %v4472
      %v4793 = vmul.f32 %v4729, %v4473
      %v4794 = vmul.f32 %v4730, %v4474
      %v4795 = vmul.f32 %v4731, %v4475
      %v4796 = vmul.f32 %v4732, %v4476
      %v4797 = vmul.f32 %v4733, %v4477
      %v4798 = vmul.f32 %v4734, %v4478
      %v4799 = vmul.f32 %v4735, %v4479
      %v4800 = vmul.f32 %v4736, %v4480
      %v4801 = vmul.f32 %v4737, %v4481
      %v4802 = vmul.f32 %v4738, %v4482
      %v4803 = vmul.f32 %v4739, %v4483
      %v4804 = vmul.f32 %v4740, %v4484
      %v4805 = vmul.f32 %v4741, %v4485
      %v4806 = vmul.f32 %v4742, %v4486
      %v4807 = vmul.f32 %v4743, %v4487
      %v4808 = vmul.f32 %v4744, %v4488
      %v4809 = vmul.f32 %v4745, %v4489
      %v4810 = vmul.f32 %v4746, %v4490
      %v4811 = vmul.f32 %v4747, %v4491
      %v4812 = vmul.f32 %v4748, %v4492
      %v4813 = vmul.f32 %v4749, %v4493
      %v4814 = vmul.f32 %v4750, %v4494
      %v4815 = vmul.f32 %v4751, %v4495
      %v4816 = vmul.f32 %v4752, %v4496
      %v4817 = vadd.f32 %v4753, -0.28449672
      %v4818 = vadd.f32 %v4754, -0.28449672
      %v4819 = vadd.f32 %v4755, -0.28449672
      %v4820 = vadd.f32 %v4756, -0.28449672
      %v4821 = vadd.f32 %v4757, -0.28449672
      %v4822 = vadd.f32 %v4758, -0.28449672
      %v4823 = vadd.f32 %v4759, -0.28449672
      %v4824 = vadd.f32 %v4760, -0.28449672
      %v4825 = vadd.f32 %v4761, -0.28449672
      %v4826 = vadd.f32 %v4762, -0.28449672
      %v4827 = vadd.f32 %v4763, -0.28449672
      %v4828 = vadd.f32 %v4764, -0.28449672
      %v4829 = vadd.f32 %v4765, -0.28449672
      %v4830 = vadd.f32 %v4766, -0.28449672
      %v4831 = vadd.f32 %v4767, -0.28449672
      %v4832 = vadd.f32 %v4768, -0.28449672
      %v4833 = vadd.f32 %v4769, -0.28449672
      %v4834 = vadd.f32 %v4770, -0.28449672
      %v4835 = vadd.f32 %v4771, -0.28449672
      %v4836 = vadd.f32 %v4772, -0.28449672
      %v4837 = vadd.f32 %v4773, -0.28449672
      %v4838 = vadd.f32 %v4774, -0.28449672
      %v4839 = vadd.f32 %v4775, -0.28449672
      %v4840 = vadd.f32 %v4776, -0.28449672
      %v4841 = vadd.f32 %v4777, -0.28449672
      %v4842 = vadd.f32 %v4778, -0.28449672
      %v4843 = vadd.f32 %v4779, -0.28449672
      %v4844 = vadd.f32 %v4780, -0.28449672
      %v4845 = vadd.f32 %v4781, -0.28449672
      %v4846 = vadd.f32 %v4782, -0.28449672
      %v4847 = vadd.f32 %v4783, -0.28449672
      %v4848 = vadd.f32 %v4784, -0.28449672
      %v4849 = vadd.f32 %v4785, -0.28449672
      %v4850 = vadd.f32 %v4786, -0.28449672
      %v4851 = vadd.f32 %v4787, -0.28449672
      %v4852 = vadd.f32 %v4788, -0.28449672
      %v4853 = vadd.f32 %v4789, -0.28449672
      %v4854 = vadd.f32 %v4790, -0.28449672
      %v4855 = vadd.f32 %v4791, -0.28449672
      %v4856 = vadd.f32 %v4792, -0.28449672
      %v4857 = vadd.f32 %v4793, -0.28449672
      %v4858 = vadd.f32 %v4794, -0.28449672
      %v4859 = vadd.f32 %v4795, -0.28449672
      %v4860 = vadd.f32 %v4796, -0.28449672
      %v4861 = vadd.f32 %v4797, -0.28449672
      %v4862 = vadd.f32 %v4798, -0.28449672
      %v4863 = vadd.f32 %v4799, -0.28449672
      %v4864 = vadd.f32 %v4800, -0.28449672
      %v4865 = vadd.f32 %v4801, -0.28449672
      %v4866 = vadd.f32 %v4802, -0.28449672
      %v4867 = vadd.f32 %v4803, -0.28449672
      %v4868 = vadd.f32 %v4804, -0.28449672
      %v4869 = vadd.f32 %v4805, -0.28449672
      %v4870 = vadd.f32 %v4806, -0.28449672
      %v4871 = vadd.f32 %v4807, -0.28449672
      %v4872 = vadd.f32 %v4808, -0.28449672
      %v4873 = vadd.f32 %v4809, -0.28449672
      %v4874 = vadd.f32 %v4810, -0.28449672
      %v4875 = vadd.f32 %v4811, -0.28449672
      %v4876 = vadd.f32 %v4812, -0.28449672
      %v4877 = vadd.f32 %v4813, -0.28449672
      %v4878 = vadd.f32 %v4814, -0.28449672
      %v4879 = vadd.f32 %v4815, -0.28449672
      %v4880 = vadd.f32 %v4816, -0.28449672
      %v4881 = vmul.f32 %v4817, %v4433
      %v4882 = vmul.f32 %v4818, %v4434
      %v4883 = vmul.f32 %v4819, %v4435
      %v4884 = vmul.f32 %v4820, %v4436
      %v4885 = vmul.f32 %v4821, %v4437
      %v4886 = vmul.f32 %v4822, %v4438
      %v4887 = vmul.f32 %v4823, %v4439
      %v4888 = vmul.f32 %v4824, %v4440
      %v4889 = vmul.f32 %v4825, %v4441
      %v4890 = vmul.f32 %v4826, %v4442
      %v4891 = vmul.f32 %v4827, %v4443
      %v4892 = vmul.f32 %v4828, %v4444
      %v4893 = vmul.f32 %v4829, %v4445
      %v4894 = vmul.f32 %v4830, %v4446
      %v4895 = vmul.f32 %v4831, %v4447
      %v4896 = vmul.f32 %v4832, %v4448
      %v4897 = vmul.f32 %v4833, %v4449
      %v4898 = vmul.f32 %v4834, %v4450
      %v4899 = vmul.f32 %v4835, %v4451
      %v4900 = vmul.f32 %v4836, %v4452
      %v4901 = vmul.f32 %v4837, %v4453
      %v4902 = vmul.f32 %v4838, %v4454
      %v4903 = vmul.f32 %v4839, %v4455
      %v4904 = vmul.f32 %v4840, %v4456
      %v4905 = vmul.f32 %v4841, %v4457
      %v4906 = vmul.f32 %v4842, %v4458
      %v4907 = vmul.f32 %v4843, %v4459
      %v4908 = vmul.f32 %v4844, %v4460
      %v4909 = vmul.f32 %v4845, %v4461
      %v4910 = vmul.f32 %v4846, %v4462
      %v4911 = vmul.f32 %v4847, %v4463
      %v4912 = vmul.f32 %v4848, %v4464
      %v4913 = vmul.f32 %v4849, %v4465
      %v4914 = vmul.f32 %v4850, %v4466
      %v4915 = vmul.f32 %v4851, %v4467
      %v4916 = vmul.f32 %v4852, %v4468
      %v4917 = vmul.f32 %v4853, %v4469
      %v4918 = vmul.f32 %v4854, %v4470
      %v4919 = vmul.f32 %v4855, %v4471
      %v4920 = vmul.f32 %v4856, %v4472
      %v4921 = vmul.f32 %v4857, %v4473
      %v4922 = vmul.f32 %v4858, %v4474
      %v4923 = vmul.f32 %v4859, %v4475
      %v4924 = vmul.f32 %v4860, %v4476
      %v4925 = vmul.f32 %v4861, %v4477
      %v4926 = vmul.f32 %v4862, %v4478
      %v4927 = vmul.f32 %v4863, %v4479
      %v4928 = vmul.f32 %v4864, %v4480
      %v4929 = vmul.f32 %v4865, %v4481
      %v4930 = vmul.f32 %v4866, %v4482
      %v4931 = vmul.f32 %v4867, %v4483
      %v4932 = vmul.f32 %v4868, %v4484
      %v4933 = vmul.f32 %v4869, %v4485
      %v4934 = vmul.f32 %v4870, %v4486
      %v4935 = vmul.f32 %v4871, %v4487
      %v4936 = vmul.f32 %v4872, %v4488
      %v4937 = vmul.f32 %v4873, %v4489
      %v4938 = vmul.f32 %v4874, %v4490
      %v4939 = vmul.f32 %v4875, %v4491
      %v4940 = vmul.f32 %v4876, %v4492
      %v4941 = vmul.f32 %v4877, %v4493
      %v4942 = vmul.f32 %v4878, %v4494
      %v4943 = vmul.f32 %v4879, %v4495
      %v4944 = vmul.f32 %v4880, %v4496
      %v4945 = vadd.f32 %v4881, 0.2548296
      %v4946 = vadd.f32 %v4882, 0.2548296
      %v4947 = vadd.f32 %v4883, 0.2548296
      %v4948 = vadd.f32 %v4884, 0.2548296
      %v4949 = vadd.f32 %v4885, 0.2548296
      %v4950 = vadd.f32 %v4886, 0.2548296
      %v4951 = vadd.f32 %v4887, 0.2548296
      %v4952 = vadd.f32 %v4888, 0.2548296
      %v4953 = vadd.f32 %v4889, 0.2548296
      %v4954 = vadd.f32 %v4890, 0.2548296
      %v4955 = vadd.f32 %v4891, 0.2548296
      %v4956 = vadd.f32 %v4892, 0.2548296
      %v4957 = vadd.f32 %v4893, 0.2548296
      %v4958 = vadd.f32 %v4894, 0.2548296
      %v4959 = vadd.f32 %v4895, 0.2548296
      %v4960 = vadd.f32 %v4896, 0.2548296
      %v4961 = vadd.f32 %v4897, 0.2548296
      %v4962 = vadd.f32 %v4898, 0.2548296
      %v4963 = vadd.f32 %v4899, 0.2548296
      %v4964 = vadd.f32 %v4900, 0.2548296
      %v4965 = vadd.f32 %v4901, 0.2548296
      %v4966 = vadd.f32 %v4902, 0.2548296
      %v4967 = vadd.f32 %v4903, 0.2548296
      %v4968 = vadd.f32 %v4904, 0.2548296
      %v4969 = vadd.f32 %v4905, 0.2548296
      %v4970 = vadd.f32 %v4906, 0.2548296
      %v4971 = vadd.f32 %v4907, 0.2548296
      %v4972 = vadd.f32 %v4908, 0.2548296
      %v4973 = vadd.f32 %v4909, 0.2548296
      %v4974 = vadd.f32 %v4910, 0.2548296
      %v4975 = vadd.f32 %v4911, 0.2548296
      %v4976 = vadd.f32 %v4912, 0.2548296
      %v4977 = vadd.f32 %v4913, 0.2548296
      %v4978 = vadd.f32 %v4914, 0.2548296
      %v4979 = vadd.f32 %v4915, 0.2548296
      %v4980 = vadd.f32 %v4916, 0.2548296
      %v4981 = vadd.f32 %v4917, 0.2548296
      %v4982 = vadd.f32 %v4918, 0.2548296
      %v4983 = vadd.f32 %v4919, 0.2548296
      %v4984 = vadd.f32 %v4920, 0.2548296
      %v4985 = vadd.f32 %v4921, 0.2548296
      %v4986 = vadd.f32 %v4922, 0.2548296
      %v4987 = vadd.f32 %v4923, 0.2548296
      %v4988 = vadd.f32 %v4924, 0.2548296
      %v4989 = vadd.f32 %v4925, 0.2548296
      %v4990 = vadd.f32 %v4926, 0.2548296
      %v4991 = vadd.f32 %v4927, 0.2548296
      %v4992 = vadd.f32 %v4928, 0.2548296
      %v4993 = vadd.f32 %v4929, 0.2548296
      %v4994 = vadd.f32 %v4930, 0.2548296
      %v4995 = vadd.f32 %v4931, 0.2548296
      %v4996 = vadd.f32 %v4932, 0.2548296
      %v4997 = vadd.f32 %v4933, 0.2548296
      %v4998 = vadd.f32 %v4934, 0.2548296
      %v4999 = vadd.f32 %v4935, 0.2548296
      %v5000 = vadd.f32 %v4936, 0.2548296
      %v5001 = vadd.f32 %v4937, 0.2548296
      %v5002 = vadd.f32 %v4938, 0.2548296
      %v5003 = vadd.f32 %v4939, 0.2548296
      %v5004 = vadd.f32 %v4940, 0.2548296
      %v5005 = vadd.f32 %v4941, 0.2548296
      %v5006 = vadd.f32 %v4942, 0.2548296
      %v5007 = vadd.f32 %v4943, 0.2548296
      %v5008 = vadd.f32 %v4944, 0.2548296
      %v5009 = vmul.f32 %v4945, %v4433
      %v5010 = vmul.f32 %v4946, %v4434
      %v5011 = vmul.f32 %v4947, %v4435
      %v5012 = vmul.f32 %v4948, %v4436
      %v5013 = vmul.f32 %v4949, %v4437
      %v5014 = vmul.f32 %v4950, %v4438
      %v5015 = vmul.f32 %v4951, %v4439
      %v5016 = vmul.f32 %v4952, %v4440
      %v5017 = vmul.f32 %v4953, %v4441
      %v5018 = vmul.f32 %v4954, %v4442
      %v5019 = vmul.f32 %v4955, %v4443
      %v5020 = vmul.f32 %v4956, %v4444
      %v5021 = vmul.f32 %v4957, %v4445
      %v5022 = vmul.f32 %v4958, %v4446
      %v5023 = vmul.f32 %v4959, %v4447
      %v5024 = vmul.f32 %v4960, %v4448
      %v5025 = vmul.f32 %v4961, %v4449
      %v5026 = vmul.f32 %v4962, %v4450
      %v5027 = vmul.f32 %v4963, %v4451
      %v5028 = vmul.f32 %v4964, %v4452
      %v5029 = vmul.f32 %v4965, %v4453
      %v5030 = vmul.f32 %v4966, %v4454
      %v5031 = vmul.f32 %v4967, %v4455
      %v5032 = vmul.f32 %v4968, %v4456
      %v5033 = vmul.f32 %v4969, %v4457
      %v5034 = vmul.f32 %v4970, %v4458
      %v5035 = vmul.f32 %v4971, %v4459
      %v5036 = vmul.f32 %v4972, %v4460
      %v5037 = vmul.f32 %v4973, %v4461
      %v5038 = vmul.f32 %v4974, %v4462
      %v5039 = vmul.f32 %v4975, %v4463
      %v5040 = vmul.f32 %v4976, %v4464
      %v5041 = vmul.f32 %v4977, %v4465
      %v5042 = vmul.f32 %v4978, %v4466
      %v5043 = vmul.f32 %v4979, %v4467
      %v5044 = vmul.f32 %v4980, %v4468
      %v5045 = vmul.f32 %v4981, %v4469
      %v5046 = vmul.f32 %v4982, %v4470
      %v5047 = vmul.f32 %v4983, %v4471
      %v5048 = vmul.f32 %v4984, %v4472
      %v5049 = vmul.f32 %v4985, %v4473
      %v5050 = vmul.f32 %v4986, %v4474
      %v5051 = vmul.f32 %v4987, %v4475
      %v5052 = vmul.f32 %v4988, %v4476
      %v5053 = vmul.f32 %v4989, %v4477
      %v5054 = vmul.f32 %v4990, %v4478
      %v5055 = vmul.f32 %v4991, %v4479
      %v5056 = vmul.f32 %v4992, %v4480
      %v5057 = vmul.f32 %v4993, %v4481
      %v5058 = vmul.f32 %v4994, %v4482
      %v5059 = vmul.f32 %v4995, %v4483
      %v5060 = vmul.f32 %v4996, %v4484
      %v5061 = vmul.f32 %v4997, %v4485
      %v5062 = vmul.f32 %v4998, %v4486
      %v5063 = vmul.f32 %v4999, %v4487
      %v5064 = vmul.f32 %v5000, %v4488
      %v5065 = vmul.f32 %v5001, %v4489
      %v5066 = vmul.f32 %v5002, %v4490
      %v5067 = vmul.f32 %v5003, %v4491
      %v5068 = vmul.f32 %v5004, %v4492
      %v5069 = vmul.f32 %v5005, %v4493
      %v5070 = vmul.f32 %v5006, %v4494
      %v5071 = vmul.f32 %v5007, %v4495
      %v5072 = vmul.f32 %v5008, %v4496
      %v5073 = vsub.f32 0.0, %v4241
      %v5074 = vsub.f32 0.0, %v4242
      %v5075 = vsub.f32 0.0, %v4243
      %v5076 = vsub.f32 0.0, %v4244
      %v5077 = vsub.f32 0.0, %v4245
      %v5078 = vsub.f32 0.0, %v4246
      %v5079 = vsub.f32 0.0, %v4247
      %v5080 = vsub.f32 0.0, %v4248
      %v5081 = vsub.f32 0.0, %v4249
      %v5082 = vsub.f32 0.0, %v4250
      %v5083 = vsub.f32 0.0, %v4251
      %v5084 = vsub.f32 0.0, %v4252
      %v5085 = vsub.f32 0.0, %v4253
      %v5086 = vsub.f32 0.0, %v4254
      %v5087 = vsub.f32 0.0, %v4255
      %v5088 = vsub.f32 0.0, %v4256
      %v5089 = vsub.f32 0.0, %v4257
      %v5090 = vsub.f32 0.0, %v4258
      %v5091 = vsub.f32 0.0, %v4259
      %v5092 = vsub.f32 0.0, %v4260
      %v5093 = vsub.f32 0.0, %v4261
      %v5094 = vsub.f32 0.0, %v4262
      %v5095 = vsub.f32 0.0, %v4263
      %v5096 = vsub.f32 0.0, %v4264
      %v5097 = vsub.f32 0.0, %v4265
      %v5098 = vsub.f32 0.0, %v4266
      %v5099 = vsub.f32 0.0, %v4267
      %v5100 = vsub.f32 0.0, %v4268
      %v5101 = vsub.f32 0.0, %v4269
      %v5102 = vsub.f32 0.0, %v4270
      %v5103 = vsub.f32 0.0, %v4271
      %v5104 = vsub.f32 0.0, %v4272
      %v5105 = vsub.f32 0.0, %v4273
      %v5106 = vsub.f32 0.0, %v4274
      %v5107 = vsub.f32 0.0, %v4275
      %v5108 = vsub.f32 0.0, %v4276
      %v5109 = vsub.f32 0.0, %v4277
      %v5110 = vsub.f32 0.0, %v4278
      %v5111 = vsub.f32 0.0, %v4279
      %v5112 = vsub.f32 0.0, %v4280
      %v5113 = vsub.f32 0.0, %v4281
      %v5114 = vsub.f32 0.0, %v4282
      %v5115 = vsub.f32 0.0, %v4283
      %v5116 = vsub.f32 0.0, %v4284
      %v5117 = vsub.f32 0.0, %v4285
      %v5118 = vsub.f32 0.0, %v4286
      %v5119 = vsub.f32 0.0, %v4287
      %v5120 = vsub.f32 0.0, %v4288
      %v5121 = vsub.f32 0.0, %v4289
      %v5122 = vsub.f32 0.0, %v4290
      %v5123 = vsub.f32 0.0, %v4291
      %v5124 = vsub.f32 0.0, %v4292
      %v5125 = vsub.f32 0.0, %v4293
      %v5126 = vsub.f32 0.0, %v4294
      %v5127 = vsub.f32 0.0, %v4295
      %v5128 = vsub.f32 0.0, %v4296
      %v5129 = vsub.f32 0.0, %v4297
      %v5130 = vsub.f32 0.0, %v4298
      %v5131 = vsub.f32 0.0, %v4299
      %v5132 = vsub.f32 0.0, %v4300
      %v5133 = vsub.f32 0.0, %v4301
      %v5134 = vsub.f32 0.0, %v4302
      %v5135 = vsub.f32 0.0, %v4303
      %v5136 = vsub.f32 0.0, %v4304
      %v5137 = vmul.f32 %v5073, %v4241
      %v5138 = vmul.f32 %v5074, %v4242
      %v5139 = vmul.f32 %v5075, %v4243
      %v5140 = vmul.f32 %v5076, %v4244
      %v5141 = vmul.f32 %v5077, %v4245
      %v5142 = vmul.f32 %v5078, %v4246
      %v5143 = vmul.f32 %v5079, %v4247
      %v5144 = vmul.f32 %v5080, %v4248
      %v5145 = vmul.f32 %v5081, %v4249
      %v5146 = vmul.f32 %v5082, %v4250
      %v5147 = vmul.f32 %v5083, %v4251
      %v5148 = vmul.f32 %v5084, %v4252
      %v5149 = vmul.f32 %v5085, %v4253
      %v5150 = vmul.f32 %v5086, %v4254
      %v5151 = vmul.f32 %v5087, %v4255
      %v5152 = vmul.f32 %v5088, %v4256
      %v5153 = vmul.f32 %v5089, %v4257
      %v5154 = vmul.f32 %v5090, %v4258
      %v5155 = vmul.f32 %v5091, %v4259
      %v5156 = vmul.f32 %v5092, %v4260
      %v5157 = vmul.f32 %v5093, %v4261
      %v5158 = vmul.f32 %v5094, %v4262
      %v5159 = vmul.f32 %v5095, %v4263
      %v5160 = vmul.f32 %v5096, %v4264
      %v5161 = vmul.f32 %v5097, %v4265
      %v5162 = vmul.f32 %v5098, %v4266
      %v5163 = vmul.f32 %v5099, %v4267
      %v5164 = vmul.f32 %v5100, %v4268
      %v5165 = vmul.f32 %v5101, %v4269
      %v5166 = vmul.f32 %v5102, %v4270
      %v5167 = vmul.f32 %v5103, %v4271
      %v5168 = vmul.f32 %v5104, %v4272
      %v5169 = vmul.f32 %v5105, %v4273
      %v5170 = vmul.f32 %v5106, %v4274
      %v5171 = vmul.f32 %v5107, %v4275
      %v5172 = vmul.f32 %v5108, %v4276
      %v5173 = vmul.f32 %v5109, %v4277
      %v5174 = vmul.f32 %v5110, %v4278
      %v5175 = vmul.f32 %v5111, %v4279
      %v5176 = vmul.f32 %v5112, %v4280
      %v5177 = vmul.f32 %v5113, %v4281
      %v5178 = vmul.f32 %v5114, %v4282
      %v5179 = vmul.f32 %v5115, %v4283
      %v5180 = vmul.f32 %v5116, %v4284
      %v5181 = vmul.f32 %v5117, %v4285
      %v5182 = vmul.f32 %v5118, %v4286
      %v5183 = vmul.f32 %v5119, %v4287
      %v5184 = vmul.f32 %v5120, %v4288
      %v5185 = vmul.f32 %v5121, %v4289
      %v5186 = vmul.f32 %v5122, %v4290
      %v5187 = vmul.f32 %v5123, %v4291
      %v5188 = vmul.f32 %v5124, %v4292
      %v5189 = vmul.f32 %v5125, %v4293
      %v5190 = vmul.f32 %v5126, %v4294
      %v5191 = vmul.f32 %v5127, %v4295
      %v5192 = vmul.f32 %v5128, %v4296
      %v5193 = vmul.f32 %v5129, %v4297
      %v5194 = vmul.f32 %v5130, %v4298
      %v5195 = vmul.f32 %v5131, %v4299
      %v5196 = vmul.f32 %v5132, %v4300
      %v5197 = vmul.f32 %v5133, %v4301
      %v5198 = vmul.f32 %v5134, %v4302
      %v5199 = vmul.f32 %v5135, %v4303
      %v5200 = vmul.f32 %v5136, %v4304
      %v5201 = vmul.f32 %v5137, 1.442695
      %v5202 = vpow.pop %v5201
      %v5203 = vmul.f32 %v5138, 1.442695
      %v5204 = vpow.pop %v5203
      %v5205 = vmul.f32 %v5139, 1.442695
      %v5206 = vpow.pop %v5205
      %v5207 = vmul.f32 %v5140, 1.442695
      %v5208 = vpow.pop %v5207
      %v5209 = vmul.f32 %v5141, 1.442695
      %v5210 = vpow.pop %v5209
      %v5211 = vmul.f32 %v5142, 1.442695
      %v5212 = vpow.pop %v5211
      %v5213 = vmul.f32 %v5143, 1.442695
      %v5214 = vpow.pop %v5213
      %v5215 = vmul.f32 %v5144, 1.442695
      %v5216 = vpow.pop %v5215
      %v5217 = vmul.f32 %v5145, 1.442695
      %v5218 = vpow.pop %v5217
      %v5219 = vmul.f32 %v5146, 1.442695
      %v5220 = vpow.pop %v5219
      %v5221 = vmul.f32 %v5147, 1.442695
      %v5222 = vpow.pop %v5221
      %v5223 = vmul.f32 %v5148, 1.442695
      %v5224 = vpow.pop %v5223
      %v5225 = vmul.f32 %v5149, 1.442695
      %v5226 = vpow.pop %v5225
      %v5227 = vmul.f32 %v5150, 1.442695
      %v5228 = vpow.pop %v5227
      %v5229 = vmul.f32 %v5151, 1.442695
      %v5230 = vpow.pop %v5229
      %v5231 = vmul.f32 %v5152, 1.442695
      %v5232 = vpow.pop %v5231
      %v5233 = vmul.f32 %v5153, 1.442695
      %v5234 = vpow.pop %v5233
      %v5235 = vmul.f32 %v5154, 1.442695
      %v5236 = vpow.pop %v5235
      %v5237 = vmul.f32 %v5155, 1.442695
      %v5238 = vpow.pop %v5237
      %v5239 = vmul.f32 %v5156, 1.442695
      %v5240 = vpow.pop %v5239
      %v5241 = vmul.f32 %v5157, 1.442695
      %v5242 = vpow.pop %v5241
      %v5243 = vmul.f32 %v5158, 1.442695
      %v5244 = vpow.pop %v5243
      %v5245 = vmul.f32 %v5159, 1.442695
      %v5246 = vpow.pop %v5245
      %v5247 = vmul.f32 %v5160, 1.442695
      %v5248 = vpow.pop %v5247
      %v5249 = vmul.f32 %v5161, 1.442695
      %v5250 = vpow.pop %v5249
      %v5251 = vmul.f32 %v5162, 1.442695
      %v5252 = vpow.pop %v5251
      %v5253 = vmul.f32 %v5163, 1.442695
      %v5254 = vpow.pop %v5253
      %v5255 = vmul.f32 %v5164, 1.442695
      %v5256 = vpow.pop %v5255
      %v5257 = vmul.f32 %v5165, 1.442695
      %v5258 = vpow.pop %v5257
      %v5259 = vmul.f32 %v5166, 1.442695
      %v5260 = vpow.pop %v5259
      %v5261 = vmul.f32 %v5167, 1.442695
      %v5262 = vpow.pop %v5261
      %v5263 = vmul.f32 %v5168, 1.442695
      %v5264 = vpow.pop %v5263
      %v5265 = vmul.f32 %v5169, 1.442695
      %v5266 = vpow.pop %v5265
      %v5267 = vmul.f32 %v5170, 1.442695
      %v5268 = vpow.pop %v5267
      %v5269 = vmul.f32 %v5171, 1.442695
      %v5270 = vpow.pop %v5269
      %v5271 = vmul.f32 %v5172, 1.442695
      %v5272 = vpow.pop %v5271
      %v5273 = vmul.f32 %v5173, 1.442695
      %v5274 = vpow.pop %v5273
      %v5275 = vmul.f32 %v5174, 1.442695
      %v5276 = vpow.pop %v5275
      %v5277 = vmul.f32 %v5175, 1.442695
      %v5278 = vpow.pop %v5277
      %v5279 = vmul.f32 %v5176, 1.442695
      %v5280 = vpow.pop %v5279
      %v5281 = vmul.f32 %v5177, 1.442695
      %v5282 = vpow.pop %v5281
      %v5283 = vmul.f32 %v5178, 1.442695
      %v5284 = vpow.pop %v5283
      %v5285 = vmul.f32 %v5179, 1.442695
      %v5286 = vpow.pop %v5285
      %v5287 = vmul.f32 %v5180, 1.442695
      %v5288 = vpow.pop %v5287
      %v5289 = vmul.f32 %v5181, 1.442695
      %v5290 = vpow.pop %v5289
      %v5291 = vmul.f32 %v5182, 1.442695
      %v5292 = vpow.pop %v5291
      %v5293 = vmul.f32 %v5183, 1.442695
      %v5294 = vpow.pop %v5293
      %v5295 = vmul.f32 %v5184, 1.442695
      %v5296 = vpow.pop %v5295
      %v5297 = vmul.f32 %v5185, 1.442695
      %v5298 = vpow.pop %v5297
      %v5299 = vmul.f32 %v5186, 1.442695
      %v5300 = vpow.pop %v5299
      %v5301 = vmul.f32 %v5187, 1.442695
      %v5302 = vpow.pop %v5301
      %v5303 = vmul.f32 %v5188, 1.442695
      %v5304 = vpow.pop %v5303
      %v5305 = vmul.f32 %v5189, 1.442695
      %v5306 = vpow.pop %v5305
      %v5307 = vmul.f32 %v5190, 1.442695
      %v5308 = vpow.pop %v5307
      %v5309 = vmul.f32 %v5191, 1.442695
      %v5310 = vpow.pop %v5309
      %v5311 = vmul.f32 %v5192, 1.442695
      %v5312 = vpow.pop %v5311
      %v5313 = vmul.f32 %v5193, 1.442695
      %v5314 = vpow.pop %v5313
      %v5315 = vmul.f32 %v5194, 1.442695
      %v5316 = vpow.pop %v5315
      %v5317 = vmul.f32 %v5195, 1.442695
      %v5318 = vpow.pop %v5317
      %v5319 = vmul.f32 %v5196, 1.442695
      %v5320 = vpow.pop %v5319
      %v5321 = vmul.f32 %v5197, 1.442695
      %v5322 = vpow.pop %v5321
      %v5323 = vmul.f32 %v5198, 1.442695
      %v5324 = vpow.pop %v5323
      %v5325 = vmul.f32 %v5199, 1.442695
      %v5326 = vpow.pop %v5325
      %v5327 = vmul.f32 %v5200, 1.442695
      %v5328 = vpow.pop %v5327
      %v5329 = vmul.f32 %v5009, %v5202
      %v5330 = vmul.f32 %v5010, %v5204
      %v5331 = vmul.f32 %v5011, %v5206
      %v5332 = vmul.f32 %v5012, %v5208
      %v5333 = vmul.f32 %v5013, %v5210
      %v5334 = vmul.f32 %v5014, %v5212
      %v5335 = vmul.f32 %v5015, %v5214
      %v5336 = vmul.f32 %v5016, %v5216
      %v5337 = vmul.f32 %v5017, %v5218
      %v5338 = vmul.f32 %v5018, %v5220
      %v5339 = vmul.f32 %v5019, %v5222
      %v5340 = vmul.f32 %v5020, %v5224
      %v5341 = vmul.f32 %v5021, %v5226
      %v5342 = vmul.f32 %v5022, %v5228
      %v5343 = vmul.f32 %v5023, %v5230
      %v5344 = vmul.f32 %v5024, %v5232
      %v5345 = vmul.f32 %v5025, %v5234
      %v5346 = vmul.f32 %v5026, %v5236
      %v5347 = vmul.f32 %v5027, %v5238
      %v5348 = vmul.f32 %v5028, %v5240
      %v5349 = vmul.f32 %v5029, %v5242
      %v5350 = vmul.f32 %v5030, %v5244
      %v5351 = vmul.f32 %v5031, %v5246
      %v5352 = vmul.f32 %v5032, %v5248
      %v5353 = vmul.f32 %v5033, %v5250
      %v5354 = vmul.f32 %v5034, %v5252
      %v5355 = vmul.f32 %v5035, %v5254
      %v5356 = vmul.f32 %v5036, %v5256
      %v5357 = vmul.f32 %v5037, %v5258
      %v5358 = vmul.f32 %v5038, %v5260
      %v5359 = vmul.f32 %v5039, %v5262
      %v5360 = vmul.f32 %v5040, %v5264
      %v5361 = vmul.f32 %v5041, %v5266
      %v5362 = vmul.f32 %v5042, %v5268
      %v5363 = vmul.f32 %v5043, %v5270
      %v5364 = vmul.f32 %v5044, %v5272
      %v5365 = vmul.f32 %v5045, %v5274
      %v5366 = vmul.f32 %v5046, %v5276
      %v5367 = vmul.f32 %v5047, %v5278
      %v5368 = vmul.f32 %v5048, %v5280
      %v5369 = vmul.f32 %v5049, %v5282
      %v5370 = vmul.f32 %v5050, %v5284
      %v5371 = vmul.f32 %v5051, %v5286
      %v5372 = vmul.f32 %v5052, %v5288
      %v5373 = vmul.f32 %v5053, %v5290
      %v5374 = vmul.f32 %v5054, %v5292
      %v5375 = vmul.f32 %v5055, %v5294
      %v5376 = vmul.f32 %v5056, %v5296
      %v5377 = vmul.f32 %v5057, %v5298
      %v5378 = vmul.f32 %v5058, %v5300
      %v5379 = vmul.f32 %v5059, %v5302
      %v5380 = vmul.f32 %v5060, %v5304
      %v5381 = vmul.f32 %v5061, %v5306
      %v5382 = vmul.f32 %v5062, %v5308
      %v5383 = vmul.f32 %v5063, %v5310
      %v5384 = vmul.f32 %v5064, %v5312
      %v5385 = vmul.f32 %v5065, %v5314
      %v5386 = vmul.f32 %v5066, %v5316
      %v5387 = vmul.f32 %v5067, %v5318
      %v5388 = vmul.f32 %v5068, %v5320
      %v5389 = vmul.f32 %v5069, %v5322
      %v5390 = vmul.f32 %v5070, %v5324
      %v5391 = vmul.f32 %v5071, %v5326
      %v5392 = vmul.f32 %v5072, %v5328
      %v5393 = vsub.f32 1.0, %v5329
      %v5394 = vsub.f32 1.0, %v5330
      %v5395 = vsub.f32 1.0, %v5331
      %v5396 = vsub.f32 1.0, %v5332
      %v5397 = vsub.f32 1.0, %v5333
      %v5398 = vsub.f32 1.0, %v5334
      %v5399 = vsub.f32 1.0, %v5335
      %v5400 = vsub.f32 1.0, %v5336
      %v5401 = vsub.f32 1.0, %v5337
      %v5402 = vsub.f32 1.0, %v5338
      %v5403 = vsub.f32 1.0, %v5339
      %v5404 = vsub.f32 1.0, %v5340
      %v5405 = vsub.f32 1.0, %v5341
      %v5406 = vsub.f32 1.0, %v5342
      %v5407 = vsub.f32 1.0, %v5343
      %v5408 = vsub.f32 1.0, %v5344
      %v5409 = vsub.f32 1.0, %v5345
      %v5410 = vsub.f32 1.0, %v5346
      %v5411 = vsub.f32 1.0, %v5347
      %v5412 = vsub.f32 1.0, %v5348
      %v5413 = vsub.f32 1.0, %v5349
      %v5414 = vsub.f32 1.0, %v5350
      %v5415 = vsub.f32 1.0, %v5351
      %v5416 = vsub.f32 1.0, %v5352
      %v5417 = vsub.f32 1.0, %v5353
      %v5418 = vsub.f32 1.0, %v5354
      %v5419 = vsub.f32 1.0, %v5355
      %v5420 = vsub.f32 1.0, %v5356
      %v5421 = vsub.f32 1.0, %v5357
      %v5422 = vsub.f32 1.0, %v5358
      %v5423 = vsub.f32 1.0, %v5359
      %v5424 = vsub.f32 1.0, %v5360
      %v5425 = vsub.f32 1.0, %v5361
      %v5426 = vsub.f32 1.0, %v5362
      %v5427 = vsub.f32 1.0, %v5363
      %v5428 = vsub.f32 1.0, %v5364
      %v5429 = vsub.f32 1.0, %v5365
      %v5430 = vsub.f32 1.0, %v5366
      %v5431 = vsub.f32 1.0, %v5367
      %v5432 = vsub.f32 1.0, %v5368
      %v5433 = vsub.f32 1.0, %v5369
      %v5434 = vsub.f32 1.0, %v5370
      %v5435 = vsub.f32 1.0, %v5371
      %v5436 = vsub.f32 1.0, %v5372
      %v5437 = vsub.f32 1.0, %v5373
      %v5438 = vsub.f32 1.0, %v5374
      %v5439 = vsub.f32 1.0, %v5375
      %v5440 = vsub.f32 1.0, %v5376
      %v5441 = vsub.f32 1.0, %v5377
      %v5442 = vsub.f32 1.0, %v5378
      %v5443 = vsub.f32 1.0, %v5379
      %v5444 = vsub.f32 1.0, %v5380
      %v5445 = vsub.f32 1.0, %v5381
      %v5446 = vsub.f32 1.0, %v5382
      %v5447 = vsub.f32 1.0, %v5383
      %v5448 = vsub.f32 1.0, %v5384
      %v5449 = vsub.f32 1.0, %v5385
      %v5450 = vsub.f32 1.0, %v5386
      %v5451 = vsub.f32 1.0, %v5387
      %v5452 = vsub.f32 1.0, %v5388
      %v5453 = vsub.f32 1.0, %v5389
      %v5454 = vsub.f32 1.0, %v5390
      %v5455 = vsub.f32 1.0, %v5391
      %v5456 = vsub.f32 1.0, %v5392
      %v5457 = vmul.f32 %v4177, %v5393
      %v5458 = vmul.f32 %v4178, %v5394
      %v5459 = vmul.f32 %v4179, %v5395
      %v5460 = vmul.f32 %v4180, %v5396
      %v5461 = vmul.f32 %v4181, %v5397
      %v5462 = vmul.f32 %v4182, %v5398
      %v5463 = vmul.f32 %v4183, %v5399
      %v5464 = vmul.f32 %v4184, %v5400
      %v5465 = vmul.f32 %v4185, %v5401
      %v5466 = vmul.f32 %v4186, %v5402
      %v5467 = vmul.f32 %v4187, %v5403
      %v5468 = vmul.f32 %v4188, %v5404
      %v5469 = vmul.f32 %v4189, %v5405
      %v5470 = vmul.f32 %v4190, %v5406
      %v5471 = vmul.f32 %v4191, %v5407
      %v5472 = vmul.f32 %v4192, %v5408
      %v5473 = vmul.f32 %v4193, %v5409
      %v5474 = vmul.f32 %v4194, %v5410
      %v5475 = vmul.f32 %v4195, %v5411
      %v5476 = vmul.f32 %v4196, %v5412
      %v5477 = vmul.f32 %v4197, %v5413
      %v5478 = vmul.f32 %v4198, %v5414
      %v5479 = vmul.f32 %v4199, %v5415
      %v5480 = vmul.f32 %v4200, %v5416
      %v5481 = vmul.f32 %v4201, %v5417
      %v5482 = vmul.f32 %v4202, %v5418
      %v5483 = vmul.f32 %v4203, %v5419
      %v5484 = vmul.f32 %v4204, %v5420
      %v5485 = vmul.f32 %v4205, %v5421
      %v5486 = vmul.f32 %v4206, %v5422
      %v5487 = vmul.f32 %v4207, %v5423
      %v5488 = vmul.f32 %v4208, %v5424
      %v5489 = vmul.f32 %v4209, %v5425
      %v5490 = vmul.f32 %v4210, %v5426
      %v5491 = vmul.f32 %v4211, %v5427
      %v5492 = vmul.f32 %v4212, %v5428
      %v5493 = vmul.f32 %v4213, %v5429
      %v5494 = vmul.f32 %v4214, %v5430
      %v5495 = vmul.f32 %v4215, %v5431
      %v5496 = vmul.f32 %v4216, %v5432
      %v5497 = vmul.f32 %v4217, %v5433
      %v5498 = vmul.f32 %v4218, %v5434
      %v5499 = vmul.f32 %v4219, %v5435
      %v5500 = vmul.f32 %v4220, %v5436
      %v5501 = vmul.f32 %v4221, %v5437
      %v5502 = vmul.f32 %v4222, %v5438
      %v5503 = vmul.f32 %v4223, %v5439
      %v5504 = vmul.f32 %v4224, %v5440
      %v5505 = vmul.f32 %v4225, %v5441
      %v5506 = vmul.f32 %v4226, %v5442
      %v5507 = vmul.f32 %v4227, %v5443
      %v5508 = vmul.f32 %v4228, %v5444
      %v5509 = vmul.f32 %v4229, %v5445
      %v5510 = vmul.f32 %v4230, %v5446
      %v5511 = vmul.f32 %v4231, %v5447
      %v5512 = vmul.f32 %v4232, %v5448
      %v5513 = vmul.f32 %v4233, %v5449
      %v5514 = vmul.f32 %v4234, %v5450
      %v5515 = vmul.f32 %v4235, %v5451
      %v5516 = vmul.f32 %v4236, %v5452
      %v5517 = vmul.f32 %v4237, %v5453
      %v5518 = vmul.f32 %v4238, %v5454
      %v5519 = vmul.f32 %v4239, %v5455
      %v5520 = vmul.f32 %v4240, %v5456
      %v5521 = vadd.f32 %v5457, 1.0
      %v5522 = vadd.f32 %v5458, 1.0
      %v5523 = vadd.f32 %v5459, 1.0
      %v5524 = vadd.f32 %v5460, 1.0
      %v5525 = vadd.f32 %v5461, 1.0
      %v5526 = vadd.f32 %v5462, 1.0
      %v5527 = vadd.f32 %v5463, 1.0
      %v5528 = vadd.f32 %v5464, 1.0
      %v5529 = vadd.f32 %v5465, 1.0
      %v5530 = vadd.f32 %v5466, 1.0
      %v5531 = vadd.f32 %v5467, 1.0
      %v5532 = vadd.f32 %v5468, 1.0
      %v5533 = vadd.f32 %v5469, 1.0
      %v5534 = vadd.f32 %v5470, 1.0
      %v5535 = vadd.f32 %v5471, 1.0
      %v5536 = vadd.f32 %v5472, 1.0
      %v5537 = vadd.f32 %v5473, 1.0
      %v5538 = vadd.f32 %v5474, 1.0
      %v5539 = vadd.f32 %v5475, 1.0
      %v5540 = vadd.f32 %v5476, 1.0
      %v5541 = vadd.f32 %v5477, 1.0
      %v5542 = vadd.f32 %v5478, 1.0
      %v5543 = vadd.f32 %v5479, 1.0
      %v5544 = vadd.f32 %v5480, 1.0
      %v5545 = vadd.f32 %v5481, 1.0
      %v5546 = vadd.f32 %v5482, 1.0
      %v5547 = vadd.f32 %v5483, 1.0
      %v5548 = vadd.f32 %v5484, 1.0
      %v5549 = vadd.f32 %v5485, 1.0
      %v5550 = vadd.f32 %v5486, 1.0
      %v5551 = vadd.f32 %v5487, 1.0
      %v5552 = vadd.f32 %v5488, 1.0
      %v5553 = vadd.f32 %v5489, 1.0
      %v5554 = vadd.f32 %v5490, 1.0
      %v5555 = vadd.f32 %v5491, 1.0
      %v5556 = vadd.f32 %v5492, 1.0
      %v5557 = vadd.f32 %v5493, 1.0
      %v5558 = vadd.f32 %v5494, 1.0
      %v5559 = vadd.f32 %v5495, 1.0
      %v5560 = vadd.f32 %v5496, 1.0
      %v5561 = vadd.f32 %v5497, 1.0
      %v5562 = vadd.f32 %v5498, 1.0
      %v5563 = vadd.f32 %v5499, 1.0
      %v5564 = vadd.f32 %v5500, 1.0
      %v5565 = vadd.f32 %v5501, 1.0
      %v5566 = vadd.f32 %v5502, 1.0
      %v5567 = vadd.f32 %v5503, 1.0
      %v5568 = vadd.f32 %v5504, 1.0
      %v5569 = vadd.f32 %v5505, 1.0
      %v5570 = vadd.f32 %v5506, 1.0
      %v5571 = vadd.f32 %v5507, 1.0
      %v5572 = vadd.f32 %v5508, 1.0
      %v5573 = vadd.f32 %v5509, 1.0
      %v5574 = vadd.f32 %v5510, 1.0
      %v5575 = vadd.f32 %v5511, 1.0
      %v5576 = vadd.f32 %v5512, 1.0
      %v5577 = vadd.f32 %v5513, 1.0
      %v5578 = vadd.f32 %v5514, 1.0
      %v5579 = vadd.f32 %v5515, 1.0
      %v5580 = vadd.f32 %v5516, 1.0
      %v5581 = vadd.f32 %v5517, 1.0
      %v5582 = vadd.f32 %v5518, 1.0
      %v5583 = vadd.f32 %v5519, 1.0
      %v5584 = vadd.f32 %v5520, 1.0
      %v5585 = vmul.f32 %v3985, %v5521
      %v5586 = vmul.f32 %v3986, %v5522
      %v5587 = vmul.f32 %v3987, %v5523
      %v5588 = vmul.f32 %v3988, %v5524
      %v5589 = vmul.f32 %v3989, %v5525
      %v5590 = vmul.f32 %v3990, %v5526
      %v5591 = vmul.f32 %v3991, %v5527
      %v5592 = vmul.f32 %v3992, %v5528
      %v5593 = vmul.f32 %v3993, %v5529
      %v5594 = vmul.f32 %v3994, %v5530
      %v5595 = vmul.f32 %v3995, %v5531
      %v5596 = vmul.f32 %v3996, %v5532
      %v5597 = vmul.f32 %v3997, %v5533
      %v5598 = vmul.f32 %v3998, %v5534
      %v5599 = vmul.f32 %v3999, %v5535
      %v5600 = vmul.f32 %v4000, %v5536
      %v5601 = vmul.f32 %v4001, %v5537
      %v5602 = vmul.f32 %v4002, %v5538
      %v5603 = vmul.f32 %v4003, %v5539
      %v5604 = vmul.f32 %v4004, %v5540
      %v5605 = vmul.f32 %v4005, %v5541
      %v5606 = vmul.f32 %v4006, %v5542
      %v5607 = vmul.f32 %v4007, %v5543
      %v5608 = vmul.f32 %v4008, %v5544
      %v5609 = vmul.f32 %v4009, %v5545
      %v5610 = vmul.f32 %v4010, %v5546
      %v5611 = vmul.f32 %v4011, %v5547
      %v5612 = vmul.f32 %v4012, %v5548
      %v5613 = vmul.f32 %v4013, %v5549
      %v5614 = vmul.f32 %v4014, %v5550
      %v5615 = vmul.f32 %v4015, %v5551
      %v5616 = vmul.f32 %v4016, %v5552
      %v5617 = vmul.f32 %v4017, %v5553
      %v5618 = vmul.f32 %v4018, %v5554
      %v5619 = vmul.f32 %v4019, %v5555
      %v5620 = vmul.f32 %v4020, %v5556
      %v5621 = vmul.f32 %v4021, %v5557
      %v5622 = vmul.f32 %v4022, %v5558
      %v5623 = vmul.f32 %v4023, %v5559
      %v5624 = vmul.f32 %v4024, %v5560
      %v5625 = vmul.f32 %v4025, %v5561
      %v5626 = vmul.f32 %v4026, %v5562
      %v5627 = vmul.f32 %v4027, %v5563
      %v5628 = vmul.f32 %v4028, %v5564
      %v5629 = vmul.f32 %v4029, %v5565
      %v5630 = vmul.f32 %v4030, %v5566
      %v5631 = vmul.f32 %v4031, %v5567
      %v5632 = vmul.f32 %v4032, %v5568
      %v5633 = vmul.f32 %v4033, %v5569
      %v5634 = vmul.f32 %v4034, %v5570
      %v5635 = vmul.f32 %v4035, %v5571
      %v5636 = vmul.f32 %v4036, %v5572
      %v5637 = vmul.f32 %v4037, %v5573
      %v5638 = vmul.f32 %v4038, %v5574
      %v5639 = vmul.f32 %v4039, %v5575
      %v5640 = vmul.f32 %v4040, %v5576
      %v5641 = vmul.f32 %v4041, %v5577
      %v5642 = vmul.f32 %v4042, %v5578
      %v5643 = vmul.f32 %v4043, %v5579
      %v5644 = vmul.f32 %v4044, %v5580
      %v5645 = vmul.f32 %v4045, %v5581
      %v5646 = vmul.f32 %v4046, %v5582
      %v5647 = vmul.f32 %v4047, %v5583
      %v5648 = vmul.f32 %v4048, %v5584
      %v5649 = vmul.f32 %v5585, %v957
      %v5650 = vmul.f32 %v5586, %v961
      %v5651 = vmul.f32 %v5587, %v967
      %v5652 = vmul.f32 %v5588, %v971
      %v5653 = vmul.f32 %v5589, %v977
      %v5654 = vmul.f32 %v5590, %v981
      %v5655 = vmul.f32 %v5591, %v987
      %v5656 = vmul.f32 %v5592, %v991
      %v5657 = vmul.f32 %v5593, %v997
      %v5658 = vmul.f32 %v5594, %v1001
      %v5659 = vmul.f32 %v5595, %v1007
      %v5660 = vmul.f32 %v5596, %v1011
      %v5661 = vmul.f32 %v5597, %v1017
      %v5662 = vmul.f32 %v5598, %v1021
      %v5663 = vmul.f32 %v5599, %v1027
      %v5664 = vmul.f32 %v5600, %v1031
      %v5665 = vmul.f32 %v5601, %v1037
      %v5666 = vmul.f32 %v5602, %v1041
      %v5667 = vmul.f32 %v5603, %v1047
      %v5668 = vmul.f32 %v5604, %v1051
      %v5669 = vmul.f32 %v5605, %v1057
      %v5670 = vmul.f32 %v5606, %v1061
      %v5671 = vmul.f32 %v5607, %v1067
      %v5672 = vmul.f32 %v5608, %v1071
      %v5673 = vmul.f32 %v5609, %v1077
      %v5674 = vmul.f32 %v5610, %v1081
      %v5675 = vmul.f32 %v5611, %v1087
      %v5676 = vmul.f32 %v5612, %v1091
      %v5677 = vmul.f32 %v5613, %v1097
      %v5678 = vmul.f32 %v5614, %v1101
      %v5679 = vmul.f32 %v5615, %v1107
      %v5680 = vmul.f32 %v5616, %v1111
      %v5681 = vmul.f32 %v5617, %v1117
      %v5682 = vmul.f32 %v5618, %v1121
      %v5683 = vmul.f32 %v5619, %v1127
      %v5684 = vmul.f32 %v5620, %v1131
      %v5685 = vmul.f32 %v5621, %v1137
      %v5686 = vmul.f32 %v5622, %v1141
      %v5687 = vmul.f32 %v5623, %v1147
      %v5688 = vmul.f32 %v5624, %v1151
      %v5689 = vmul.f32 %v5625, %v1157
      %v5690 = vmul.f32 %v5626, %v1161
      %v5691 = vmul.f32 %v5627, %v1167
      %v5692 = vmul.f32 %v5628, %v1171
      %v5693 = vmul.f32 %v5629, %v1177
      %v5694 = vmul.f32 %v5630, %v1181
      %v5695 = vmul.f32 %v5631, %v1187
      %v5696 = vmul.f32 %v5632, %v1191
      %v5697 = vmul.f32 %v5633, %v1197
      %v5698 = vmul.f32 %v5634, %v1201
      %v5699 = vmul.f32 %v5635, %v1207
      %v5700 = vmul.f32 %v5636, %v1211
      %v5701 = vmul.f32 %v5637, %v1217
      %v5702 = vmul.f32 %v5638, %v1221
      %v5703 = vmul.f32 %v5639, %v1227
      %v5704 = vmul.f32 %v5640, %v1231
      %v5705 = vmul.f32 %v5641, %v1237
      %v5706 = vmul.f32 %v5642, %v1241
      %v5707 = vmul.f32 %v5643, %v1247
      %v5708 = vmul.f32 %v5644, %v1251
      %v5709 = vmul.f32 %v5645, %v1257
      %v5710 = vmul.f32 %v5646, %v1261
      %v5711 = vmul.f32 %v5647, %v1267
      %v5712 = vmul.f32 %v5648, %v1271
      %v5713 = vpack.c.bf16 %v5650, %v5649
      %v5714 = vpack.c.bf16 %v5652, %v5651
      %v5715 = vpack.c.bf16 %v5654, %v5653
      %v5716 = vpack.c.bf16 %v5656, %v5655
      %v5717 = vpack.c.bf16 %v5658, %v5657
      %v5718 = vpack.c.bf16 %v5660, %v5659
      %v5719 = vpack.c.bf16 %v5662, %v5661
      %v5720 = vpack.c.bf16 %v5664, %v5663
      %v5721 = vpack.c.bf16 %v5666, %v5665
      %v5722 = vpack.c.bf16 %v5668, %v5667
      %v5723 = vpack.c.bf16 %v5670, %v5669
      %v5724 = vpack.c.bf16 %v5672, %v5671
      %v5725 = vpack.c.bf16 %v5674, %v5673
      %v5726 = vpack.c.bf16 %v5676, %v5675
      %v5727 = vpack.c.bf16 %v5678, %v5677
      %v5728 = vpack.c.bf16 %v5680, %v5679
      %v5729 = vpack.c.bf16 %v5682, %v5681
      %v5730 = vpack.c.bf16 %v5684, %v5683
      %v5731 = vpack.c.bf16 %v5686, %v5685
      %v5732 = vpack.c.bf16 %v5688, %v5687
      %v5733 = vpack.c.bf16 %v5690, %v5689
      %v5734 = vpack.c.bf16 %v5692, %v5691
      %v5735 = vpack.c.bf16 %v5694, %v5693
      %v5736 = vpack.c.bf16 %v5696, %v5695
      %v5737 = vpack.c.bf16 %v5698, %v5697
      %v5738 = vpack.c.bf16 %v5700, %v5699
      %v5739 = vpack.c.bf16 %v5702, %v5701
      %v5740 = vpack.c.bf16 %v5704, %v5703
      %v5741 = vpack.c.bf16 %v5706, %v5705
      %v5742 = vpack.c.bf16 %v5708, %v5707
      %v5743 = vpack.c.bf16 %v5710, %v5709
      %v5744 = vpack.c.bf16 %v5712, %v5711
      %v5745 = vld [vmem:[%s9] sm:$0xf]
      %v5746 = vld [vmem:[%s9 + $0x4] sm:$0xf]
      %v5747 = vld [vmem:[%s9 + $0x8] sm:$0xf]
      %v5748 = vld [vmem:[%s9 + $0xc] sm:$0xf]
      %v5749 = vld [vmem:[%s9 + $0x10] sm:$0xf]
      %v5750 = vld [vmem:[%s9 + $0x14] sm:$0xf]
      %v5751 = vld [vmem:[%s9 + $0x18] sm:$0xf]
      %v5752 = vld [vmem:[%s9 + $0x1c] sm:$0xf]
      %v5753 = vld [vmem:[%s9 + $0x20] sm:$0xf]
      %v5754 = vld [vmem:[%s9 + $0x24] sm:$0xf]
      %v5755 = vld [vmem:[%s9 + $0x28] sm:$0xf]
      %v5756 = vld [vmem:[%s9 + $0x2c] sm:$0xf]
      %v5757 = vld [vmem:[%s9 + $0x30] sm:$0xf]
      %v5758 = vld [vmem:[%s9 + $0x34] sm:$0xf]
      %v5759 = vld [vmem:[%s9 + $0x38] sm:$0xf]
      %v5760 = vld [vmem:[%s9 + $0x3c] sm:$0xf]
      %v5761 = vld [vmem:[%s10] sm:$0x1]
      %v5763 = vlaneseq
      %v5764 = vshrl.u32 %v5763, 7
      %v5765 = vsub.s32 0, %v5764
      %v5766 = vrot.slane %v5761, %v5765
      %v5784 = vunpack.c.l.b16 %v5745
      %v5785 = vunpack.c.l.b16 %v5746
      %v5786 = vunpack.c.l.b16 %v5747
      %v5787 = vunpack.c.l.b16 %v5748
      %v5788 = vunpack.c.l.b16 %v5749
      %v5789 = vunpack.c.l.b16 %v5750
      %v5790 = vunpack.c.l.b16 %v5751
      %v5791 = vunpack.c.l.b16 %v5752
      %v5792 = vunpack.c.l.b16 %v5753
      %v5793 = vunpack.c.l.b16 %v5754
      %v5794 = vunpack.c.l.b16 %v5755
      %v5795 = vunpack.c.l.b16 %v5756
      %v5796 = vunpack.c.l.b16 %v5757
      %v5797 = vunpack.c.l.b16 %v5758
      %v5798 = vunpack.c.l.b16 %v5759
      %v5799 = vunpack.c.l.b16 %v5760
      %v5800 = vpack.c.b16 %v5785, %v5784
      %v5801 = vpack.c.b16 %v5787, %v5786
      %v5802 = vpack.c.b16 %v5789, %v5788
      %v5803 = vpack.c.b16 %v5791, %v5790
      %v5804 = vpack.c.b16 %v5793, %v5792
      %v5805 = vpack.c.b16 %v5795, %v5794
      %v5806 = vpack.c.b16 %v5797, %v5796
      %v5807 = vpack.c.b16 %v5799, %v5798
      %5816 = vmatprep.subr.bf16.mxu0 0
      %5817 = vmatpush1.bf16.msra.mxu0 %v5807
      %5818 = vmatprep.subr.bf16.mxu0 0
      %5819 = vmatpush1.bf16.msra.mxu0 %v5806
      %5820 = vmatprep.subr.bf16.mxu0 0
      %5821 = vmatpush1.bf16.msra.mxu0 %v5805
      %5822 = vmatprep.subr.bf16.mxu0 0
      %5823 = vmatpush1.bf16.msra.mxu0 %v5804
      %5824 = vmatprep.subr.bf16.mxu0 0
      %5825 = vmatpush1.bf16.msra.mxu0 %v5803
      %5826 = vmatprep.subr.bf16.mxu0 0
      %5827 = vmatpush1.bf16.msra.mxu0 %v5802
      %5828 = vmatprep.subr.bf16.mxu0 0
      %5829 = vmatpush1.bf16.msra.mxu0 %v5801
      %5830 = vmatprep.subr.bf16.mxu0 0
      %5831 = vmatpush1.bf16.msra.mxu0 %v5800
      %5832 = vmatprep.subr.bf16.mxu0 0
      %5833 = vmatpush2.bf16.msra.mxu0 0
      %5834 = vmatprep.subr.bf16.mxu0 0
      %5835 = vmatpush2.bf16.msra.mxu0 0
      %5836 = vmatprep.subr.bf16.mxu0 0
      %5837 = vmatpush2.bf16.msra.mxu0 0
      %5838 = vmatprep.subr.bf16.mxu0 0
      %5839 = vmatpush2.bf16.msra.mxu0 0
      %5840 = vmatprep.subr.bf16.mxu0 0
      %5841 = vmatpush2.bf16.msra.mxu0 0
      %5842 = vmatprep.subr.bf16.mxu0 0
      %5843 = vmatpush2.bf16.msra.mxu0 0
      %5844 = vmatprep.subr.bf16.mxu0 0
      %5845 = vmatpush2.bf16.msra.mxu0 0
      %5846 = vmatprep.subr.bf16.mxu0 0
      %5847 = vmatpush2.bf16.msra.mxu0 0
      %5848 = vmatprep.mubr.bf16.mxu0 0
      %5849 = vmatmul.mubr.bf16.gmra.mxu0 %v5713
      %v5850 = vpop.f32.mrf.mxu0
      %v5851 = vadd.f32 %v5766, %v5850
      %v5852 = vpop.f32.mrf.mxu0
      %v5853 = vpop.f32.mrf.mxu0
      %v5854 = vadd.f32 %v5766, %v5853
      %v5855 = vpop.f32.mrf.mxu0
      %5856 = vmatprep.mubr.bf16.mxu0 0
      %5857 = vmatmul.mubr.bf16.gmra.mxu0 %v5714
      %v5858 = vpop.f32.mrf.mxu0
      %v5859 = vadd.f32 %v5766, %v5858
      %v5860 = vpop.f32.mrf.mxu0
      %v5861 = vpop.f32.mrf.mxu0
      %v5862 = vadd.f32 %v5766, %v5861
      %v5863 = vpop.f32.mrf.mxu0
      %5864 = vmatprep.mubr.bf16.mxu0 0
      %5865 = vmatmul.mubr.bf16.gmra.mxu0 %v5715
      %v5866 = vpop.f32.mrf.mxu0
      %v5867 = vadd.f32 %v5766, %v5866
      %v5868 = vpop.f32.mrf.mxu0
      %v5869 = vpop.f32.mrf.mxu0
      %v5870 = vadd.f32 %v5766, %v5869
      %v5871 = vpop.f32.mrf.mxu0
      %5872 = vmatprep.mubr.bf16.mxu0 0
      %5873 = vmatmul.mubr.bf16.gmra.mxu0 %v5716
      %v5874 = vpop.f32.mrf.mxu0
      %v5875 = vadd.f32 %v5766, %v5874
      %v5876 = vpop.f32.mrf.mxu0
      %v5877 = vpop.f32.mrf.mxu0
      %v5878 = vadd.f32 %v5766, %v5877
      %v5879 = vpop.f32.mrf.mxu0
      %5880 = vmatprep.mubr.bf16.mxu0 0
      %5881 = vmatmul.mubr.bf16.gmra.mxu0 %v5717
      %v5882 = vpop.f32.mrf.mxu0
      %v5883 = vadd.f32 %v5766, %v5882
      %v5884 = vpop.f32.mrf.mxu0
      %v5885 = vpop.f32.mrf.mxu0
      %v5886 = vadd.f32 %v5766, %v5885
      %v5887 = vpop.f32.mrf.mxu0
      %5888 = vmatprep.mubr.bf16.mxu0 0
      %5889 = vmatmul.mubr.bf16.gmra.mxu0 %v5718
      %v5890 = vpop.f32.mrf.mxu0
      %v5891 = vadd.f32 %v5766, %v5890
      %v5892 = vpop.f32.mrf.mxu0
      %v5893 = vpop.f32.mrf.mxu0
      %v5894 = vadd.f32 %v5766, %v5893
      %v5895 = vpop.f32.mrf.mxu0
      %5896 = vmatprep.mubr.bf16.mxu0 0
      %5897 = vmatmul.mubr.bf16.gmra.mxu0 %v5719
      %v5898 = vpop.f32.mrf.mxu0
      %v5899 = vadd.f32 %v5766, %v5898
      %v5900 = vpop.f32.mrf.mxu0
      %v5901 = vpop.f32.mrf.mxu0
      %v5902 = vadd.f32 %v5766, %v5901
      %v5903 = vpop.f32.mrf.mxu0
      %5904 = vmatprep.mubr.bf16.mxu0 0
      %5905 = vmatmul.mubr.bf16.gmra.mxu0 %v5720
      %v5906 = vpop.f32.mrf.mxu0
      %v5907 = vadd.f32 %v5766, %v5906
      %v5908 = vpop.f32.mrf.mxu0
      %v5909 = vpop.f32.mrf.mxu0
      %v5910 = vadd.f32 %v5766, %v5909
      %v5911 = vpop.f32.mrf.mxu0
      %5912 = vmatprep.mubr.bf16.mxu0 0
      %5913 = vmatmul.mubr.bf16.gmra.mxu0 %v5721
      %v5914 = vpop.f32.mrf.mxu0
      %v5915 = vadd.f32 %v5766, %v5914
      %v5916 = vpop.f32.mrf.mxu0
      %v5917 = vpop.f32.mrf.mxu0
      %v5918 = vadd.f32 %v5766, %v5917
      %v5919 = vpop.f32.mrf.mxu0
      %5920 = vmatprep.mubr.bf16.mxu0 0
      %5921 = vmatmul.mubr.bf16.gmra.mxu0 %v5722
      %v5922 = vpop.f32.mrf.mxu0
      %v5923 = vadd.f32 %v5766, %v5922
      %v5924 = vpop.f32.mrf.mxu0
      %v5925 = vpop.f32.mrf.mxu0
      %v5926 = vadd.f32 %v5766, %v5925
      %v5927 = vpop.f32.mrf.mxu0
      %5928 = vmatprep.mubr.bf16.mxu0 0
      %5929 = vmatmul.mubr.bf16.gmra.mxu0 %v5723
      %v5930 = vpop.f32.mrf.mxu0
      %v5931 = vadd.f32 %v5766, %v5930
      %v5932 = vpop.f32.mrf.mxu0
      %v5933 = vpop.f32.mrf.mxu0
      %v5934 = vadd.f32 %v5766, %v5933
      %v5935 = vpop.f32.mrf.mxu0
      %5936 = vmatprep.mubr.bf16.mxu0 0
      %5937 = vmatmul.mubr.bf16.gmra.mxu0 %v5724
      %v5938 = vpop.f32.mrf.mxu0
      %v5939 = vadd.f32 %v5766, %v5938
      %v5940 = vpop.f32.mrf.mxu0
      %v5941 = vpop.f32.mrf.mxu0
      %v5942 = vadd.f32 %v5766, %v5941
      %v5943 = vpop.f32.mrf.mxu0
      %5944 = vmatprep.mubr.bf16.mxu0 0
      %5945 = vmatmul.mubr.bf16.gmra.mxu0 %v5725
      %v5946 = vpop.f32.mrf.mxu0
      %v5947 = vadd.f32 %v5766, %v5946
      %v5948 = vpop.f32.mrf.mxu0
      %v5949 = vpop.f32.mrf.mxu0
      %v5950 = vadd.f32 %v5766, %v5949
      %v5951 = vpop.f32.mrf.mxu0
      %5952 = vmatprep.mubr.bf16.mxu0 0
      %5953 = vmatmul.mubr.bf16.gmra.mxu0 %v5726
      %v5954 = vpop.f32.mrf.mxu0
      %v5955 = vadd.f32 %v5766, %v5954
      %v5956 = vpop.f32.mrf.mxu0
      %v5957 = vpop.f32.mrf.mxu0
      %v5958 = vadd.f32 %v5766, %v5957
      %v5959 = vpop.f32.mrf.mxu0
      %5960 = vmatprep.mubr.bf16.mxu0 0
      %5961 = vmatmul.mubr.bf16.gmra.mxu0 %v5727
      %v5962 = vpop.f32.mrf.mxu0
      %v5963 = vadd.f32 %v5766, %v5962
      %v5964 = vpop.f32.mrf.mxu0
      %v5965 = vpop.f32.mrf.mxu0
      %v5966 = vadd.f32 %v5766, %v5965
      %v5967 = vpop.f32.mrf.mxu0
      %5968 = vmatprep.mubr.bf16.mxu0 0
      %5969 = vmatmul.mubr.bf16.gmra.mxu0 %v5728
      %v5970 = vpop.f32.mrf.mxu0
      %v5971 = vadd.f32 %v5766, %v5970
      %v5972 = vpop.f32.mrf.mxu0
      %v5973 = vpop.f32.mrf.mxu0
      %v5974 = vadd.f32 %v5766, %v5973
      %v5975 = vpop.f32.mrf.mxu0
      %5976 = vmatprep.mubr.bf16.mxu0 0
      %5977 = vmatmul.mubr.bf16.gmra.mxu0 %v5729
      %v5978 = vpop.f32.mrf.mxu0
      %v5979 = vadd.f32 %v5766, %v5978
      %v5980 = vpop.f32.mrf.mxu0
      %v5981 = vpop.f32.mrf.mxu0
      %v5982 = vadd.f32 %v5766, %v5981
      %v5983 = vpop.f32.mrf.mxu0
      %5984 = vmatprep.mubr.bf16.mxu0 0
      %5985 = vmatmul.mubr.bf16.gmra.mxu0 %v5730
      %v5986 = vpop.f32.mrf.mxu0
      %v5987 = vadd.f32 %v5766, %v5986
      %v5988 = vpop.f32.mrf.mxu0
      %v5989 = vpop.f32.mrf.mxu0
      %v5990 = vadd.f32 %v5766, %v5989
      %v5991 = vpop.f32.mrf.mxu0
      %5992 = vmatprep.mubr.bf16.mxu0 0
      %5993 = vmatmul.mubr.bf16.gmra.mxu0 %v5731
      %v5994 = vpop.f32.mrf.mxu0
      %v5995 = vadd.f32 %v5766, %v5994
      %v5996 = vpop.f32.mrf.mxu0
      %v5997 = vpop.f32.mrf.mxu0
      %v5998 = vadd.f32 %v5766, %v5997
      %v5999 = vpop.f32.mrf.mxu0
      %6000 = vmatprep.mubr.bf16.mxu0 0
      %6001 = vmatmul.mubr.bf16.gmra.mxu0 %v5732
      %v6002 = vpop.f32.mrf.mxu0
      %v6003 = vadd.f32 %v5766, %v6002
      %v6004 = vpop.f32.mrf.mxu0
      %v6005 = vpop.f32.mrf.mxu0
      %v6006 = vadd.f32 %v5766, %v6005
      %v6007 = vpop.f32.mrf.mxu0
      %6008 = vmatprep.mubr.bf16.mxu0 0
      %6009 = vmatmul.mubr.bf16.gmra.mxu0 %v5733
      %v6010 = vpop.f32.mrf.mxu0
      %v6011 = vadd.f32 %v5766, %v6010
      %v6012 = vpop.f32.mrf.mxu0
      %v6013 = vpop.f32.mrf.mxu0
      %v6014 = vadd.f32 %v5766, %v6013
      %v6015 = vpop.f32.mrf.mxu0
      %6016 = vmatprep.mubr.bf16.mxu0 0
      %6017 = vmatmul.mubr.bf16.gmra.mxu0 %v5734
      %v6018 = vpop.f32.mrf.mxu0
      %v6019 = vadd.f32 %v5766, %v6018
      %v6020 = vpop.f32.mrf.mxu0
      %v6021 = vpop.f32.mrf.mxu0
      %v6022 = vadd.f32 %v5766, %v6021
      %v6023 = vpop.f32.mrf.mxu0
      %6024 = vmatprep.mubr.bf16.mxu0 0
      %6025 = vmatmul.mubr.bf16.gmra.mxu0 %v5735
      %v6026 = vpop.f32.mrf.mxu0
      %v6027 = vadd.f32 %v5766, %v6026
      %v6028 = vpop.f32.mrf.mxu0
      %v6029 = vpop.f32.mrf.mxu0
      %v6030 = vadd.f32 %v5766, %v6029
      %v6031 = vpop.f32.mrf.mxu0
      %6032 = vmatprep.mubr.bf16.mxu0 0
      %6033 = vmatmul.mubr.bf16.gmra.mxu0 %v5736
      %v6034 = vpop.f32.mrf.mxu0
      %v6035 = vadd.f32 %v5766, %v6034
      %v6036 = vpop.f32.mrf.mxu0
      %v6037 = vpop.f32.mrf.mxu0
      %v6038 = vadd.f32 %v5766, %v6037
      %v6039 = vpop.f32.mrf.mxu0
      %6040 = vmatprep.mubr.bf16.mxu0 0
      %6041 = vmatmul.mubr.bf16.gmra.mxu0 %v5737
      %v6042 = vpop.f32.mrf.mxu0
      %v6043 = vadd.f32 %v5766, %v6042
      %v6044 = vpop.f32.mrf.mxu0
      %v6045 = vpop.f32.mrf.mxu0
      %v6046 = vadd.f32 %v5766, %v6045
      %v6047 = vpop.f32.mrf.mxu0
      %6048 = vmatprep.mubr.bf16.mxu0 0
      %6049 = vmatmul.mubr.bf16.gmra.mxu0 %v5738
      %v6050 = vpop.f32.mrf.mxu0
      %v6051 = vadd.f32 %v5766, %v6050
      %v6052 = vpop.f32.mrf.mxu0
      %v6053 = vpop.f32.mrf.mxu0
      %v6054 = vadd.f32 %v5766, %v6053
      %v6055 = vpop.f32.mrf.mxu0
      %6056 = vmatprep.mubr.bf16.mxu0 0
      %6057 = vmatmul.mubr.bf16.gmra.mxu0 %v5739
      %v6058 = vpop.f32.mrf.mxu0
      %v6059 = vadd.f32 %v5766, %v6058
      %v6060 = vpop.f32.mrf.mxu0
      %v6061 = vpop.f32.mrf.mxu0
      %v6062 = vadd.f32 %v5766, %v6061
      %v6063 = vpop.f32.mrf.mxu0
      %6064 = vmatprep.mubr.bf16.mxu0 0
      %6065 = vmatmul.mubr.bf16.gmra.mxu0 %v5740
      %v6066 = vpop.f32.mrf.mxu0
      %v6067 = vadd.f32 %v5766, %v6066
      %v6068 = vpop.f32.mrf.mxu0
      %v6069 = vpop.f32.mrf.mxu0
      %v6070 = vadd.f32 %v5766, %v6069
      %v6071 = vpop.f32.mrf.mxu0
      %6072 = vmatprep.mubr.bf16.mxu0 0
      %6073 = vmatmul.mubr.bf16.gmra.mxu0 %v5741
      %v6074 = vpop.f32.mrf.mxu0
      %v6075 = vadd.f32 %v5766, %v6074
      %v6076 = vpop.f32.mrf.mxu0
      %v6077 = vpop.f32.mrf.mxu0
      %v6078 = vadd.f32 %v5766, %v6077
      %v6079 = vpop.f32.mrf.mxu0
      %6080 = vmatprep.mubr.bf16.mxu0 0
      %6081 = vmatmul.mubr.bf16.gmra.mxu0 %v5742
      %v6082 = vpop.f32.mrf.mxu0
      %v6083 = vadd.f32 %v5766, %v6082
      %v6084 = vpop.f32.mrf.mxu0
      %v6085 = vpop.f32.mrf.mxu0
      %v6086 = vadd.f32 %v5766, %v6085
      %v6087 = vpop.f32.mrf.mxu0
      %6088 = vmatprep.mubr.bf16.mxu0 0
      %6089 = vmatmul.mubr.bf16.gmra.mxu0 %v5743
      %v6090 = vpop.f32.mrf.mxu0
      %v6091 = vadd.f32 %v5766, %v6090
      %v6092 = vpop.f32.mrf.mxu0
      %v6093 = vpop.f32.mrf.mxu0
      %v6094 = vadd.f32 %v5766, %v6093
      %v6095 = vpop.f32.mrf.mxu0
      %6096 = vmatprep.mubr.bf16.mxu0 0
      %6097 = vmatmul.mubr.bf16.gmra.mxu0 %v5744
      %v6098 = vpop.f32.mrf.mxu0
      %v6099 = vadd.f32 %v5766, %v6098
      %v6100 = vpop.f32.mrf.mxu0
      %v6101 = vpop.f32.mrf.mxu0
      %v6102 = vadd.f32 %v5766, %v6101
      %v6103 = vpop.f32.mrf.mxu0
      %6104 = vdwg.mxu0
      %v6105 = vpack.c.bf16 %v5854, %v5851
      %v6106 = vpack.c.bf16 %v5862, %v5859
      %v6107 = vpack.c.bf16 %v5870, %v5867
      %v6108 = vpack.c.bf16 %v5878, %v5875
      %v6109 = vpack.c.bf16 %v5886, %v5883
      %v6110 = vpack.c.bf16 %v5894, %v5891
      %v6111 = vpack.c.bf16 %v5902, %v5899
      %v6112 = vpack.c.bf16 %v5910, %v5907
      %v6113 = vpack.c.bf16 %v5918, %v5915
      %v6114 = vpack.c.bf16 %v5926, %v5923
      %v6115 = vpack.c.bf16 %v5934, %v5931
      %v6116 = vpack.c.bf16 %v5942, %v5939
      %v6117 = vpack.c.bf16 %v5950, %v5947
      %v6118 = vpack.c.bf16 %v5958, %v5955
      %v6119 = vpack.c.bf16 %v5966, %v5963
      %v6120 = vpack.c.bf16 %v5974, %v5971
      %v6121 = vpack.c.bf16 %v5982, %v5979
      %v6122 = vpack.c.bf16 %v5990, %v5987
      %v6123 = vpack.c.bf16 %v5998, %v5995
      %v6124 = vpack.c.bf16 %v6006, %v6003
      %v6125 = vpack.c.bf16 %v6014, %v6011
      %v6126 = vpack.c.bf16 %v6022, %v6019
      %v6127 = vpack.c.bf16 %v6030, %v6027
      %v6128 = vpack.c.bf16 %v6038, %v6035
      %v6129 = vpack.c.bf16 %v6046, %v6043
      %v6130 = vpack.c.bf16 %v6054, %v6051
      %v6131 = vpack.c.bf16 %v6062, %v6059
      %v6132 = vpack.c.bf16 %v6070, %v6067
      %v6133 = vpack.c.bf16 %v6078, %v6075
      %v6134 = vpack.c.bf16 %v6086, %v6083
      %v6135 = vpack.c.bf16 %v6094, %v6091
      %v6136 = vpack.c.bf16 %v6102, %v6099
      %v6169 = vunpack.c.l.b16 %v6105
      %v6170 = vunpack.c.h.b16 %v6105
      %v6171 = vunpack.c.l.b16 %v6106
      %v6172 = vunpack.c.h.b16 %v6106
      %v6173 = vunpack.c.l.b16 %v6107
      %v6174 = vunpack.c.h.b16 %v6107
      %v6175 = vunpack.c.l.b16 %v6108
      %v6176 = vunpack.c.h.b16 %v6108
      %v6177 = vunpack.c.l.b16 %v6109
      %v6178 = vunpack.c.h.b16 %v6109
      %v6179 = vunpack.c.l.b16 %v6110
      %v6180 = vunpack.c.h.b16 %v6110
      %v6181 = vunpack.c.l.b16 %v6111
      %v6182 = vunpack.c.h.b16 %v6111
      %v6183 = vunpack.c.l.b16 %v6112
      %v6184 = vunpack.c.h.b16 %v6112
      %v6185 = vunpack.c.l.b16 %v6113
      %v6186 = vunpack.c.h.b16 %v6113
      %v6187 = vunpack.c.l.b16 %v6114
      %v6188 = vunpack.c.h.b16 %v6114
      %v6189 = vunpack.c.l.b16 %v6115
      %v6190 = vunpack.c.h.b16 %v6115
      %v6191 = vunpack.c.l.b16 %v6116
      %v6192 = vunpack.c.h.b16 %v6116
      %v6193 = vunpack.c.l.b16 %v6117
      %v6194 = vunpack.c.h.b16 %v6117
      %v6195 = vunpack.c.l.b16 %v6118
      %v6196 = vunpack.c.h.b16 %v6118
      %v6197 = vunpack.c.l.b16 %v6119
      %v6198 = vunpack.c.h.b16 %v6119
      %v6199 = vunpack.c.l.b16 %v6120
      %v6200 = vunpack.c.h.b16 %v6120
      %v6201 = vunpack.c.l.b16 %v6121
      %v6202 = vunpack.c.h.b16 %v6121
      %v6203 = vunpack.c.l.b16 %v6122
      %v6204 = vunpack.c.h.b16 %v6122
      %v6205 = vunpack.c.l.b16 %v6123
      %v6206 = vunpack.c.h.b16 %v6123
      %v6207 = vunpack.c.l.b16 %v6124
      %v6208 = vunpack.c.h.b16 %v6124
      %v6209 = vunpack.c.l.b16 %v6125
      %v6210 = vunpack.c.h.b16 %v6125
      %v6211 = vunpack.c.l.b16 %v6126
      %v6212 = vunpack.c.h.b16 %v6126
      %v6213 = vunpack.c.l.b16 %v6127
      %v6214 = vunpack.c.h.b16 %v6127
      %v6215 = vunpack.c.l.b16 %v6128
      %v6216 = vunpack.c.h.b16 %v6128
      %v6217 = vunpack.c.l.b16 %v6129
      %v6218 = vunpack.c.h.b16 %v6129
      %v6219 = vunpack.c.l.b16 %v6130
      %v6220 = vunpack.c.h.b16 %v6130
      %v6221 = vunpack.c.l.b16 %v6131
      %v6222 = vunpack.c.h.b16 %v6131
      %v6223 = vunpack.c.l.b16 %v6132
      %v6224 = vunpack.c.h.b16 %v6132
      %v6225 = vunpack.c.l.b16 %v6133
      %v6226 = vunpack.c.h.b16 %v6133
      %v6227 = vunpack.c.l.b16 %v6134
      %v6228 = vunpack.c.h.b16 %v6134
      %v6229 = vunpack.c.l.b16 %v6135
      %v6230 = vunpack.c.h.b16 %v6135
      %v6231 = vunpack.c.l.b16 %v6136
      %v6232 = vunpack.c.h.b16 %v6136
      %v6233 = vpack.c.b16 %v6169, %v6169
      %v6234 = vpack.c.b16 %v6170, %v6170
      %v6235 = vpack.c.b16 %v6171, %v6171
      %v6236 = vpack.c.b16 %v6172, %v6172
      %v6237 = vpack.c.b16 %v6173, %v6173
      %v6238 = vpack.c.b16 %v6174, %v6174
      %v6239 = vpack.c.b16 %v6175, %v6175
      %v6240 = vpack.c.b16 %v6176, %v6176
      %v6241 = vpack.c.b16 %v6177, %v6177
      %v6242 = vpack.c.b16 %v6178, %v6178
      %v6243 = vpack.c.b16 %v6179, %v6179
      %v6244 = vpack.c.b16 %v6180, %v6180
      %v6245 = vpack.c.b16 %v6181, %v6181
      %v6246 = vpack.c.b16 %v6182, %v6182
      %v6247 = vpack.c.b16 %v6183, %v6183
      %v6248 = vpack.c.b16 %v6184, %v6184
      %v6249 = vpack.c.b16 %v6185, %v6185
      %v6250 = vpack.c.b16 %v6186, %v6186
      %v6251 = vpack.c.b16 %v6187, %v6187
      %v6252 = vpack.c.b16 %v6188, %v6188
      %v6253 = vpack.c.b16 %v6189, %v6189
      %v6254 = vpack.c.b16 %v6190, %v6190
      %v6255 = vpack.c.b16 %v6191, %v6191
      %v6256 = vpack.c.b16 %v6192, %v6192
      %v6257 = vpack.c.b16 %v6193, %v6193
      %v6258 = vpack.c.b16 %v6194, %v6194
      %v6259 = vpack.c.b16 %v6195, %v6195
      %v6260 = vpack.c.b16 %v6196, %v6196
      %v6261 = vpack.c.b16 %v6197, %v6197
      %v6262 = vpack.c.b16 %v6198, %v6198
      %v6263 = vpack.c.b16 %v6199, %v6199
      %v6264 = vpack.c.b16 %v6200, %v6200
      %v6265 = vpack.c.b16 %v6201, %v6201
      %v6266 = vpack.c.b16 %v6202, %v6202
      %v6267 = vpack.c.b16 %v6203, %v6203
      %v6268 = vpack.c.b16 %v6204, %v6204
      %v6269 = vpack.c.b16 %v6205, %v6205
      %v6270 = vpack.c.b16 %v6206, %v6206
      %v6271 = vpack.c.b16 %v6207, %v6207
      %v6272 = vpack.c.b16 %v6208, %v6208
      %v6273 = vpack.c.b16 %v6209, %v6209
      %v6274 = vpack.c.b16 %v6210, %v6210
      %v6275 = vpack.c.b16 %v6211, %v6211
      %v6276 = vpack.c.b16 %v6212, %v6212
      %v6277 = vpack.c.b16 %v6213, %v6213
      %v6278 = vpack.c.b16 %v6214, %v6214
      %v6279 = vpack.c.b16 %v6215, %v6215
      %v6280 = vpack.c.b16 %v6216, %v6216
      %v6281 = vpack.c.b16 %v6217, %v6217
      %v6282 = vpack.c.b16 %v6218, %v6218
      %v6283 = vpack.c.b16 %v6219, %v6219
      %v6284 = vpack.c.b16 %v6220, %v6220
      %v6285 = vpack.c.b16 %v6221, %v6221
      %v6286 = vpack.c.b16 %v6222, %v6222
      %v6287 = vpack.c.b16 %v6223, %v6223
      %v6288 = vpack.c.b16 %v6224, %v6224
      %v6289 = vpack.c.b16 %v6225, %v6225
      %v6290 = vpack.c.b16 %v6226, %v6226
      %v6291 = vpack.c.b16 %v6227, %v6227
      %v6292 = vpack.c.b16 %v6228, %v6228
      %v6293 = vpack.c.b16 %v6229, %v6229
      %v6294 = vpack.c.b16 %v6230, %v6230
      %v6295 = vpack.c.b16 %v6231, %v6231
      %v6296 = vpack.c.b16 %v6232, %v6232
      %6361 = vst [vmem:[%s553] sm:$0xf] %v6233
      %6362 = vst [vmem:[%s553 + $0x4] sm:$0xf] %v6234
      %6363 = vst [vmem:[%s553 + $0x8] sm:$0xf] %v6235
      %6364 = vst [vmem:[%s553 + $0xc] sm:$0xf] %v6236
      %6365 = vst [vmem:[%s553 + $0x10] sm:$0xf] %v6237
      %6366 = vst [vmem:[%s553 + $0x14] sm:$0xf] %v6238
      %6367 = vst [vmem:[%s553 + $0x18] sm:$0xf] %v6239
      %6368 = vst [vmem:[%s553 + $0x1c] sm:$0xf] %v6240
      %6369 = vst [vmem:[%s553 + $0x20] sm:$0xf] %v6241
      %6370 = vst [vmem:[%s553 + $0x24] sm:$0xf] %v6242
      %6371 = vst [vmem:[%s553 + $0x28] sm:$0xf] %v6243
      %6372 = vst [vmem:[%s553 + $0x2c] sm:$0xf] %v6244
      %6373 = vst [vmem:[%s553 + $0x30] sm:$0xf] %v6245
      %6374 = vst [vmem:[%s553 + $0x34] sm:$0xf] %v6246
      %6375 = vst [vmem:[%s553 + $0x38] sm:$0xf] %v6247
      %6376 = vst [vmem:[%s553 + $0x3c] sm:$0xf] %v6248
      %6377 = vst [vmem:[%s553 + $0x40] sm:$0xf] %v6249
      %6378 = vst [vmem:[%s553 + $0x44] sm:$0xf] %v6250
      %6379 = vst [vmem:[%s553 + $0x48] sm:$0xf] %v6251
      %6380 = vst [vmem:[%s553 + $0x4c] sm:$0xf] %v6252
      %6381 = vst [vmem:[%s553 + $0x50] sm:$0xf] %v6253
      %6382 = vst [vmem:[%s553 + $0x54] sm:$0xf] %v6254
      %6383 = vst [vmem:[%s553 + $0x58] sm:$0xf] %v6255
      %6384 = vst [vmem:[%s553 + $0x5c] sm:$0xf] %v6256
      %6385 = vst [vmem:[%s553 + $0x60] sm:$0xf] %v6257
      %6386 = vst [vmem:[%s553 + $0x64] sm:$0xf] %v6258
      %6387 = vst [vmem:[%s553 + $0x68] sm:$0xf] %v6259
      %6388 = vst [vmem:[%s553 + $0x6c] sm:$0xf] %v6260
      %6389 = vst [vmem:[%s553 + $0x70] sm:$0xf] %v6261
      %6390 = vst [vmem:[%s553 + $0x74] sm:$0xf] %v6262
      %6391 = vst [vmem:[%s553 + $0x78] sm:$0xf] %v6263
      %6392 = vst [vmem:[%s553 + $0x7c] sm:$0xf] %v6264
      %6393 = vst [vmem:[%s553 + $0x80] sm:$0xf] %v6265
      %6394 = vst [vmem:[%s553 + $0x84] sm:$0xf] %v6266
      %6395 = vst [vmem:[%s553 + $0x88] sm:$0xf] %v6267
      %6396 = vst [vmem:[%s553 + $0x8c] sm:$0xf] %v6268
      %6397 = vst [vmem:[%s553 + $0x90] sm:$0xf] %v6269
      %6398 = vst [vmem:[%s553 + $0x94] sm:$0xf] %v6270
      %6399 = vst [vmem:[%s553 + $0x98] sm:$0xf] %v6271
      %6400 = vst [vmem:[%s553 + $0x9c] sm:$0xf] %v6272
      %6401 = vst [vmem:[%s553 + $0xa0] sm:$0xf] %v6273
      %6402 = vst [vmem:[%s553 + $0xa4] sm:$0xf] %v6274
      %6403 = vst [vmem:[%s553 + $0xa8] sm:$0xf] %v6275
      %6404 = vst [vmem:[%s553 + $0xac] sm:$0xf] %v6276
      %6405 = vst [vmem:[%s553 + $0xb0] sm:$0xf] %v6277
      %6406 = vst [vmem:[%s553 + $0xb4] sm:$0xf] %v6278
      %6407 = vst [vmem:[%s553 + $0xb8] sm:$0xf] %v6279
      %6408 = vst [vmem:[%s553 + $0xbc] sm:$0xf] %v6280
      %6409 = vst [vmem:[%s553 + $0xc0] sm:$0xf] %v6281
      %6410 = vst [vmem:[%s553 + $0xc4] sm:$0xf] %v6282
      %6411 = vst [vmem:[%s553 + $0xc8] sm:$0xf] %v6283
      %6412 = vst [vmem:[%s553 + $0xcc] sm:$0xf] %v6284
      %6413 = vst [vmem:[%s553 + $0xd0] sm:$0xf] %v6285
      %6414 = vst [vmem:[%s553 + $0xd4] sm:$0xf] %v6286
      %6415 = vst [vmem:[%s553 + $0xd8] sm:$0xf] %v6287
      %6416 = vst [vmem:[%s553 + $0xdc] sm:$0xf] %v6288
      %6417 = vst [vmem:[%s553 + $0xe0] sm:$0xf] %v6289
      %6418 = vst [vmem:[%s553 + $0xe4] sm:$0xf] %v6290
      %6419 = vst [vmem:[%s553 + $0xe8] sm:$0xf] %v6291
      %6420 = vst [vmem:[%s553 + $0xec] sm:$0xf] %v6292
      %6421 = vst [vmem:[%s553 + $0xf0] sm:$0xf] %v6293
      %6422 = vst [vmem:[%s553 + $0xf4] sm:$0xf] %v6294
      %6423 = vst [vmem:[%s553 + $0xf8] sm:$0xf] %v6295
      %6424 = vst [vmem:[%s553 + $0xfc] sm:$0xf] %v6296
      %s6425 = smul.u32 16, %s27
      %p6426 = scmp.lt.s32.totalorder %s26, 1
      %s6427 = scalar_select %p6426, %s26, 1
      %p6428 = scmp.lt.s32.totalorder %s6425, 31
      %s6429 = scalar_select %p6428, %s6425, 31
      %s6430 = smul.addr %s6429, 4
      %s6431 = smul.addr %s6427, 128
      %s6432 = sadd.s32 %s6430, %s6431
      %s6433 = smul.addr %s6432, 4
      %s6434 = scalar_lea.vmem %s11, %s6433
      // Predicated region
      $region65: #{convolutional_glu.1} parent=63 // pred_check
        %p6435 = pneg %p322
      $region66: #{convolutional_glu.1} parent=63 // pred_check_branch
        %6437 = sbr.rel (%p6435) target = $region68
      $region67: #{convolutional_glu.1} parent=63 // pred_region
        %s6438 = smul.u32 16, %s27
      $region68: #{convolutional_glu.1} parent=63 // pred_fallthru
        _
    $region64: #{convolutional_glu.1} parent=5 // pred_fallthru
      _
    %p6439 = scmp.le.s32.totalorder 2, %s17
    // Predicated region
    $region69: #{convolutional_glu.1} parent=5 // pred_check
      %p6440 = pneg %p6439
    $region70: #{convolutional_glu.1} parent=5 // pred_check_branch
      %6442 = sbr.rel (%p6440) target = $region72
    $region71: #{convolutional_glu.1} parent=5 // pred_region
      %s6443 = ssub.s32 %s17, 2
      // Predicated region
      $region73: #{convolutional_glu.1} parent=71 // pred_check
        %p6444 = pneg %p328
      $region74: #{convolutional_glu.1} parent=71 // pred_check_branch
        %6446 = sbr.rel (%p6444) target = $region76
      $region75: #{convolutional_glu.1} parent=71 // pred_region
        %s6447 = smul.u32 16, %s29
        %p6448 = scmp.lt.s32.totalorder %s28, 1
        %s6449 = scalar_select %p6448, %s28, 1
        %p6450 = scmp.lt.s32.totalorder %s6447, 31
        %s6451 = scalar_select %p6450, %s6447, 31
        %s6452 = smul.addr %s6451, 4
        %s6453 = smul.addr %s6449, 128
        %s6454 = sadd.s32 %s6452, %s6453
        %s6455 = smul.addr %s6454, 4
        %s6456 = scalar_lea.vmem %s11, %s6455
      $region76: #{convolutional_glu.1} parent=71 // pred_fallthru
        _
    $region72: #{convolutional_glu.1} parent=5 // pred_fallthru
      _
  $region6: #{convolutional_glu.1} parent=0 // loop_footer
    %s21 = sadd.s32 1, %s17
  $region7: #{convolutional_glu.1} parent=0 // loop_footer_branch
    %16 = sbr.rel target = $region3
  $region8: #{convolutional_glu.1} parent=0 // loop_exit
    _

</llo_original>
